<compile_context>
chip_gen: v6e
topology: v6e:2x2x1
jax: 0.10.0
libtpu: 0.0.40
codegen_flags: <defaults>
</compile_context>

<pallas_src>
import functools
import math

import jax
import jax.numpy as jnp
from jax.experimental import pallas as pl
from jax.experimental.pallas import tpu as pltpu


# ---------------------------------------------------------------------------
# in-kernel helpers (traced inside the Pallas kernel body)
# ---------------------------------------------------------------------------
def _layer_norm(x, gamma, beta, eps=1e-5):
    mean = jnp.mean(x, axis=-1, keepdims=True)
    xc = x - mean
    var = jnp.mean(xc * xc, axis=-1, keepdims=True)
    return xc * jax.lax.rsqrt(var + eps) * gamma + beta


def _mha_heads(q, k, v, B, Lq, Lkv, num_heads):
    """Per-head scaled-dot attention (scale pre-folded into q).

    Returns the lane-concatenated head outputs, shape (B*Lq, D), ready for a
    single full-width output-projection matmul outside this function.
    """
    D = q.shape[-1]
    hd = D // num_heads
    q3 = q.reshape(B, Lq, D)
    k3 = k.reshape(B, Lkv, D)
    v3 = v.reshape(B, Lkv, D)
    outs = []
    for h in range(num_heads):          # short static loop; heads stay lane-resident
        lo = h * hd
        s = jnp.einsum('bqd,bkd->bqk',
                       q3[:, :, lo:lo + hd], k3[:, :, lo:lo + hd],
                       preferred_element_type=jnp.float32)
        s = s - jnp.max(s, axis=-1, keepdims=True)
        p = jnp.exp(s)
        p = p * pl.reciprocal(jnp.sum(p, axis=-1, keepdims=True), approx=True)
        outs.append(jnp.einsum('bqk,bkd->bqd', p, v3[:, :, lo:lo + hd],
                               preferred_element_type=jnp.float32))
    # lane concat (XLU-cheap) -> one (M, D) buffer for the output projection
    return jnp.concatenate(outs, axis=-1).reshape(B * Lq, D)


# ---------------------------------------------------------------------------
# Pallas kernel: full transformer layer, whole batch in one invocation
# ---------------------------------------------------------------------------
def transformer_layer_kernel(
    x_ref, kv_ref,
    sa_qkv_w_ref, sa_ow_ref,
    ca_q_w_ref, ca_kv_w_ref, ca_ow_ref,
    f1w_ref, f2w_ref,
    vec_ref,
    out_ref,
    *, B, Lq, Lkv, num_heads, D, ff_dim):
    x = x_ref[...]          # (B*Lq, D)
    kv = kv_ref[...]        # (B*Lkv, 2*D2) lane-concat of [key | value]
    vecs = vec_ref[...]     # (13, lanes) row-packed small vectors

    # static row/prefix-lane slices of the packed small-vector block
    sa_qkv_b = vecs[0:1, :3 * D]
    sa_ob = vecs[1:2, :D]
    ca_q_b = vecs[2:3, :D]
    ca_kv_b = vecs[3:4, :2 * D]
    ca_ob = vecs[4:5, :D]
    n1g, n1b = vecs[5:6, :D], vecs[6:7, :D]
    n2g, n2b = vecs[7:8, :D], vecs[8:9, :D]
    n3g, n3b = vecs[9:10, :D], vecs[10:11, :D]
    f1b = vecs[11:12, :ff_dim]
    f2b = vecs[12:13, :D]

    # --- self attention: one fused (D, 3D) QKV matmul ---
    qkv = jnp.dot(x, sa_qkv_w_ref[...],
                  preferred_element_type=jnp.float32) + sa_qkv_b     # (M, 3D)
    sa = _mha_heads(qkv[:, :D], qkv[:, D:2 * D], qkv[:, 2 * D:],
                    B, Lq, Lq, num_heads)                            # (M, D)
    sa = jnp.dot(sa, sa_ow_ref[...],
                 preferred_element_type=jnp.float32) + sa_ob
    x = _layer_norm(x + sa, n1g, n1b)

    # --- cross attention: Q from normed x, K/V via one block-diagonal matmul ---
    q_ca = jnp.dot(x, ca_q_w_ref[...],
                   preferred_element_type=jnp.float32) + ca_q_b      # (M, D)
    kv_p = jnp.dot(kv, ca_kv_w_ref[...],
                   preferred_element_type=jnp.float32) + ca_kv_b     # (B*Lkv, 2D)
    ca = _mha_heads(q_ca, kv_p[:, :D], kv_p[:, D:],
                    B, Lq, Lkv, num_heads)                           # (M, D)
    ca = jnp.dot(ca, ca_ow_ref[...],
                 preferred_element_type=jnp.float32) + ca_ob
    x = _layer_norm(x + ca, n2g, n2b)

    # --- feed-forward ---
    h = jnp.maximum(jnp.dot(x, f1w_ref[...],
                            preferred_element_type=jnp.float32) + f1b, 0.0)
    ffn = jnp.dot(h, f2w_ref[...],
                  preferred_element_type=jnp.float32) + f2b
    x = _layer_norm(x + ffn, n3g, n3b)

    out_ref[...] = x


# ---------------------------------------------------------------------------
# wrapper: host-side weight prep (fuse / transpose / scale / pack) + pallas_call
# ---------------------------------------------------------------------------
def transformer_layer(x, mask, key, value, params, num_heads):
    del mask  # unused, as in the PyTorch forward
    B, Lq, D = x.shape
    _, Lkv, D2 = key.shape
    H = num_heads
    hd = D // H
    ff_dim = params["f1w"].shape[0]
    scale = 1.0 / math.sqrt(hd)
    M = B * Lq
    f32 = jnp.float32

    # -- self-attn packed in_proj -> single (D, 3D) weight, scale folded into Q --
    sa_w, sa_b = params["sa_w"].astype(f32), params["sa_b"].astype(f32)
    sa_qkv_w = jnp.concatenate(
        [(sa_w[:D] * scale).T, sa_w[D:2 * D].T, sa_w[2 * D:].T], axis=1)     # (D, 3D)
    sa_qkv_b = jnp.concatenate(
        [sa_b[:, :D] * scale, sa_b[:, D:2 * D], sa_b[:, 2 * D:]], axis=1)    # (1, 3D)
    sa_ow = params["sa_ow"].T.astype(f32)                                    # (D, D)

    # -- cross-attn: Q separate (reads x); K/V fused block-diagonally so one
    #    matmul on the lane-concatenated [key | value] operand computes both --
    ca_b = params["ca_b"].astype(f32)
    ca_q_w = (params["ca_qw"].astype(f32) * scale).T                         # (D, D)
    ca_q_b = ca_b[:, :D] * scale
    ca_kv_w = jnp.zeros((2 * D2, 2 * D), f32)
    ca_kv_w = ca_kv_w.at[:D2, :D].set(params["ca_kw"].T.astype(f32))
    ca_kv_w = ca_kv_w.at[D2:, D:].set(params["ca_vw"].T.astype(f32))         # (2*D2, 2D)
    ca_kv_b = jnp.concatenate([ca_b[:, D:2 * D], ca_b[:, 2 * D:]], axis=1)   # (1, 2D)
    ca_ow = params["ca_ow"].T.astype(f32)                                    # (D, D)

    f1w_t = params["f1w"].T.astype(f32)                                      # (D, ff)
    f2w_t = params["f2w"].T.astype(f32)                                      # (ff, D)

    # -- pack every small (1, n) vector into one row-padded (13, lanes) array --
    small = [sa_qkv_b, params["sa_ob"], ca_q_b, ca_kv_b, params["ca_ob"],
             params["n1g"], params["n1b"], params["n2g"], params["n2b"],
             params["n3g"], params["n3b"], params["f1b"], params["f2b"]]
    max_w = max(int(v.size) for v in small)
    lanes = 128 * pl.cdiv(max_w, 128)
    vec = jnp.concatenate(
        [jnp.pad(v.reshape(1, -1).astype(f32), ((0, 0), (0, lanes - int(v.size))))
         for v in small], axis=0)                                            # (13, lanes)

    # flatten batch*seq so every matmul presents B*L rows to the MXU;
    # lane-concat key/value so the fused cross-attn K/V matmul reads one operand
    x2 = x.reshape(M, D).astype(f32)
    kv2 = jnp.concatenate([key.reshape(B * Lkv, D2),
                           value.reshape(B * Lkv, D2)], axis=1).astype(f32)  # (B*Lkv, 2*D2)

    operands = (x2, kv2, sa_qkv_w, sa_ow, ca_q_w, ca_kv_w, ca_ow,
                f1w_t, f2w_t, vec)

    # advisory cost estimate for the XLA scheduler
    flops = (2 * M * D * 3 * D                    # fused self-attn qkv projection
             + 4 * B * Lq * Lq * D                # self-attn scores + weighted sum
             + 2 * M * D * D                      # self-attn output projection
             + 2 * M * D * D                      # cross-attn q projection
             + 2 * (B * Lkv) * (2 * D2) * (2 * D)  # fused cross-attn k/v projection
             + 4 * B * Lq * Lkv * D               # cross-attn scores + weighted sum
             + 2 * M * D * D                      # cross-attn output projection
             + 4 * M * D * ff_dim)                # FFN
    transcendentals = B * H * Lq * (Lq + Lkv) + 2 * B * H * Lq + 3 * M
    bytes_accessed = 4 * (sum(int(o.size) for o in operands) + M * D)

    kernel = functools.partial(transformer_layer_kernel,
                               B=B, Lq=Lq, Lkv=Lkv, num_heads=H,
                               D=D, ff_dim=ff_dim)

    vmem_spec = pl.BlockSpec(memory_space=pltpu.MemorySpace.VMEM)
    out2 = pl.pallas_call(
        kernel,
        out_shape=jax.ShapeDtypeStruct((M, D), f32),
        in_specs=[vmem_spec] * len(operands),
        out_specs=vmem_spec,
        compiler_params=pltpu.CompilerParams(vmem_limit_bytes=32 * 1024 * 1024),
        cost_estimate=pl.CostEstimate(flops=int(flops),
                                      transcendentals=int(transcendentals),
                                      bytes_accessed=int(bytes_accessed)),
    )(*operands)

    return out2.reshape(B, Lq, D)


# ---------------------------------------------------------------------------
# pure-JAX reference (PyTorch-layout weights, same math) for a sanity check
# ---------------------------------------------------------------------------
def transformer_layer_ref(x, key, value, params, num_heads):
    D = x.shape[-1]
    H = num_heads
    hd = D // H
    scale = 1.0 / math.sqrt(hd)

    def layer_norm(v, g, b, eps=1e-5):
        m = jnp.mean(v, -1, keepdims=True)
        var = jnp.mean((v - m) ** 2, -1, keepdims=True)
        return (v - m) / jnp.sqrt(var + eps) * g + b

    def mha(q_in, k_in, v_in, wq, wk, wv, bq, bk, bv, wo, bo):
        q = q_in @ wq.T + bq
        k = k_in @ wk.T + bk
        v = v_in @ wv.T + bv
        outs = []
        for h in range(H):
            sl = slice(h * hd, (h + 1) * hd)
            s = (q[..., sl] @ jnp.swapaxes(k[..., sl], -1, -2)) * scale
            p = jax.nn.softmax(s, axis=-1)
            outs.append(p @ v[..., sl])
        return jnp.concatenate(outs, -1) @ wo.T + bo

    sa_w, sa_b = params["sa_w"], params["sa_b"]
    sa = mha(x, x, x, sa_w[:D], sa_w[D:2 * D], sa_w[2 * D:],
             sa_b[:, :D], sa_b[:, D:2 * D], sa_b[:, 2 * D:],
             params["sa_ow"], params["sa_ob"])
    x = layer_norm(x + sa, params["n1g"], params["n1b"])
    ca_b = params["ca_b"]
    ca = mha(x, key, value, params["ca_qw"], params["ca_kw"], params["ca_vw"],
             ca_b[:, :D], ca_b[:, D:2 * D], ca_b[:, 2 * D:],
             params["ca_ow"], params["ca_ob"])
    x = layer_norm(x + ca, params["n2g"], params["n2b"])
    h = jnp.maximum(x @ params["f1w"].T + params["f1b"], 0.0)
    ff = h @ params["f2w"].T + params["f2b"]
    return layer_norm(x + ff, params["n3g"], params["n3b"])


# ---------------------------------------------------------------------------
# main
# ---------------------------------------------------------------------------
if __name__ == "__main__":
    d_dim, d_dim2, num_heads, ff_dim = 32, 16, 4, 64
    B, Lq, Lkv = 2, 8, 8

    root = jax.random.PRNGKey(0)
    keys = jax.random.split(root, 16)

    def w(k, shape, s=0.05):
        return (s * jax.random.normal(k, shape)).astype(jnp.float32)

    params = {
        # self-attention (packed qkv projection, PyTorch in_proj_* layout)
        "sa_w": w(keys[0], (3 * d_dim, d_dim)),
        "sa_b": w(keys[1], (1, 3 * d_dim)),
        "sa_ow": w(keys[2], (d_dim, d_dim)),
        "sa_ob": w(keys[3], (1, d_dim)),
        # cross-attention (separate q/k/v projections, kdim = vdim = d_dim2)
        "ca_qw": w(keys[4], (d_dim, d_dim)),
        "ca_kw": w(keys[5], (d_dim, d_dim2)),
        "ca_vw": w(keys[6], (d_dim, d_dim2)),
        "ca_b": w(keys[7], (1, 3 * d_dim)),
        "ca_ow": w(keys[8], (d_dim, d_dim)),
        "ca_ob": w(keys[9], (1, d_dim)),
        # layer norms
        "n1g": jnp.ones((1, d_dim), jnp.float32), "n1b": jnp.zeros((1, d_dim), jnp.float32),
        "n2g": jnp.ones((1, d_dim), jnp.float32), "n2b": jnp.zeros((1, d_dim), jnp.float32),
        "n3g": jnp.ones((1, d_dim), jnp.float32), "n3b": jnp.zeros((1, d_dim), jnp.float32),
        # feed-forward
        "f1w": w(keys[10], (ff_dim, d_dim)),
        "f1b": w(keys[11], (1, ff_dim)),
        "f2w": w(keys[12], (d_dim, ff_dim)),
        "f2b": w(keys[13], (1, d_dim)),
    }

    x = jax.random.normal(keys[14], (B, Lq, d_dim), dtype=jnp.float32)
    kv_key = jax.random.normal(keys[15], (B, Lkv, d_dim2), dtype=jnp.float32)
    kv_val = jax.random.normal(jax.random.fold_in(root, 99), (B, Lkv, d_dim2),
                               dtype=jnp.float32)
    mask = jnp.zeros((B, Lq), dtype=jnp.float32)  # unused, mirrors PyTorch signature

    out = transformer_layer(x, mask, kv_key, kv_val, params, num_heads)
    out = jax.block_until_ready(out)

    ref = transformer_layer_ref(x, kv_key, kv_val, params, num_heads)
    assert out.shape == (B, Lq, d_dim)
    # tolerance covers the approx-reciprocal softmax denominator (EUP vrcp)
    assert jnp.allclose(out, ref, atol=2e-3, rtol=2e-3), "mismatch vs JAX reference"

    print("KERNEL_OK")
</pallas_src>

<mosaic_0001>
module attributes {stable_mosaic.version = 11 : i64} {
  func.func @transformer_layer_kernel(%arg0: memref<16x32xf32, #tpu.memory_space<vmem>>, %arg1: memref<16x32xf32, #tpu.memory_space<vmem>>, %arg2: memref<32x96xf32, #tpu.memory_space<vmem>>, %arg3: memref<32x32xf32, #tpu.memory_space<vmem>>, %arg4: memref<32x32xf32, #tpu.memory_space<vmem>>, %arg5: memref<32x64xf32, #tpu.memory_space<vmem>>, %arg6: memref<32x32xf32, #tpu.memory_space<vmem>>, %arg7: memref<32x64xf32, #tpu.memory_space<vmem>>, %arg8: memref<64x32xf32, #tpu.memory_space<vmem>>, %arg9: memref<13x128xf32, #tpu.memory_space<vmem>>, %arg10: memref<16x32xf32, #tpu.memory_space<vmem>>) attributes {dimension_semantics = [], scalar_prefetch = 0 : i64, scratch_operands = 0 : i64, tpu.core_type = #tpu.core_type<tc>} {
    %c0 = arith.constant 0 : index
    %c0_0 = arith.constant 0 : index
    %0 = vector.load %arg0[%c0, %c0_0] : memref<16x32xf32, #tpu.memory_space<vmem>>, vector<16x32xf32>
    %c0_1 = arith.constant 0 : index
    %c0_2 = arith.constant 0 : index
    %1 = vector.load %arg1[%c0_1, %c0_2] : memref<16x32xf32, #tpu.memory_space<vmem>>, vector<16x32xf32>
    %c0_3 = arith.constant 0 : index
    %c0_4 = arith.constant 0 : index
    %2 = vector.load %arg9[%c0_3, %c0_4] : memref<13x128xf32, #tpu.memory_space<vmem>>, vector<13x128xf32>
    %3 = vector.extract_strided_slice %2 {offsets = [0, 0], sizes = [1, 96], strides = [1, 1]} : vector<13x128xf32> to vector<1x96xf32>
    %4 = vector.extract_strided_slice %2 {offsets = [1, 0], sizes = [1, 32], strides = [1, 1]} : vector<13x128xf32> to vector<1x32xf32>
    %5 = vector.extract_strided_slice %2 {offsets = [2, 0], sizes = [1, 32], strides = [1, 1]} : vector<13x128xf32> to vector<1x32xf32>
    %6 = vector.extract_strided_slice %2 {offsets = [3, 0], sizes = [1, 64], strides = [1, 1]} : vector<13x128xf32> to vector<1x64xf32>
    %7 = vector.extract_strided_slice %2 {offsets = [4, 0], sizes = [1, 32], strides = [1, 1]} : vector<13x128xf32> to vector<1x32xf32>
    %8 = vector.extract_strided_slice %2 {offsets = [5, 0], sizes = [1, 32], strides = [1, 1]} : vector<13x128xf32> to vector<1x32xf32>
    %9 = vector.extract_strided_slice %2 {offsets = [6, 0], sizes = [1, 32], strides = [1, 1]} : vector<13x128xf32> to vector<1x32xf32>
    %10 = vector.extract_strided_slice %2 {offsets = [7, 0], sizes = [1, 32], strides = [1, 1]} : vector<13x128xf32> to vector<1x32xf32>
    %11 = vector.extract_strided_slice %2 {offsets = [8, 0], sizes = [1, 32], strides = [1, 1]} : vector<13x128xf32> to vector<1x32xf32>
    %12 = vector.extract_strided_slice %2 {offsets = [9, 0], sizes = [1, 32], strides = [1, 1]} : vector<13x128xf32> to vector<1x32xf32>
    %13 = vector.extract_strided_slice %2 {offsets = [10, 0], sizes = [1, 32], strides = [1, 1]} : vector<13x128xf32> to vector<1x32xf32>
    %14 = vector.extract_strided_slice %2 {offsets = [11, 0], sizes = [1, 64], strides = [1, 1]} : vector<13x128xf32> to vector<1x64xf32>
    %15 = vector.extract_strided_slice %2 {offsets = [12, 0], sizes = [1, 32], strides = [1, 1]} : vector<13x128xf32> to vector<1x32xf32>
    %c0_5 = arith.constant 0 : index
    %c0_6 = arith.constant 0 : index
    %16 = vector.load %arg2[%c0_5, %c0_6] : memref<32x96xf32, #tpu.memory_space<vmem>>, vector<32x96xf32>
    %cst = arith.constant dense<0.000000e+00> : vector<16x96xf32>
    %17 = tpu.matmul %0, %16, %cst {dimension_numbers = #tpu.dot_dimension_numbers<[1], [0], [0], [1], [0, 0, 1, 1], [], []>} : vector<16x32xf32>, vector<32x96xf32>, vector<16x96xf32> -> vector<16x96xf32>
    %18 = vector.broadcast %3 : vector<1x96xf32> to vector<16x96xf32>
    %19 = arith.addf %17, %18 : vector<16x96xf32>
    %20 = vector.extract_strided_slice %19 {offsets = [0, 0], sizes = [16, 32], strides = [1, 1]} : vector<16x96xf32> to vector<16x32xf32>
    %21 = vector.extract_strided_slice %19 {offsets = [0, 32], sizes = [16, 32], strides = [1, 1]} : vector<16x96xf32> to vector<16x32xf32>
    %22 = vector.extract_strided_slice %19 {offsets = [0, 64], sizes = [16, 32], strides = [1, 1]} : vector<16x96xf32> to vector<16x32xf32>
    %23 = vector.shape_cast %20 : vector<16x32xf32> to vector<2x8x32xf32>
    %24 = vector.shape_cast %21 : vector<16x32xf32> to vector<2x8x32xf32>
    %25 = vector.shape_cast %22 : vector<16x32xf32> to vector<2x8x32xf32>
    %26 = vector.extract_strided_slice %23 {offsets = [0, 0, 0], sizes = [2, 8, 8], strides = [1, 1, 1]} : vector<2x8x32xf32> to vector<2x8x8xf32>
    %27 = vector.extract_strided_slice %24 {offsets = [0, 0, 0], sizes = [2, 8, 8], strides = [1, 1, 1]} : vector<2x8x32xf32> to vector<2x8x8xf32>
    "tpu.trace_start"() <{level = 10 : i32, message = "bqd,bkd->bqk"}> : () -> ()
    %cst_7 = arith.constant dense<0.000000e+00> : vector<2x8x8xf32>
    %28 = tpu.matmul %26, %27, %cst_7 {dimension_numbers = #tpu.dot_dimension_numbers<[2], [2], [1], [1], [0, 0, 0, 1, 1, 1], [0], [0]>} : vector<2x8x8xf32>, vector<2x8x8xf32>, vector<2x8x8xf32> -> vector<2x8x8xf32>
    "tpu.trace_stop"() : () -> ()
    %cst_8 = arith.constant dense<0xFF800000> : vector<2x8xf32>
    %29 = vector.multi_reduction <maximumf>, %28, %cst_8 [2] : vector<2x8x8xf32> to vector<2x8xf32>
    %30 = vector.shape_cast %29 : vector<2x8xf32> to vector<2x8x1xf32>
    %31 = vector.broadcast %30 : vector<2x8x1xf32> to vector<2x8x8xf32>
    %32 = arith.subf %28, %31 : vector<2x8x8xf32>
    %33 = math.exp %32 : vector<2x8x8xf32>
    %cst_9 = arith.constant dense<0.000000e+00> : vector<2x8xf32>
    %34 = vector.multi_reduction <add>, %33, %cst_9 [2] : vector<2x8x8xf32> to vector<2x8xf32>
    %35 = vector.shape_cast %34 : vector<2x8xf32> to vector<2x8x1xf32>
    %36 = tpu.reciprocal %35 {approx = true} : vector<2x8x1xf32> -> vector<2x8x1xf32>
    %37 = vector.broadcast %36 : vector<2x8x1xf32> to vector<2x8x8xf32>
    %38 = arith.mulf %33, %37 : vector<2x8x8xf32>
    %39 = vector.extract_strided_slice %25 {offsets = [0, 0, 0], sizes = [2, 8, 8], strides = [1, 1, 1]} : vector<2x8x32xf32> to vector<2x8x8xf32>
    "tpu.trace_start"() <{level = 10 : i32, message = "bqk,bkd->bqd"}> : () -> ()
    %cst_10 = arith.constant dense<0.000000e+00> : vector<2x8x8xf32>
    %40 = tpu.matmul %38, %39, %cst_10 {dimension_numbers = #tpu.dot_dimension_numbers<[2], [1], [1], [2], [0, 0, 0, 1, 1, 2], [0], [0]>} : vector<2x8x8xf32>, vector<2x8x8xf32>, vector<2x8x8xf32> -> vector<2x8x8xf32>
    "tpu.trace_stop"() : () -> ()
    %41 = vector.extract_strided_slice %23 {offsets = [0, 0, 8], sizes = [2, 8, 8], strides = [1, 1, 1]} : vector<2x8x32xf32> to vector<2x8x8xf32>
    %42 = vector.extract_strided_slice %24 {offsets = [0, 0, 8], sizes = [2, 8, 8], strides = [1, 1, 1]} : vector<2x8x32xf32> to vector<2x8x8xf32>
    "tpu.trace_start"() <{level = 10 : i32, message = "bqd,bkd->bqk"}> : () -> ()
    %cst_11 = arith.constant dense<0.000000e+00> : vector<2x8x8xf32>
    %43 = tpu.matmul %41, %42, %cst_11 {dimension_numbers = #tpu.dot_dimension_numbers<[2], [2], [1], [1], [0, 0, 0, 1, 1, 1], [0], [0]>} : vector<2x8x8xf32>, vector<2x8x8xf32>, vector<2x8x8xf32> -> vector<2x8x8xf32>
    "tpu.trace_stop"() : () -> ()
    %cst_12 = arith.constant dense<0xFF800000> : vector<2x8xf32>
    %44 = vector.multi_reduction <maximumf>, %43, %cst_12 [2] : vector<2x8x8xf32> to vector<2x8xf32>
    %45 = vector.shape_cast %44 : vector<2x8xf32> to vector<2x8x1xf32>
    %46 = vector.broadcast %45 : vector<2x8x1xf32> to vector<2x8x8xf32>
    %47 = arith.subf %43, %46 : vector<2x8x8xf32>
    %48 = math.exp %47 : vector<2x8x8xf32>
    %cst_13 = arith.constant dense<0.000000e+00> : vector<2x8xf32>
    %49 = vector.multi_reduction <add>, %48, %cst_13 [2] : vector<2x8x8xf32> to vector<2x8xf32>
    %50 = vector.shape_cast %49 : vector<2x8xf32> to vector<2x8x1xf32>
    %51 = tpu.reciprocal %50 {approx = true} : vector<2x8x1xf32> -> vector<2x8x1xf32>
    %52 = vector.broadcast %51 : vector<2x8x1xf32> to vector<2x8x8xf32>
    %53 = arith.mulf %48, %52 : vector<2x8x8xf32>
    %54 = vector.extract_strided_slice %25 {offsets = [0, 0, 8], sizes = [2, 8, 8], strides = [1, 1, 1]} : vector<2x8x32xf32> to vector<2x8x8xf32>
    "tpu.trace_start"() <{level = 10 : i32, message = "bqk,bkd->bqd"}> : () -> ()
    %cst_14 = arith.constant dense<0.000000e+00> : vector<2x8x8xf32>
    %55 = tpu.matmul %53, %54, %cst_14 {dimension_numbers = #tpu.dot_dimension_numbers<[2], [1], [1], [2], [0, 0, 0, 1, 1, 2], [0], [0]>} : vector<2x8x8xf32>, vector<2x8x8xf32>, vector<2x8x8xf32> -> vector<2x8x8xf32>
    "tpu.trace_stop"() : () -> ()
    %56 = vector.extract_strided_slice %23 {offsets = [0, 0, 16], sizes = [2, 8, 8], strides = [1, 1, 1]} : vector<2x8x32xf32> to vector<2x8x8xf32>
    %57 = vector.extract_strided_slice %24 {offsets = [0, 0, 16], sizes = [2, 8, 8], strides = [1, 1, 1]} : vector<2x8x32xf32> to vector<2x8x8xf32>
    "tpu.trace_start"() <{level = 10 : i32, message = "bqd,bkd->bqk"}> : () -> ()
    %cst_15 = arith.constant dense<0.000000e+00> : vector<2x8x8xf32>
    %58 = tpu.matmul %56, %57, %cst_15 {dimension_numbers = #tpu.dot_dimension_numbers<[2], [2], [1], [1], [0, 0, 0, 1, 1, 1], [0], [0]>} : vector<2x8x8xf32>, vector<2x8x8xf32>, vector<2x8x8xf32> -> vector<2x8x8xf32>
    "tpu.trace_stop"() : () -> ()
    %cst_16 = arith.constant dense<0xFF800000> : vector<2x8xf32>
    %59 = vector.multi_reduction <maximumf>, %58, %cst_16 [2] : vector<2x8x8xf32> to vector<2x8xf32>
    %60 = vector.shape_cast %59 : vector<2x8xf32> to vector<2x8x1xf32>
    %61 = vector.broadcast %60 : vector<2x8x1xf32> to vector<2x8x8xf32>
    %62 = arith.subf %58, %61 : vector<2x8x8xf32>
    %63 = math.exp %62 : vector<2x8x8xf32>
    %cst_17 = arith.constant dense<0.000000e+00> : vector<2x8xf32>
    %64 = vector.multi_reduction <add>, %63, %cst_17 [2] : vector<2x8x8xf32> to vector<2x8xf32>
    %65 = vector.shape_cast %64 : vector<2x8xf32> to vector<2x8x1xf32>
    %66 = tpu.reciprocal %65 {approx = true} : vector<2x8x1xf32> -> vector<2x8x1xf32>
    %67 = vector.broadcast %66 : vector<2x8x1xf32> to vector<2x8x8xf32>
    %68 = arith.mulf %63, %67 : vector<2x8x8xf32>
    %69 = vector.extract_strided_slice %25 {offsets = [0, 0, 16], sizes = [2, 8, 8], strides = [1, 1, 1]} : vector<2x8x32xf32> to vector<2x8x8xf32>
    "tpu.trace_start"() <{level = 10 : i32, message = "bqk,bkd->bqd"}> : () -> ()
    %cst_18 = arith.constant dense<0.000000e+00> : vector<2x8x8xf32>
    %70 = tpu.matmul %68, %69, %cst_18 {dimension_numbers = #tpu.dot_dimension_numbers<[2], [1], [1], [2], [0, 0, 0, 1, 1, 2], [0], [0]>} : vector<2x8x8xf32>, vector<2x8x8xf32>, vector<2x8x8xf32> -> vector<2x8x8xf32>
    "tpu.trace_stop"() : () -> ()
    %71 = vector.extract_strided_slice %23 {offsets = [0, 0, 24], sizes = [2, 8, 8], strides = [1, 1, 1]} : vector<2x8x32xf32> to vector<2x8x8xf32>
    %72 = vector.extract_strided_slice %24 {offsets = [0, 0, 24], sizes = [2, 8, 8], strides = [1, 1, 1]} : vector<2x8x32xf32> to vector<2x8x8xf32>
    "tpu.trace_start"() <{level = 10 : i32, message = "bqd,bkd->bqk"}> : () -> ()
    %cst_19 = arith.constant dense<0.000000e+00> : vector<2x8x8xf32>
    %73 = tpu.matmul %71, %72, %cst_19 {dimension_numbers = #tpu.dot_dimension_numbers<[2], [2], [1], [1], [0, 0, 0, 1, 1, 1], [0], [0]>} : vector<2x8x8xf32>, vector<2x8x8xf32>, vector<2x8x8xf32> -> vector<2x8x8xf32>
    "tpu.trace_stop"() : () -> ()
    %cst_20 = arith.constant dense<0xFF800000> : vector<2x8xf32>
    %74 = vector.multi_reduction <maximumf>, %73, %cst_20 [2] : vector<2x8x8xf32> to vector<2x8xf32>
    %75 = vector.shape_cast %74 : vector<2x8xf32> to vector<2x8x1xf32>
    %76 = vector.broadcast %75 : vector<2x8x1xf32> to vector<2x8x8xf32>
    %77 = arith.subf %73, %76 : vector<2x8x8xf32>
    %78 = math.exp %77 : vector<2x8x8xf32>
    %cst_21 = arith.constant dense<0.000000e+00> : vector<2x8xf32>
    %79 = vector.multi_reduction <add>, %78, %cst_21 [2] : vector<2x8x8xf32> to vector<2x8xf32>
    %80 = vector.shape_cast %79 : vector<2x8xf32> to vector<2x8x1xf32>
    %81 = tpu.reciprocal %80 {approx = true} : vector<2x8x1xf32> -> vector<2x8x1xf32>
    %82 = vector.broadcast %81 : vector<2x8x1xf32> to vector<2x8x8xf32>
    %83 = arith.mulf %78, %82 : vector<2x8x8xf32>
    %84 = vector.extract_strided_slice %25 {offsets = [0, 0, 24], sizes = [2, 8, 8], strides = [1, 1, 1]} : vector<2x8x32xf32> to vector<2x8x8xf32>
    "tpu.trace_start"() <{level = 10 : i32, message = "bqk,bkd->bqd"}> : () -> ()
    %cst_22 = arith.constant dense<0.000000e+00> : vector<2x8x8xf32>
    %85 = tpu.matmul %83, %84, %cst_22 {dimension_numbers = #tpu.dot_dimension_numbers<[2], [1], [1], [2], [0, 0, 0, 1, 1, 2], [0], [0]>} : vector<2x8x8xf32>, vector<2x8x8xf32>, vector<2x8x8xf32> -> vector<2x8x8xf32>
    "tpu.trace_stop"() : () -> ()
    %86 = tpu.concatenate %40, %55, %70, %85 in 2 : vector<2x8x8xf32>, vector<2x8x8xf32>, vector<2x8x8xf32>, vector<2x8x8xf32> -> vector<2x8x32xf32>
    %87 = vector.shape_cast %86 : vector<2x8x32xf32> to vector<16x32xf32>
    %c0_23 = arith.constant 0 : index
    %c0_24 = arith.constant 0 : index
    %88 = vector.load %arg3[%c0_23, %c0_24] : memref<32x32xf32, #tpu.memory_space<vmem>>, vector<32x32xf32>
    %cst_25 = arith.constant dense<0.000000e+00> : vector<16x32xf32>
    %89 = tpu.matmul %87, %88, %cst_25 {dimension_numbers = #tpu.dot_dimension_numbers<[1], [0], [0], [1], [0, 0, 1, 1], [], []>} : vector<16x32xf32>, vector<32x32xf32>, vector<16x32xf32> -> vector<16x32xf32>
    %90 = vector.broadcast %4 : vector<1x32xf32> to vector<16x32xf32>
    %91 = arith.addf %89, %90 : vector<16x32xf32>
    %92 = arith.addf %0, %91 : vector<16x32xf32>
    %cst_26 = arith.constant dense<0.000000e+00> : vector<16xf32>
    %93 = vector.multi_reduction <add>, %92, %cst_26 [1] : vector<16x32xf32> to vector<16xf32>
    %94 = vector.shape_cast %93 : vector<16xf32> to vector<16x1xf32>
    %cst_27 = arith.constant 3.200000e+01 : f32
    %95 = vector.broadcast %cst_27 : f32 to vector<16x1xf32>
    %96 = arith.divf %94, %95 : vector<16x1xf32>
    %97 = vector.broadcast %96 : vector<16x1xf32> to vector<16x32xf32>
    %98 = arith.subf %92, %97 : vector<16x32xf32>
    %99 = arith.mulf %98, %98 : vector<16x32xf32>
    %cst_28 = arith.constant dense<0.000000e+00> : vector<16xf32>
    %100 = vector.multi_reduction <add>, %99, %cst_28 [1] : vector<16x32xf32> to vector<16xf32>
    %101 = vector.shape_cast %100 : vector<16xf32> to vector<16x1xf32>
    %cst_29 = arith.constant 3.200000e+01 : f32
    %102 = vector.broadcast %cst_29 : f32 to vector<16x1xf32>
    %103 = arith.divf %101, %102 : vector<16x1xf32>
    %cst_30 = arith.constant 9.99999974E-6 : f32
    %104 = vector.broadcast %cst_30 : f32 to vector<16x1xf32>
    %105 = arith.addf %103, %104 : vector<16x1xf32>
    %106 = math.rsqrt %105 : vector<16x1xf32>
    %107 = vector.broadcast %106 : vector<16x1xf32> to vector<16x32xf32>
    %108 = arith.mulf %98, %107 : vector<16x32xf32>
    %109 = vector.broadcast %8 : vector<1x32xf32> to vector<16x32xf32>
    %110 = arith.mulf %108, %109 : vector<16x32xf32>
    %111 = vector.broadcast %9 : vector<1x32xf32> to vector<16x32xf32>
    %112 = arith.addf %110, %111 : vector<16x32xf32>
    %c0_31 = arith.constant 0 : index
    %c0_32 = arith.constant 0 : index
    %113 = vector.load %arg4[%c0_31, %c0_32] : memref<32x32xf32, #tpu.memory_space<vmem>>, vector<32x32xf32>
    %cst_33 = arith.constant dense<0.000000e+00> : vector<16x32xf32>
    %114 = tpu.matmul %112, %113, %cst_33 {dimension_numbers = #tpu.dot_dimension_numbers<[1], [0], [0], [1], [0, 0, 1, 1], [], []>} : vector<16x32xf32>, vector<32x32xf32>, vector<16x32xf32> -> vector<16x32xf32>
    %115 = vector.broadcast %5 : vector<1x32xf32> to vector<16x32xf32>
    %116 = arith.addf %114, %115 : vector<16x32xf32>
    %c0_34 = arith.constant 0 : index
    %c0_35 = arith.constant 0 : index
    %117 = vector.load %arg5[%c0_34, %c0_35] : memref<32x64xf32, #tpu.memory_space<vmem>>, vector<32x64xf32>
    %cst_36 = arith.constant dense<0.000000e+00> : vector<16x64xf32>
    %118 = tpu.matmul %1, %117, %cst_36 {dimension_numbers = #tpu.dot_dimension_numbers<[1], [0], [0], [1], [0, 0, 1, 1], [], []>} : vector<16x32xf32>, vector<32x64xf32>, vector<16x64xf32> -> vector<16x64xf32>
    %119 = vector.broadcast %6 : vector<1x64xf32> to vector<16x64xf32>
    %120 = arith.addf %118, %119 : vector<16x64xf32>
    %121 = vector.extract_strided_slice %120 {offsets = [0, 0], sizes = [16, 32], strides = [1, 1]} : vector<16x64xf32> to vector<16x32xf32>
    %122 = vector.extract_strided_slice %120 {offsets = [0, 32], sizes = [16, 32], strides = [1, 1]} : vector<16x64xf32> to vector<16x32xf32>
    %123 = vector.shape_cast %116 : vector<16x32xf32> to vector<2x8x32xf32>
    %124 = vector.shape_cast %121 : vector<16x32xf32> to vector<2x8x32xf32>
    %125 = vector.shape_cast %122 : vector<16x32xf32> to vector<2x8x32xf32>
    %126 = vector.extract_strided_slice %123 {offsets = [0, 0, 0], sizes = [2, 8, 8], strides = [1, 1, 1]} : vector<2x8x32xf32> to vector<2x8x8xf32>
    %127 = vector.extract_strided_slice %124 {offsets = [0, 0, 0], sizes = [2, 8, 8], strides = [1, 1, 1]} : vector<2x8x32xf32> to vector<2x8x8xf32>
    "tpu.trace_start"() <{level = 10 : i32, message = "bqd,bkd->bqk"}> : () -> ()
    %cst_37 = arith.constant dense<0.000000e+00> : vector<2x8x8xf32>
    %128 = tpu.matmul %126, %127, %cst_37 {dimension_numbers = #tpu.dot_dimension_numbers<[2], [2], [1], [1], [0, 0, 0, 1, 1, 1], [0], [0]>} : vector<2x8x8xf32>, vector<2x8x8xf32>, vector<2x8x8xf32> -> vector<2x8x8xf32>
    "tpu.trace_stop"() : () -> ()
    %cst_38 = arith.constant dense<0xFF800000> : vector<2x8xf32>
    %129 = vector.multi_reduction <maximumf>, %128, %cst_38 [2] : vector<2x8x8xf32> to vector<2x8xf32>
    %130 = vector.shape_cast %129 : vector<2x8xf32> to vector<2x8x1xf32>
    %131 = vector.broadcast %130 : vector<2x8x1xf32> to vector<2x8x8xf32>
    %132 = arith.subf %128, %131 : vector<2x8x8xf32>
    %133 = math.exp %132 : vector<2x8x8xf32>
    %cst_39 = arith.constant dense<0.000000e+00> : vector<2x8xf32>
    %134 = vector.multi_reduction <add>, %133, %cst_39 [2] : vector<2x8x8xf32> to vector<2x8xf32>
    %135 = vector.shape_cast %134 : vector<2x8xf32> to vector<2x8x1xf32>
    %136 = tpu.reciprocal %135 {approx = true} : vector<2x8x1xf32> -> vector<2x8x1xf32>
    %137 = vector.broadcast %136 : vector<2x8x1xf32> to vector<2x8x8xf32>
    %138 = arith.mulf %133, %137 : vector<2x8x8xf32>
    %139 = vector.extract_strided_slice %125 {offsets = [0, 0, 0], sizes = [2, 8, 8], strides = [1, 1, 1]} : vector<2x8x32xf32> to vector<2x8x8xf32>
    "tpu.trace_start"() <{level = 10 : i32, message = "bqk,bkd->bqd"}> : () -> ()
    %cst_40 = arith.constant dense<0.000000e+00> : vector<2x8x8xf32>
    %140 = tpu.matmul %138, %139, %cst_40 {dimension_numbers = #tpu.dot_dimension_numbers<[2], [1], [1], [2], [0, 0, 0, 1, 1, 2], [0], [0]>} : vector<2x8x8xf32>, vector<2x8x8xf32>, vector<2x8x8xf32> -> vector<2x8x8xf32>
    "tpu.trace_stop"() : () -> ()
    %141 = vector.extract_strided_slice %123 {offsets = [0, 0, 8], sizes = [2, 8, 8], strides = [1, 1, 1]} : vector<2x8x32xf32> to vector<2x8x8xf32>
    %142 = vector.extract_strided_slice %124 {offsets = [0, 0, 8], sizes = [2, 8, 8], strides = [1, 1, 1]} : vector<2x8x32xf32> to vector<2x8x8xf32>
    "tpu.trace_start"() <{level = 10 : i32, message = "bqd,bkd->bqk"}> : () -> ()
    %cst_41 = arith.constant dense<0.000000e+00> : vector<2x8x8xf32>
    %143 = tpu.matmul %141, %142, %cst_41 {dimension_numbers = #tpu.dot_dimension_numbers<[2], [2], [1], [1], [0, 0, 0, 1, 1, 1], [0], [0]>} : vector<2x8x8xf32>, vector<2x8x8xf32>, vector<2x8x8xf32> -> vector<2x8x8xf32>
    "tpu.trace_stop"() : () -> ()
    %cst_42 = arith.constant dense<0xFF800000> : vector<2x8xf32>
    %144 = vector.multi_reduction <maximumf>, %143, %cst_42 [2] : vector<2x8x8xf32> to vector<2x8xf32>
    %145 = vector.shape_cast %144 : vector<2x8xf32> to vector<2x8x1xf32>
    %146 = vector.broadcast %145 : vector<2x8x1xf32> to vector<2x8x8xf32>
    %147 = arith.subf %143, %146 : vector<2x8x8xf32>
    %148 = math.exp %147 : vector<2x8x8xf32>
    %cst_43 = arith.constant dense<0.000000e+00> : vector<2x8xf32>
    %149 = vector.multi_reduction <add>, %148, %cst_43 [2] : vector<2x8x8xf32> to vector<2x8xf32>
    %150 = vector.shape_cast %149 : vector<2x8xf32> to vector<2x8x1xf32>
    %151 = tpu.reciprocal %150 {approx = true} : vector<2x8x1xf32> -> vector<2x8x1xf32>
    %152 = vector.broadcast %151 : vector<2x8x1xf32> to vector<2x8x8xf32>
    %153 = arith.mulf %148, %152 : vector<2x8x8xf32>
    %154 = vector.extract_strided_slice %125 {offsets = [0, 0, 8], sizes = [2, 8, 8], strides = [1, 1, 1]} : vector<2x8x32xf32> to vector<2x8x8xf32>
    "tpu.trace_start"() <{level = 10 : i32, message = "bqk,bkd->bqd"}> : () -> ()
    %cst_44 = arith.constant dense<0.000000e+00> : vector<2x8x8xf32>
    %155 = tpu.matmul %153, %154, %cst_44 {dimension_numbers = #tpu.dot_dimension_numbers<[2], [1], [1], [2], [0, 0, 0, 1, 1, 2], [0], [0]>} : vector<2x8x8xf32>, vector<2x8x8xf32>, vector<2x8x8xf32> -> vector<2x8x8xf32>
    "tpu.trace_stop"() : () -> ()
    %156 = vector.extract_strided_slice %123 {offsets = [0, 0, 16], sizes = [2, 8, 8], strides = [1, 1, 1]} : vector<2x8x32xf32> to vector<2x8x8xf32>
    %157 = vector.extract_strided_slice %124 {offsets = [0, 0, 16], sizes = [2, 8, 8], strides = [1, 1, 1]} : vector<2x8x32xf32> to vector<2x8x8xf32>
    "tpu.trace_start"() <{level = 10 : i32, message = "bqd,bkd->bqk"}> : () -> ()
    %cst_45 = arith.constant dense<0.000000e+00> : vector<2x8x8xf32>
    %158 = tpu.matmul %156, %157, %cst_45 {dimension_numbers = #tpu.dot_dimension_numbers<[2], [2], [1], [1], [0, 0, 0, 1, 1, 1], [0], [0]>} : vector<2x8x8xf32>, vector<2x8x8xf32>, vector<2x8x8xf32> -> vector<2x8x8xf32>
    "tpu.trace_stop"() : () -> ()
    %cst_46 = arith.constant dense<0xFF800000> : vector<2x8xf32>
    %159 = vector.multi_reduction <maximumf>, %158, %cst_46 [2] : vector<2x8x8xf32> to vector<2x8xf32>
    %160 = vector.shape_cast %159 : vector<2x8xf32> to vector<2x8x1xf32>
    %161 = vector.broadcast %160 : vector<2x8x1xf32> to vector<2x8x8xf32>
    %162 = arith.subf %158, %161 : vector<2x8x8xf32>
    %163 = math.exp %162 : vector<2x8x8xf32>
    %cst_47 = arith.constant dense<0.000000e+00> : vector<2x8xf32>
    %164 = vector.multi_reduction <add>, %163, %cst_47 [2] : vector<2x8x8xf32> to vector<2x8xf32>
    %165 = vector.shape_cast %164 : vector<2x8xf32> to vector<2x8x1xf32>
    %166 = tpu.reciprocal %165 {approx = true} : vector<2x8x1xf32> -> vector<2x8x1xf32>
    %167 = vector.broadcast %166 : vector<2x8x1xf32> to vector<2x8x8xf32>
    %168 = arith.mulf %163, %167 : vector<2x8x8xf32>
    %169 = vector.extract_strided_slice %125 {offsets = [0, 0, 16], sizes = [2, 8, 8], strides = [1, 1, 1]} : vector<2x8x32xf32> to vector<2x8x8xf32>
    "tpu.trace_start"() <{level = 10 : i32, message = "bqk,bkd->bqd"}> : () -> ()
    %cst_48 = arith.constant dense<0.000000e+00> : vector<2x8x8xf32>
    %170 = tpu.matmul %168, %169, %cst_48 {dimension_numbers = #tpu.dot_dimension_numbers<[2], [1], [1], [2], [0, 0, 0, 1, 1, 2], [0], [0]>} : vector<2x8x8xf32>, vector<2x8x8xf32>, vector<2x8x8xf32> -> vector<2x8x8xf32>
    "tpu.trace_stop"() : () -> ()
    %171 = vector.extract_strided_slice %123 {offsets = [0, 0, 24], sizes = [2, 8, 8], strides = [1, 1, 1]} : vector<2x8x32xf32> to vector<2x8x8xf32>
    %172 = vector.extract_strided_slice %124 {offsets = [0, 0, 24], sizes = [2, 8, 8], strides = [1, 1, 1]} : vector<2x8x32xf32> to vector<2x8x8xf32>
    "tpu.trace_start"() <{level = 10 : i32, message = "bqd,bkd->bqk"}> : () -> ()
    %cst_49 = arith.constant dense<0.000000e+00> : vector<2x8x8xf32>
    %173 = tpu.matmul %171, %172, %cst_49 {dimension_numbers = #tpu.dot_dimension_numbers<[2], [2], [1], [1], [0, 0, 0, 1, 1, 1], [0], [0]>} : vector<2x8x8xf32>, vector<2x8x8xf32>, vector<2x8x8xf32> -> vector<2x8x8xf32>
    "tpu.trace_stop"() : () -> ()
    %cst_50 = arith.constant dense<0xFF800000> : vector<2x8xf32>
    %174 = vector.multi_reduction <maximumf>, %173, %cst_50 [2] : vector<2x8x8xf32> to vector<2x8xf32>
    %175 = vector.shape_cast %174 : vector<2x8xf32> to vector<2x8x1xf32>
    %176 = vector.broadcast %175 : vector<2x8x1xf32> to vector<2x8x8xf32>
    %177 = arith.subf %173, %176 : vector<2x8x8xf32>
    %178 = math.exp %177 : vector<2x8x8xf32>
    %cst_51 = arith.constant dense<0.000000e+00> : vector<2x8xf32>
    %179 = vector.multi_reduction <add>, %178, %cst_51 [2] : vector<2x8x8xf32> to vector<2x8xf32>
    %180 = vector.shape_cast %179 : vector<2x8xf32> to vector<2x8x1xf32>
    %181 = tpu.reciprocal %180 {approx = true} : vector<2x8x1xf32> -> vector<2x8x1xf32>
    %182 = vector.broadcast %181 : vector<2x8x1xf32> to vector<2x8x8xf32>
    %183 = arith.mulf %178, %182 : vector<2x8x8xf32>
    %184 = vector.extract_strided_slice %125 {offsets = [0, 0, 24], sizes = [2, 8, 8], strides = [1, 1, 1]} : vector<2x8x32xf32> to vector<2x8x8xf32>
    "tpu.trace_start"() <{level = 10 : i32, message = "bqk,bkd->bqd"}> : () -> ()
    %cst_52 = arith.constant dense<0.000000e+00> : vector<2x8x8xf32>
    %185 = tpu.matmul %183, %184, %cst_52 {dimension_numbers = #tpu.dot_dimension_numbers<[2], [1], [1], [2], [0, 0, 0, 1, 1, 2], [0], [0]>} : vector<2x8x8xf32>, vector<2x8x8xf32>, vector<2x8x8xf32> -> vector<2x8x8xf32>
    "tpu.trace_stop"() : () -> ()
    %186 = tpu.concatenate %140, %155, %170, %185 in 2 : vector<2x8x8xf32>, vector<2x8x8xf32>, vector<2x8x8xf32>, vector<2x8x8xf32> -> vector<2x8x32xf32>
    %187 = vector.shape_cast %186 : vector<2x8x32xf32> to vector<16x32xf32>
    %c0_53 = arith.constant 0 : index
    %c0_54 = arith.constant 0 : index
    %188 = vector.load %arg6[%c0_53, %c0_54] : memref<32x32xf32, #tpu.memory_space<vmem>>, vector<32x32xf32>
    %cst_55 = arith.constant dense<0.000000e+00> : vector<16x32xf32>
    %189 = tpu.matmul %187, %188, %cst_55 {dimension_numbers = #tpu.dot_dimension_numbers<[1], [0], [0], [1], [0, 0, 1, 1], [], []>} : vector<16x32xf32>, vector<32x32xf32>, vector<16x32xf32> -> vector<16x32xf32>
    %190 = vector.broadcast %7 : vector<1x32xf32> to vector<16x32xf32>
    %191 = arith.addf %189, %190 : vector<16x32xf32>
    %192 = arith.addf %112, %191 : vector<16x32xf32>
    %cst_56 = arith.constant dense<0.000000e+00> : vector<16xf32>
    %193 = vector.multi_reduction <add>, %192, %cst_56 [1] : vector<16x32xf32> to vector<16xf32>
    %194 = vector.shape_cast %193 : vector<16xf32> to vector<16x1xf32>
    %cst_57 = arith.constant 3.200000e+01 : f32
    %195 = vector.broadcast %cst_57 : f32 to vector<16x1xf32>
    %196 = arith.divf %194, %195 : vector<16x1xf32>
    %197 = vector.broadcast %196 : vector<16x1xf32> to vector<16x32xf32>
    %198 = arith.subf %192, %197 : vector<16x32xf32>
    %199 = arith.mulf %198, %198 : vector<16x32xf32>
    %cst_58 = arith.constant dense<0.000000e+00> : vector<16xf32>
    %200 = vector.multi_reduction <add>, %199, %cst_58 [1] : vector<16x32xf32> to vector<16xf32>
    %201 = vector.shape_cast %200 : vector<16xf32> to vector<16x1xf32>
    %cst_59 = arith.constant 3.200000e+01 : f32
    %202 = vector.broadcast %cst_59 : f32 to vector<16x1xf32>
    %203 = arith.divf %201, %202 : vector<16x1xf32>
    %cst_60 = arith.constant 9.99999974E-6 : f32
    %204 = vector.broadcast %cst_60 : f32 to vector<16x1xf32>
    %205 = arith.addf %203, %204 : vector<16x1xf32>
    %206 = math.rsqrt %205 : vector<16x1xf32>
    %207 = vector.broadcast %206 : vector<16x1xf32> to vector<16x32xf32>
    %208 = arith.mulf %198, %207 : vector<16x32xf32>
    %209 = vector.broadcast %10 : vector<1x32xf32> to vector<16x32xf32>
    %210 = arith.mulf %208, %209 : vector<16x32xf32>
    %211 = vector.broadcast %11 : vector<1x32xf32> to vector<16x32xf32>
    %212 = arith.addf %210, %211 : vector<16x32xf32>
    %c0_61 = arith.constant 0 : index
    %c0_62 = arith.constant 0 : index
    %213 = vector.load %arg7[%c0_61, %c0_62] : memref<32x64xf32, #tpu.memory_space<vmem>>, vector<32x64xf32>
    %cst_63 = arith.constant dense<0.000000e+00> : vector<16x64xf32>
    %214 = tpu.matmul %212, %213, %cst_63 {dimension_numbers = #tpu.dot_dimension_numbers<[1], [0], [0], [1], [0, 0, 1, 1], [], []>} : vector<16x32xf32>, vector<32x64xf32>, vector<16x64xf32> -> vector<16x64xf32>
    %215 = vector.broadcast %14 : vector<1x64xf32> to vector<16x64xf32>
    %216 = arith.addf %214, %215 : vector<16x64xf32>
    %cst_64 = arith.constant 0.000000e+00 : f32
    %217 = vector.broadcast %cst_64 : f32 to vector<16x64xf32>
    %218 = arith.maximumf %216, %217 : vector<16x64xf32>
    %c0_65 = arith.constant 0 : index
    %c0_66 = arith.constant 0 : index
    %219 = vector.load %arg8[%c0_65, %c0_66] : memref<64x32xf32, #tpu.memory_space<vmem>>, vector<64x32xf32>
    %cst_67 = arith.constant dense<0.000000e+00> : vector<16x32xf32>
    %220 = tpu.matmul %218, %219, %cst_67 {dimension_numbers = #tpu.dot_dimension_numbers<[1], [0], [0], [1], [0, 0, 1, 1], [], []>} : vector<16x64xf32>, vector<64x32xf32>, vector<16x32xf32> -> vector<16x32xf32>
    %221 = vector.broadcast %15 : vector<1x32xf32> to vector<16x32xf32>
    %222 = arith.addf %220, %221 : vector<16x32xf32>
    %223 = arith.addf %212, %222 : vector<16x32xf32>
    %cst_68 = arith.constant dense<0.000000e+00> : vector<16xf32>
    %224 = vector.multi_reduction <add>, %223, %cst_68 [1] : vector<16x32xf32> to vector<16xf32>
    %225 = vector.shape_cast %224 : vector<16xf32> to vector<16x1xf32>
    %cst_69 = arith.constant 3.200000e+01 : f32
    %226 = vector.broadcast %cst_69 : f32 to vector<16x1xf32>
    %227 = arith.divf %225, %226 : vector<16x1xf32>
    %228 = vector.broadcast %227 : vector<16x1xf32> to vector<16x32xf32>
    %229 = arith.subf %223, %228 : vector<16x32xf32>
    %230 = arith.mulf %229, %229 : vector<16x32xf32>
    %cst_70 = arith.constant dense<0.000000e+00> : vector<16xf32>
    %231 = vector.multi_reduction <add>, %230, %cst_70 [1] : vector<16x32xf32> to vector<16xf32>
    %232 = vector.shape_cast %231 : vector<16xf32> to vector<16x1xf32>
    %cst_71 = arith.constant 3.200000e+01 : f32
    %233 = vector.broadcast %cst_71 : f32 to vector<16x1xf32>
    %234 = arith.divf %232, %233 : vector<16x1xf32>
    %cst_72 = arith.constant 9.99999974E-6 : f32
    %235 = vector.broadcast %cst_72 : f32 to vector<16x1xf32>
    %236 = arith.addf %234, %235 : vector<16x1xf32>
    %237 = math.rsqrt %236 : vector<16x1xf32>
    %238 = vector.broadcast %237 : vector<16x1xf32> to vector<16x32xf32>
    %239 = arith.mulf %229, %238 : vector<16x32xf32>
    %240 = vector.broadcast %12 : vector<1x32xf32> to vector<16x32xf32>
    %241 = arith.mulf %239, %240 : vector<16x32xf32>
    %242 = vector.broadcast %13 : vector<1x32xf32> to vector<16x32xf32>
    %243 = arith.addf %241, %242 : vector<16x32xf32>
    %c0_73 = arith.constant 0 : index
    %c0_74 = arith.constant 0 : index
    %244 = vector.load %arg10[%c0_73, %c0_74] : memref<16x32xf32, #tpu.memory_space<vmem>>, vector<16x32xf32>
    tpu.vector_store %arg10[%c0_73, %c0_74], %243 {strides = array<i32>} : memref<16x32xf32, #tpu.memory_space<vmem>>, vector<16x32xf32>,
    return
  }
}

</mosaic_0001>

<llo_original>
// kernel: tpu_custom_call.1
$region0: #{tpu_custom_call.1}
  #allocation0 [shape = 'u32[]', space=smem, size = 0x4, offset = 0x4, fixed_abs, tag = 'smem constant byte address 0x4 - core index']
  #allocation1 [shape = 'u32[144,128]{1,0:T(1,128)}', space=vmem, size = 0x12000, scoped, tag = 'internal scratch']
  %s0 = inlined_call_operand.hbm [shape: f32[16,32], index: 0, kind: input, shape index: {}]
  %s1 = inlined_call_operand.hbm [shape: f32[16,32], index: 1, kind: input, shape index: {}]
  %s2 = inlined_call_operand.vmem [shape: f32[32,96], index: 2, kind: input, shape index: {}]
  %s3 = inlined_call_operand.vmem [shape: f32[32,32], index: 3, kind: input, shape index: {}]
  %s4 = inlined_call_operand.vmem [shape: f32[32,32], index: 4, kind: input, shape index: {}]
  %s5 = inlined_call_operand.hbm [shape: f32[32,64], index: 5, kind: input, shape index: {}]
  %s6 = inlined_call_operand.hbm [shape: f32[32,32], index: 6, kind: input, shape index: {}]
  %s7 = inlined_call_operand.hbm [shape: f32[32,64], index: 7, kind: input, shape index: {}]
  %s8 = inlined_call_operand.vmem [shape: f32[64,32], index: 8, kind: input, shape index: {}]
  %s9 = inlined_call_operand.vmem [shape: f32[13,128], index: 9, kind: input, shape index: {}]
  %s10 = inlined_call_operand.hbm [shape: f32[16,32], index: 10, kind: output, shape index: {}]
  %s11 = sld [smem:[#allocation0]]
  $region70: #{tpu_custom_call.1} parent=0
    _
  %s13 = ssub.s32 1, %s11
  %s14 = scalar_select 0, %s13, %s11
  $region1: #{tpu_custom_call.1} parent=0
    #allocation2 [shape = 'u8[8192]{0}', space=vmem, size = 0x2000, scoped, tag = 'input window, operand 0, single buffered']
    #allocation3 [shape = 's32[1]{0}', space=sflag, size = 0x4, scoped, tag = 'scoped memory for tpu_custom_call.1']
    #allocation4 [shape = 's32[1]{0}', space=sflag, size = 0x4, scoped, tag = 'scoped memory for tpu_custom_call.1']
    #allocation5 [shape = 'u8[8192]{0}', space=vmem, size = 0x2000, scoped, tag = 'input window, operand 1, single buffered']
    #allocation6 [shape = 's32[1]{0}', space=sflag, size = 0x4, scoped, tag = 'scoped memory for tpu_custom_call.1']
    #allocation7 [shape = 'u8[16384]{0}', space=vmem, size = 0x4000, scoped, tag = 'input window, operand 5, single buffered']
    #allocation8 [shape = 'u8[16384]{0}', space=vmem, size = 0x4000, scoped, tag = 'input window, operand 6, single buffered']
    #allocation9 [shape = 's32[1]{0}', space=sflag, size = 0x4, scoped, tag = 'scoped memory for tpu_custom_call.1']
    #allocation10 [shape = 'u8[16384]{0}', space=vmem, size = 0x4000, scoped, tag = 'input window, operand 7, single buffered']
    #allocation11 [shape = 'u8[8192]{0}', space=vmem, size = 0x2000, scoped, tag = 'output window, operand 0, single buffered']
    %15 = vsyncpa [#allocation3], 0
    %16 = vsyncpa [#allocation6], 0
    %17 = vsyncpa [#allocation9], 0
    %18 = vsyncpa [#allocation4], 0
    // Predicated region
    $region2: #{tpu_custom_call.1} parent=1 // pred_check
      _
    $region3: #{tpu_custom_call.1} parent=1 // pred_check_branch
      %20 = sbr.rel (0) target = $region5
    $region4: #{tpu_custom_call.1} parent=1 // pred_region
      %s22 = ssub.s32 256, 256
      %23 = vsyncadd [#allocation3], %s22
      %s24 = sshll.u32 [#allocation2], 4
      %s25 = int_to_ptr.vmem [resolvable:$true] %s24
      %30 = dma.hbm_to_vmem [thread:$0]  %s0, 256, %s25, [#allocation3], 128, 128, 8
    $region5: #{tpu_custom_call.1} parent=1 // pred_fallthru
      _
    // Predicated region
    $region6: #{tpu_custom_call.1} parent=1 // pred_check
      _
    $region7: #{tpu_custom_call.1} parent=1 // pred_check_branch
      %32 = sbr.rel (0) target = $region9
    $region8: #{tpu_custom_call.1} parent=1 // pred_region
      %s34 = ssub.s32 256, 256
      %35 = vsyncadd [#allocation6], %s34
      %s36 = sshll.u32 [#allocation5], 4
      %s37 = int_to_ptr.vmem [resolvable:$true] %s36
      %42 = dma.hbm_to_vmem [thread:$0]  %s1, 256, %s37, [#allocation6], 128, 128, 8
    $region9: #{tpu_custom_call.1} parent=1 // pred_fallthru
      _
    // Predicated region
    $region10: #{tpu_custom_call.1} parent=1 // pred_check
      _
    $region11: #{tpu_custom_call.1} parent=1 // pred_check_branch
      %44 = sbr.rel (0) target = $region13
    $region12: #{tpu_custom_call.1} parent=1 // pred_region
      _
    $region13: #{tpu_custom_call.1} parent=1 // pred_fallthru
      _
    // Predicated region
    $region14: #{tpu_custom_call.1} parent=1 // pred_check
      _
    $region15: #{tpu_custom_call.1} parent=1 // pred_check_branch
      %46 = sbr.rel (0) target = $region17
    $region16: #{tpu_custom_call.1} parent=1 // pred_region
      _
    $region17: #{tpu_custom_call.1} parent=1 // pred_fallthru
      _
    // Predicated region
    $region18: #{tpu_custom_call.1} parent=1 // pred_check
      _
    $region19: #{tpu_custom_call.1} parent=1 // pred_check_branch
      %48 = sbr.rel (0) target = $region21
    $region20: #{tpu_custom_call.1} parent=1 // pred_region
      _
    $region21: #{tpu_custom_call.1} parent=1 // pred_fallthru
      _
    // Predicated region
    $region22: #{tpu_custom_call.1} parent=1 // pred_check
      _
    $region23: #{tpu_custom_call.1} parent=1 // pred_check_branch
      %50 = sbr.rel (0) target = $region25
    $region24: #{tpu_custom_call.1} parent=1 // pred_region
      %s52 = ssub.s32 512, 512
      %53 = vsyncadd [#allocation6], %s52
      %s54 = sshll.u32 [#allocation7], 4
      %s55 = int_to_ptr.vmem [resolvable:$true] %s54
      %60 = dma.hbm_to_vmem [thread:$0]  %s5, 512, %s55, [#allocation6], 128, 128, 8
    $region25: #{tpu_custom_call.1} parent=1 // pred_fallthru
      _
    // Predicated region
    $region26: #{tpu_custom_call.1} parent=1 // pred_check
      _
    $region27: #{tpu_custom_call.1} parent=1 // pred_check_branch
      %62 = sbr.rel (0) target = $region29
    $region28: #{tpu_custom_call.1} parent=1 // pred_region
      %s64 = ssub.s32 512, 512
      %65 = vsyncadd [#allocation9], %s64
      %s66 = sshll.u32 [#allocation8], 4
      %s67 = int_to_ptr.vmem [resolvable:$true] %s66
      %72 = dma.hbm_to_vmem [thread:$0]  %s6, 512, %s67, [#allocation9], 128, 128, 8
    $region29: #{tpu_custom_call.1} parent=1 // pred_fallthru
      _
    // Predicated region
    $region30: #{tpu_custom_call.1} parent=1 // pred_check
      _
    $region31: #{tpu_custom_call.1} parent=1 // pred_check_branch
      %74 = sbr.rel (0) target = $region33
    $region32: #{tpu_custom_call.1} parent=1 // pred_region
      %s76 = ssub.s32 512, 512
      %77 = vsyncadd [#allocation9], %s76
      %s78 = sshll.u32 [#allocation10], 4
      %s79 = int_to_ptr.vmem [resolvable:$true] %s78
      %84 = dma.hbm_to_vmem [thread:$0]  %s7, 512, %s79, [#allocation9], 128, 128, 8
    $region33: #{tpu_custom_call.1} parent=1 // pred_fallthru
      _
    // Predicated region
    $region34: #{tpu_custom_call.1} parent=1 // pred_check
      _
    $region35: #{tpu_custom_call.1} parent=1 // pred_check_branch
      %86 = sbr.rel (0) target = $region37
    $region36: #{tpu_custom_call.1} parent=1 // pred_region
      _
    $region37: #{tpu_custom_call.1} parent=1 // pred_fallthru
      _
    // Predicated region
    $region38: #{tpu_custom_call.1} parent=1 // pred_check
      _
    $region39: #{tpu_custom_call.1} parent=1 // pred_check_branch
      %88 = sbr.rel (0) target = $region41
    $region40: #{tpu_custom_call.1} parent=1 // pred_region
      _
    $region41: #{tpu_custom_call.1} parent=1 // pred_fallthru
      _
    // Predicated region
    $region42: #{tpu_custom_call.1} parent=1 // pred_check
      _
    $region43: #{tpu_custom_call.1} parent=1 // pred_check_branch
      %90 = sbr.rel (0) target = $region45
    $region44: #{tpu_custom_call.1} parent=1 // pred_region
      %91 = dma.done [#allocation3], 256
    $region45: #{tpu_custom_call.1} parent=1 // pred_fallthru
      _
    // Predicated region
    $region46: #{tpu_custom_call.1} parent=1 // pred_check
      _
    $region47: #{tpu_custom_call.1} parent=1 // pred_check_branch
      %93 = sbr.rel (0) target = $region49
    $region48: #{tpu_custom_call.1} parent=1 // pred_region
      %94 = dma.done [#allocation6], 256
    $region49: #{tpu_custom_call.1} parent=1 // pred_fallthru
      _
    // Predicated region
    $region50: #{tpu_custom_call.1} parent=1 // pred_check
      _
    $region51: #{tpu_custom_call.1} parent=1 // pred_check_branch
      %96 = sbr.rel (0) target = $region53
    $region52: #{tpu_custom_call.1} parent=1 // pred_region
      %97 = dma.done [#allocation6], 512
    $region53: #{tpu_custom_call.1} parent=1 // pred_fallthru
      _
    // Predicated region
    $region54: #{tpu_custom_call.1} parent=1 // pred_check
      _
    $region55: #{tpu_custom_call.1} parent=1 // pred_check_branch
      %99 = sbr.rel (0) target = $region57
    $region56: #{tpu_custom_call.1} parent=1 // pred_region
      %100 = dma.done [#allocation9], 512
    $region57: #{tpu_custom_call.1} parent=1 // pred_fallthru
      _
    // Predicated region
    $region58: #{tpu_custom_call.1} parent=1 // pred_check
      _
    $region59: #{tpu_custom_call.1} parent=1 // pred_check_branch
      %102 = sbr.rel (0) target = $region61
    $region60: #{tpu_custom_call.1} parent=1 // pred_region
      %103 = dma.done [#allocation9], 512
    $region61: #{tpu_custom_call.1} parent=1 // pred_fallthru
      _
    %v104 = vld [vmem:[#allocation2] sm:$0xff]
    %v105 = vld [vmem:[#allocation2 + $0x8] sm:$0xff]
    %v106 = vld [vmem:[#allocation5] sm:$0xff]
    %v107 = vld [vmem:[#allocation5 + $0x8] sm:$0xff]
    %v108 = vld [vmem:[%s9] sm:$0xff]
    %v109 = vld [vmem:[%s9 + $0x8] sm:$0x1f]
    %v110 = vld [vmem:[%s2] sm:$0xff]
    %v111 = vld [vmem:[%s2 + $0x8] sm:$0xff]
    %v112 = vld [vmem:[%s2 + $0x10] sm:$0xff]
    %v113 = vld [vmem:[%s2 + $0x18] sm:$0xff]
    %v114 = vlaneseq
    %v115 = vshrl.u32 %v114, 7
    %v116 = vsub.s32 0, %v115
    %v117 = vrot.slane %v108, %v116
    %vm118 = vcmask 261120
    %v120 = vsel %vm118, %v104, 0
    %v123 = vsel %vm118, %v105, 0
    %125 = vmatprep.subr.mxu0 0.0
    %126 = vmatpush1.msra.mxu0 0.0
    %127 = vmatprep.subr.mxu0 0.0
    %128 = vmatpush1.msra.mxu0 0.0
    %129 = vmatprep.subr.mxu0 0.0
    %130 = vmatpush1.msra.mxu0 0.0
    %131 = vmatprep.subr.mxu0 0.0
    %132 = vmatpush1.msra.mxu0 0.0
    %133 = vmatprep.subr.mxu0 0.0
    %134 = vmatpush1.msra.mxu0 0.0
    %135 = vmatprep.subr.mxu0 0.0
    %136 = vmatpush1.msra.mxu0 0.0
    %137 = vmatprep.subr.mxu0 0.0
    %138 = vmatpush1.msra.mxu0 0.0
    %139 = vmatprep.subr.mxu0 0.0
    %140 = vmatpush1.msra.mxu0 0.0
    %141 = vmatprep.subr.mxu0 0.0
    %142 = vmatpush1.msra.mxu0 0.0
    %143 = vmatprep.subr.mxu0 0.0
    %144 = vmatpush1.msra.mxu0 0.0
    %145 = vmatprep.subr.mxu0 0.0
    %146 = vmatpush1.msra.mxu0 0.0
    %147 = vmatprep.subr.mxu0 0.0
    %148 = vmatpush1.msra.mxu0 0.0
    %149 = vmatprep.subr.mxu0 0.0
    %150 = vmatpush1.msra.mxu0 %v113
    %151 = vmatprep.subr.mxu0 0.0
    %152 = vmatpush1.msra.mxu0 %v112
    %153 = vmatprep.subr.mxu0 0.0
    %154 = vmatpush1.msra.mxu0 %v111
    %155 = vmatprep.subr.mxu0 0.0
    %156 = vmatpush1.msra.mxu0 %v110
    %157 = vmatprep.subr.mxu0 0.0
    %158 = vmatpush2.msra.mxu0 0.0
    %159 = vmatprep.subr.mxu0 0.0
    %160 = vmatpush2.msra.mxu0 0.0
    %161 = vmatprep.subr.mxu0 0.0
    %162 = vmatpush2.msra.mxu0 0.0
    %163 = vmatprep.subr.mxu0 0.0
    %164 = vmatpush2.msra.mxu0 0.0
    %165 = vmatprep.subr.mxu0 0.0
    %166 = vmatpush2.msra.mxu0 0.0
    %167 = vmatprep.subr.mxu0 0.0
    %168 = vmatpush2.msra.mxu0 0.0
    %169 = vmatprep.subr.mxu0 0.0
    %170 = vmatpush2.msra.mxu0 0.0
    %171 = vmatprep.subr.mxu0 0.0
    %172 = vmatpush2.msra.mxu0 0.0
    %173 = vmatprep.subr.mxu0 0.0
    %174 = vmatpush2.msra.mxu0 0.0
    %175 = vmatprep.subr.mxu0 0.0
    %176 = vmatpush2.msra.mxu0 0.0
    %177 = vmatprep.subr.mxu0 0.0
    %178 = vmatpush2.msra.mxu0 0.0
    %179 = vmatprep.subr.mxu0 0.0
    %180 = vmatpush2.msra.mxu0 0.0
    %181 = vmatprep.subr.mxu0 0.0
    %182 = vmatpush2.msra.mxu0 0.0
    %183 = vmatprep.subr.mxu0 0.0
    %184 = vmatpush2.msra.mxu0 0.0
    %185 = vmatprep.subr.mxu0 0.0
    %186 = vmatpush2.msra.mxu0 0.0
    %187 = vmatprep.subr.mxu0 0.0
    %188 = vmatpush2.msra.mxu0 0.0
    %189 = vmatprep.mubr.f32.mxu0 0.0
    %190 = vmatmul.mubr.f32.gmra.mxu0 %v120
    %v191 = vpop.f32.mrf.mxu0
    %v192 = vadd.f32 %v117, %v191
    %v193 = vpop.f32.mrf.mxu0
    %194 = vmatprep.mubr.f32.mxu0 0.0
    %195 = vmatmul.mubr.f32.gmra.mxu0 %v123
    %v196 = vpop.f32.mrf.mxu0
    %v197 = vadd.f32 %v117, %v196
    %v198 = vpop.f32.mrf.mxu0
    %199 = vdwg.mxu0
    %201 = vrot.lane.b32.xlu0 %v192, 96
    %v202 = vpop.permute.xlu0 %201
    %vm203 = vcmask 64512
    %v204 = vsel %vm203, %v192, 0
    %v206 = vsel %vm203, %v202, 0
    %208 = vmatprep.subr.mxu0 0.0
    %209 = vmatpush1.xpose.msra.mxu0 0.0
    %210 = vmatprep.subr.mxu0 0.0
    %211 = vmatpush1.xpose.msra.mxu0 0.0
    %212 = vmatprep.subr.mxu0 0.0
    %213 = vmatpush1.xpose.msra.mxu0 0.0
    %214 = vmatprep.subr.mxu0 0.0
    %215 = vmatpush1.xpose.msra.mxu0 0.0
    %216 = vmatprep.subr.mxu0 0.0
    %217 = vmatpush1.xpose.msra.mxu0 0.0
    %218 = vmatprep.subr.mxu0 0.0
    %219 = vmatpush1.xpose.msra.mxu0 0.0
    %220 = vmatprep.subr.mxu0 0.0
    %221 = vmatpush1.xpose.msra.mxu0 0.0
    %222 = vmatprep.subr.mxu0 0.0
    %223 = vmatpush1.xpose.msra.mxu0 0.0
    %224 = vmatprep.subr.mxu0 0.0
    %225 = vmatpush1.xpose.msra.mxu0 0.0
    %226 = vmatprep.subr.mxu0 0.0
    %227 = vmatpush1.xpose.msra.mxu0 0.0
    %228 = vmatprep.subr.mxu0 0.0
    %229 = vmatpush1.xpose.msra.mxu0 0.0
    %230 = vmatprep.subr.mxu0 0.0
    %231 = vmatpush1.xpose.msra.mxu0 0.0
    %232 = vmatprep.subr.mxu0 0.0
    %233 = vmatpush1.xpose.msra.mxu0 0.0
    %234 = vmatprep.subr.mxu0 0.0
    %235 = vmatpush1.xpose.msra.mxu0 0.0
    %236 = vmatprep.subr.mxu0 0.0
    %237 = vmatpush1.xpose.msra.mxu0 0.0
    %238 = vmatprep.subr.mxu0 0.0
    %239 = vmatpush1.xpose.msra.mxu0 %v206
    %240 = vmatprep.subr.mxu0 0.0
    %241 = vmatpush2.xpose.msra.mxu0 0.0
    %242 = vmatprep.subr.mxu0 0.0
    %243 = vmatpush2.xpose.msra.mxu0 0.0
    %244 = vmatprep.subr.mxu0 0.0
    %245 = vmatpush2.xpose.msra.mxu0 0.0
    %246 = vmatprep.subr.mxu0 0.0
    %247 = vmatpush2.xpose.msra.mxu0 0.0
    %248 = vmatprep.subr.mxu0 0.0
    %249 = vmatpush2.xpose.msra.mxu0 0.0
    %250 = vmatprep.subr.mxu0 0.0
    %251 = vmatpush2.xpose.msra.mxu0 0.0
    %252 = vmatprep.subr.mxu0 0.0
    %253 = vmatpush2.xpose.msra.mxu0 0.0
    %254 = vmatprep.subr.mxu0 0.0
    %255 = vmatpush2.xpose.msra.mxu0 0.0
    %256 = vmatprep.subr.mxu0 0.0
    %257 = vmatpush2.xpose.msra.mxu0 0.0
    %258 = vmatprep.subr.mxu0 0.0
    %259 = vmatpush2.xpose.msra.mxu0 0.0
    %260 = vmatprep.subr.mxu0 0.0
    %261 = vmatpush2.xpose.msra.mxu0 0.0
    %262 = vmatprep.subr.mxu0 0.0
    %263 = vmatpush2.xpose.msra.mxu0 0.0
    %264 = vmatprep.subr.mxu0 0.0
    %265 = vmatpush2.xpose.msra.mxu0 0.0
    %266 = vmatprep.subr.mxu0 0.0
    %267 = vmatpush2.xpose.msra.mxu0 0.0
    %268 = vmatprep.subr.mxu0 0.0
    %269 = vmatpush2.xpose.msra.mxu0 0.0
    %270 = vmatprep.subr.mxu0 0.0
    %271 = vmatpush2.xpose.msra.mxu0 0.0
    %272 = vmatprep.mubr.f32.mxu0 0.0
    %273 = vmatmul.mubr.f32.gmra.mxu0 %v204
    %v274 = vpop.f32.mrf.mxu0
    %v275 = vadd.f32 0.0, %v274
    %v276 = vpop.f32.mrf.mxu0
    %277 = vdwg.mxu0
    %279 = vrot.lane.b32.xlu0 %v197, 96
    %v280 = vpop.permute.xlu0 %279
    %v281 = vsel %vm203, %v197, 0
    %v283 = vsel %vm203, %v280, 0
    %285 = vmatprep.subr.mxu0 0.0
    %286 = vmatpush1.xpose.msra.mxu0 0.0
    %287 = vmatprep.subr.mxu0 0.0
    %288 = vmatpush1.xpose.msra.mxu0 0.0
    %289 = vmatprep.subr.mxu0 0.0
    %290 = vmatpush1.xpose.msra.mxu0 0.0
    %291 = vmatprep.subr.mxu0 0.0
    %292 = vmatpush1.xpose.msra.mxu0 0.0
    %293 = vmatprep.subr.mxu0 0.0
    %294 = vmatpush1.xpose.msra.mxu0 0.0
    %295 = vmatprep.subr.mxu0 0.0
    %296 = vmatpush1.xpose.msra.mxu0 0.0
    %297 = vmatprep.subr.mxu0 0.0
    %298 = vmatpush1.xpose.msra.mxu0 0.0
    %299 = vmatprep.subr.mxu0 0.0
    %300 = vmatpush1.xpose.msra.mxu0 0.0
    %301 = vmatprep.subr.mxu0 0.0
    %302 = vmatpush1.xpose.msra.mxu0 0.0
    %303 = vmatprep.subr.mxu0 0.0
    %304 = vmatpush1.xpose.msra.mxu0 0.0
    %305 = vmatprep.subr.mxu0 0.0
    %306 = vmatpush1.xpose.msra.mxu0 0.0
    %307 = vmatprep.subr.mxu0 0.0
    %308 = vmatpush1.xpose.msra.mxu0 0.0
    %309 = vmatprep.subr.mxu0 0.0
    %310 = vmatpush1.xpose.msra.mxu0 0.0
    %311 = vmatprep.subr.mxu0 0.0
    %312 = vmatpush1.xpose.msra.mxu0 0.0
    %313 = vmatprep.subr.mxu0 0.0
    %314 = vmatpush1.xpose.msra.mxu0 0.0
    %315 = vmatprep.subr.mxu0 0.0
    %316 = vmatpush1.xpose.msra.mxu0 %v283
    %317 = vmatprep.subr.mxu0 0.0
    %318 = vmatpush2.xpose.msra.mxu0 0.0
    %319 = vmatprep.subr.mxu0 0.0
    %320 = vmatpush2.xpose.msra.mxu0 0.0
    %321 = vmatprep.subr.mxu0 0.0
    %322 = vmatpush2.xpose.msra.mxu0 0.0
    %323 = vmatprep.subr.mxu0 0.0
    %324 = vmatpush2.xpose.msra.mxu0 0.0
    %325 = vmatprep.subr.mxu0 0.0
    %326 = vmatpush2.xpose.msra.mxu0 0.0
    %327 = vmatprep.subr.mxu0 0.0
    %328 = vmatpush2.xpose.msra.mxu0 0.0
    %329 = vmatprep.subr.mxu0 0.0
    %330 = vmatpush2.xpose.msra.mxu0 0.0
    %331 = vmatprep.subr.mxu0 0.0
    %332 = vmatpush2.xpose.msra.mxu0 0.0
    %333 = vmatprep.subr.mxu0 0.0
    %334 = vmatpush2.xpose.msra.mxu0 0.0
    %335 = vmatprep.subr.mxu0 0.0
    %336 = vmatpush2.xpose.msra.mxu0 0.0
    %337 = vmatprep.subr.mxu0 0.0
    %338 = vmatpush2.xpose.msra.mxu0 0.0
    %339 = vmatprep.subr.mxu0 0.0
    %340 = vmatpush2.xpose.msra.mxu0 0.0
    %341 = vmatprep.subr.mxu0 0.0
    %342 = vmatpush2.xpose.msra.mxu0 0.0
    %343 = vmatprep.subr.mxu0 0.0
    %344 = vmatpush2.xpose.msra.mxu0 0.0
    %345 = vmatprep.subr.mxu0 0.0
    %346 = vmatpush2.xpose.msra.mxu0 0.0
    %347 = vmatprep.subr.mxu0 0.0
    %348 = vmatpush2.xpose.msra.mxu0 0.0
    %349 = vmatprep.mubr.f32.mxu0 0.0
    %350 = vmatmul.mubr.f32.gmra.mxu0 %v281
    %v351 = vpop.f32.mrf.mxu0
    %v352 = vadd.f32 0.0, %v351
    %v353 = vpop.f32.mrf.mxu0
    %354 = vdwg.mxu0
    %v355 = vsel %vm203, %v275, -inf
    %356 = vmax.xlane.f32.xlu0 %v355
    %v357 = vpop.xlane.xlu0 %356
    %v358 = vsel %vm203, %v352, -inf
    %359 = vmax.xlane.f32.xlu0 %v358
    %v360 = vpop.xlane.xlu0 %359
    %v361 = vsub.f32 %v275, %v357
    %v362 = vsub.f32 %v352, %v360
    %v363 = vmul.f32 %v361, 1.442695
    %v364 = vpow.pop %v363
    %v365 = vmul.f32 %v362, 1.442695
    %v366 = vpow.pop %v365
    %v367 = vsel %vm203, %v364, 0.0
    %368 = vadd.xlane.f32.xlu0 %v367
    %v369 = vpop.xlane.xlu0 %368
    %v370 = vsel %vm203, %v366, 0.0
    %371 = vadd.xlane.f32.xlu0 %v370
    %v372 = vpop.xlane.xlu0 %371
    %v373 = vrcp.pop %v369
    %v374 = vrcp.pop %v372
    %v375 = vmul.f32 %v364, %v373
    %v376 = vmul.f32 %v366, %v374
    %377 = vrot.lane.b32.xlu0 %v192, 64
    %v378 = vpop.permute.xlu0 %377
    %v381 = vsel %vm203, %v375, 0
    %383 = vmatprep.subr.mxu0 0.0
    %384 = vmatpush1.msra.mxu0 0.0
    %385 = vmatprep.subr.mxu0 0.0
    %386 = vmatpush1.msra.mxu0 0.0
    %387 = vmatprep.subr.mxu0 0.0
    %388 = vmatpush1.msra.mxu0 0.0
    %389 = vmatprep.subr.mxu0 0.0
    %390 = vmatpush1.msra.mxu0 0.0
    %391 = vmatprep.subr.mxu0 0.0
    %392 = vmatpush1.msra.mxu0 0.0
    %393 = vmatprep.subr.mxu0 0.0
    %394 = vmatpush1.msra.mxu0 0.0
    %395 = vmatprep.subr.mxu0 0.0
    %396 = vmatpush1.msra.mxu0 0.0
    %397 = vmatprep.subr.mxu0 0.0
    %398 = vmatpush1.msra.mxu0 0.0
    %399 = vmatprep.subr.mxu0 0.0
    %400 = vmatpush1.msra.mxu0 0.0
    %401 = vmatprep.subr.mxu0 0.0
    %402 = vmatpush1.msra.mxu0 0.0
    %403 = vmatprep.subr.mxu0 0.0
    %404 = vmatpush1.msra.mxu0 0.0
    %405 = vmatprep.subr.mxu0 0.0
    %406 = vmatpush1.msra.mxu0 0.0
    %407 = vmatprep.subr.mxu0 0.0
    %408 = vmatpush1.msra.mxu0 0.0
    %409 = vmatprep.subr.mxu0 0.0
    %410 = vmatpush1.msra.mxu0 0.0
    %411 = vmatprep.subr.mxu0 0.0
    %412 = vmatpush1.msra.mxu0 0.0
    %413 = vmatprep.subr.mxu0 0.0
    %414 = vmatpush1.msra.mxu0 %v378
    %415 = vmatprep.subr.mxu0 0.0
    %416 = vmatpush2.msra.mxu0 0.0
    %417 = vmatprep.subr.mxu0 0.0
    %418 = vmatpush2.msra.mxu0 0.0
    %419 = vmatprep.subr.mxu0 0.0
    %420 = vmatpush2.msra.mxu0 0.0
    %421 = vmatprep.subr.mxu0 0.0
    %422 = vmatpush2.msra.mxu0 0.0
    %423 = vmatprep.subr.mxu0 0.0
    %424 = vmatpush2.msra.mxu0 0.0
    %425 = vmatprep.subr.mxu0 0.0
    %426 = vmatpush2.msra.mxu0 0.0
    %427 = vmatprep.subr.mxu0 0.0
    %428 = vmatpush2.msra.mxu0 0.0
    %429 = vmatprep.subr.mxu0 0.0
    %430 = vmatpush2.msra.mxu0 0.0
    %431 = vmatprep.subr.mxu0 0.0
    %432 = vmatpush2.msra.mxu0 0.0
    %433 = vmatprep.subr.mxu0 0.0
    %434 = vmatpush2.msra.mxu0 0.0
    %435 = vmatprep.subr.mxu0 0.0
    %436 = vmatpush2.msra.mxu0 0.0
    %437 = vmatprep.subr.mxu0 0.0
    %438 = vmatpush2.msra.mxu0 0.0
    %439 = vmatprep.subr.mxu0 0.0
    %440 = vmatpush2.msra.mxu0 0.0
    %441 = vmatprep.subr.mxu0 0.0
    %442 = vmatpush2.msra.mxu0 0.0
    %443 = vmatprep.subr.mxu0 0.0
    %444 = vmatpush2.msra.mxu0 0.0
    %445 = vmatprep.subr.mxu0 0.0
    %446 = vmatpush2.msra.mxu0 0.0
    %447 = vmatprep.mubr.f32.mxu0 0.0
    %448 = vmatmul.mubr.f32.gmra.mxu0 %v381
    %v449 = vpop.f32.mrf.mxu0
    %v450 = vadd.f32 0.0, %v449
    %v451 = vpop.f32.mrf.mxu0
    %452 = vdwg.mxu0
    %453 = vrot.lane.b32.xlu0 %v197, 64
    %v454 = vpop.permute.xlu0 %453
    %v457 = vsel %vm203, %v376, 0
    %459 = vmatprep.subr.mxu0 0.0
    %460 = vmatpush1.msra.mxu0 0.0
    %461 = vmatprep.subr.mxu0 0.0
    %462 = vmatpush1.msra.mxu0 0.0
    %463 = vmatprep.subr.mxu0 0.0
    %464 = vmatpush1.msra.mxu0 0.0
    %465 = vmatprep.subr.mxu0 0.0
    %466 = vmatpush1.msra.mxu0 0.0
    %467 = vmatprep.subr.mxu0 0.0
    %468 = vmatpush1.msra.mxu0 0.0
    %469 = vmatprep.subr.mxu0 0.0
    %470 = vmatpush1.msra.mxu0 0.0
    %471 = vmatprep.subr.mxu0 0.0
    %472 = vmatpush1.msra.mxu0 0.0
    %473 = vmatprep.subr.mxu0 0.0
    %474 = vmatpush1.msra.mxu0 0.0
    %475 = vmatprep.subr.mxu0 0.0
    %476 = vmatpush1.msra.mxu0 0.0
    %477 = vmatprep.subr.mxu0 0.0
    %478 = vmatpush1.msra.mxu0 0.0
    %479 = vmatprep.subr.mxu0 0.0
    %480 = vmatpush1.msra.mxu0 0.0
    %481 = vmatprep.subr.mxu0 0.0
    %482 = vmatpush1.msra.mxu0 0.0
    %483 = vmatprep.subr.mxu0 0.0
    %484 = vmatpush1.msra.mxu0 0.0
    %485 = vmatprep.subr.mxu0 0.0
    %486 = vmatpush1.msra.mxu0 0.0
    %487 = vmatprep.subr.mxu0 0.0
    %488 = vmatpush1.msra.mxu0 0.0
    %489 = vmatprep.subr.mxu0 0.0
    %490 = vmatpush1.msra.mxu0 %v454
    %491 = vmatprep.subr.mxu0 0.0
    %492 = vmatpush2.msra.mxu0 0.0
    %493 = vmatprep.subr.mxu0 0.0
    %494 = vmatpush2.msra.mxu0 0.0
    %495 = vmatprep.subr.mxu0 0.0
    %496 = vmatpush2.msra.mxu0 0.0
    %497 = vmatprep.subr.mxu0 0.0
    %498 = vmatpush2.msra.mxu0 0.0
    %499 = vmatprep.subr.mxu0 0.0
    %500 = vmatpush2.msra.mxu0 0.0
    %501 = vmatprep.subr.mxu0 0.0
    %502 = vmatpush2.msra.mxu0 0.0
    %503 = vmatprep.subr.mxu0 0.0
    %504 = vmatpush2.msra.mxu0 0.0
    %505 = vmatprep.subr.mxu0 0.0
    %506 = vmatpush2.msra.mxu0 0.0
    %507 = vmatprep.subr.mxu0 0.0
    %508 = vmatpush2.msra.mxu0 0.0
    %509 = vmatprep.subr.mxu0 0.0
    %510 = vmatpush2.msra.mxu0 0.0
    %511 = vmatprep.subr.mxu0 0.0
    %512 = vmatpush2.msra.mxu0 0.0
    %513 = vmatprep.subr.mxu0 0.0
    %514 = vmatpush2.msra.mxu0 0.0
    %515 = vmatprep.subr.mxu0 0.0
    %516 = vmatpush2.msra.mxu0 0.0
    %517 = vmatprep.subr.mxu0 0.0
    %518 = vmatpush2.msra.mxu0 0.0
    %519 = vmatprep.subr.mxu0 0.0
    %520 = vmatpush2.msra.mxu0 0.0
    %521 = vmatprep.subr.mxu0 0.0
    %522 = vmatpush2.msra.mxu0 0.0
    %523 = vmatprep.mubr.f32.mxu0 0.0
    %524 = vmatmul.mubr.f32.gmra.mxu0 %v457
    %v525 = vpop.f32.mrf.mxu0
    %v526 = vadd.f32 0.0, %v525
    %v527 = vpop.f32.mrf.mxu0
    %528 = vdwg.mxu0
    %529 = vrot.lane.b32.xlu0 %v192, 120
    %v530 = vpop.permute.xlu0 %529
    %531 = vrot.lane.b32.xlu0 %v192, 88
    %v532 = vpop.permute.xlu0 %531
    %v533 = vsel %vm203, %v530, 0
    %v535 = vsel %vm203, %v532, 0
    %537 = vmatprep.subr.mxu0 0.0
    %538 = vmatpush1.xpose.msra.mxu0 0.0
    %539 = vmatprep.subr.mxu0 0.0
    %540 = vmatpush1.xpose.msra.mxu0 0.0
    %541 = vmatprep.subr.mxu0 0.0
    %542 = vmatpush1.xpose.msra.mxu0 0.0
    %543 = vmatprep.subr.mxu0 0.0
    %544 = vmatpush1.xpose.msra.mxu0 0.0
    %545 = vmatprep.subr.mxu0 0.0
    %546 = vmatpush1.xpose.msra.mxu0 0.0
    %547 = vmatprep.subr.mxu0 0.0
    %548 = vmatpush1.xpose.msra.mxu0 0.0
    %549 = vmatprep.subr.mxu0 0.0
    %550 = vmatpush1.xpose.msra.mxu0 0.0
    %551 = vmatprep.subr.mxu0 0.0
    %552 = vmatpush1.xpose.msra.mxu0 0.0
    %553 = vmatprep.subr.mxu0 0.0
    %554 = vmatpush1.xpose.msra.mxu0 0.0
    %555 = vmatprep.subr.mxu0 0.0
    %556 = vmatpush1.xpose.msra.mxu0 0.0
    %557 = vmatprep.subr.mxu0 0.0
    %558 = vmatpush1.xpose.msra.mxu0 0.0
    %559 = vmatprep.subr.mxu0 0.0
    %560 = vmatpush1.xpose.msra.mxu0 0.0
    %561 = vmatprep.subr.mxu0 0.0
    %562 = vmatpush1.xpose.msra.mxu0 0.0
    %563 = vmatprep.subr.mxu0 0.0
    %564 = vmatpush1.xpose.msra.mxu0 0.0
    %565 = vmatprep.subr.mxu0 0.0
    %566 = vmatpush1.xpose.msra.mxu0 0.0
    %567 = vmatprep.subr.mxu0 0.0
    %568 = vmatpush1.xpose.msra.mxu0 %v535
    %569 = vmatprep.subr.mxu0 0.0
    %570 = vmatpush2.xpose.msra.mxu0 0.0
    %571 = vmatprep.subr.mxu0 0.0
    %572 = vmatpush2.xpose.msra.mxu0 0.0
    %573 = vmatprep.subr.mxu0 0.0
    %574 = vmatpush2.xpose.msra.mxu0 0.0
    %575 = vmatprep.subr.mxu0 0.0
    %576 = vmatpush2.xpose.msra.mxu0 0.0
    %577 = vmatprep.subr.mxu0 0.0
    %578 = vmatpush2.xpose.msra.mxu0 0.0
    %579 = vmatprep.subr.mxu0 0.0
    %580 = vmatpush2.xpose.msra.mxu0 0.0
    %581 = vmatprep.subr.mxu0 0.0
    %582 = vmatpush2.xpose.msra.mxu0 0.0
    %583 = vmatprep.subr.mxu0 0.0
    %584 = vmatpush2.xpose.msra.mxu0 0.0
    %585 = vmatprep.subr.mxu0 0.0
    %586 = vmatpush2.xpose.msra.mxu0 0.0
    %587 = vmatprep.subr.mxu0 0.0
    %588 = vmatpush2.xpose.msra.mxu0 0.0
    %589 = vmatprep.subr.mxu0 0.0
    %590 = vmatpush2.xpose.msra.mxu0 0.0
    %591 = vmatprep.subr.mxu0 0.0
    %592 = vmatpush2.xpose.msra.mxu0 0.0
    %593 = vmatprep.subr.mxu0 0.0
    %594 = vmatpush2.xpose.msra.mxu0 0.0
    %595 = vmatprep.subr.mxu0 0.0
    %596 = vmatpush2.xpose.msra.mxu0 0.0
    %597 = vmatprep.subr.mxu0 0.0
    %598 = vmatpush2.xpose.msra.mxu0 0.0
    %599 = vmatprep.subr.mxu0 0.0
    %600 = vmatpush2.xpose.msra.mxu0 0.0
    %601 = vmatprep.mubr.f32.mxu0 0.0
    %602 = vmatmul.mubr.f32.gmra.mxu0 %v533
    %v603 = vpop.f32.mrf.mxu0
    %v604 = vadd.f32 0.0, %v603
    %v605 = vpop.f32.mrf.mxu0
    %606 = vdwg.mxu0
    %607 = vrot.lane.b32.xlu0 %v197, 120
    %v608 = vpop.permute.xlu0 %607
    %609 = vrot.lane.b32.xlu0 %v197, 88
    %v610 = vpop.permute.xlu0 %609
    %v611 = vsel %vm203, %v608, 0
    %v613 = vsel %vm203, %v610, 0
    %615 = vmatprep.subr.mxu0 0.0
    %616 = vmatpush1.xpose.msra.mxu0 0.0
    %617 = vmatprep.subr.mxu0 0.0
    %618 = vmatpush1.xpose.msra.mxu0 0.0
    %619 = vmatprep.subr.mxu0 0.0
    %620 = vmatpush1.xpose.msra.mxu0 0.0
    %621 = vmatprep.subr.mxu0 0.0
    %622 = vmatpush1.xpose.msra.mxu0 0.0
    %623 = vmatprep.subr.mxu0 0.0
    %624 = vmatpush1.xpose.msra.mxu0 0.0
    %625 = vmatprep.subr.mxu0 0.0
    %626 = vmatpush1.xpose.msra.mxu0 0.0
    %627 = vmatprep.subr.mxu0 0.0
    %628 = vmatpush1.xpose.msra.mxu0 0.0
    %629 = vmatprep.subr.mxu0 0.0
    %630 = vmatpush1.xpose.msra.mxu0 0.0
    %631 = vmatprep.subr.mxu0 0.0
    %632 = vmatpush1.xpose.msra.mxu0 0.0
    %633 = vmatprep.subr.mxu0 0.0
    %634 = vmatpush1.xpose.msra.mxu0 0.0
    %635 = vmatprep.subr.mxu0 0.0
    %636 = vmatpush1.xpose.msra.mxu0 0.0
    %637 = vmatprep.subr.mxu0 0.0
    %638 = vmatpush1.xpose.msra.mxu0 0.0
    %639 = vmatprep.subr.mxu0 0.0
    %640 = vmatpush1.xpose.msra.mxu0 0.0
    %641 = vmatprep.subr.mxu0 0.0
    %642 = vmatpush1.xpose.msra.mxu0 0.0
    %643 = vmatprep.subr.mxu0 0.0
    %644 = vmatpush1.xpose.msra.mxu0 0.0
    %645 = vmatprep.subr.mxu0 0.0
    %646 = vmatpush1.xpose.msra.mxu0 %v613
    %647 = vmatprep.subr.mxu0 0.0
    %648 = vmatpush2.xpose.msra.mxu0 0.0
    %649 = vmatprep.subr.mxu0 0.0
    %650 = vmatpush2.xpose.msra.mxu0 0.0
    %651 = vmatprep.subr.mxu0 0.0
    %652 = vmatpush2.xpose.msra.mxu0 0.0
    %653 = vmatprep.subr.mxu0 0.0
    %654 = vmatpush2.xpose.msra.mxu0 0.0
    %655 = vmatprep.subr.mxu0 0.0
    %656 = vmatpush2.xpose.msra.mxu0 0.0
    %657 = vmatprep.subr.mxu0 0.0
    %658 = vmatpush2.xpose.msra.mxu0 0.0
    %659 = vmatprep.subr.mxu0 0.0
    %660 = vmatpush2.xpose.msra.mxu0 0.0
    %661 = vmatprep.subr.mxu0 0.0
    %662 = vmatpush2.xpose.msra.mxu0 0.0
    %663 = vmatprep.subr.mxu0 0.0
    %664 = vmatpush2.xpose.msra.mxu0 0.0
    %665 = vmatprep.subr.mxu0 0.0
    %666 = vmatpush2.xpose.msra.mxu0 0.0
    %667 = vmatprep.subr.mxu0 0.0
    %668 = vmatpush2.xpose.msra.mxu0 0.0
    %669 = vmatprep.subr.mxu0 0.0
    %670 = vmatpush2.xpose.msra.mxu0 0.0
    %671 = vmatprep.subr.mxu0 0.0
    %672 = vmatpush2.xpose.msra.mxu0 0.0
    %673 = vmatprep.subr.mxu0 0.0
    %674 = vmatpush2.xpose.msra.mxu0 0.0
    %675 = vmatprep.subr.mxu0 0.0
    %676 = vmatpush2.xpose.msra.mxu0 0.0
    %677 = vmatprep.subr.mxu0 0.0
    %678 = vmatpush2.xpose.msra.mxu0 0.0
    %679 = vmatprep.mubr.f32.mxu0 0.0
    %680 = vmatmul.mubr.f32.gmra.mxu0 %v611
    %v681 = vpop.f32.mrf.mxu0
    %v682 = vadd.f32 0.0, %v681
    %v683 = vpop.f32.mrf.mxu0
    %684 = vdwg.mxu0
    %v685 = vsel %vm203, %v604, -inf
    %686 = vmax.xlane.f32.xlu0 %v685
    %v687 = vpop.xlane.xlu0 %686
    %v688 = vsel %vm203, %v682, -inf
    %689 = vmax.xlane.f32.xlu0 %v688
    %v690 = vpop.xlane.xlu0 %689
    %v691 = vsub.f32 %v604, %v687
    %v692 = vsub.f32 %v682, %v690
    %v693 = vmul.f32 %v691, 1.442695
    %v694 = vpow.pop %v693
    %v695 = vmul.f32 %v692, 1.442695
    %v696 = vpow.pop %v695
    %v697 = vsel %vm203, %v694, 0.0
    %698 = vadd.xlane.f32.xlu0 %v697
    %v699 = vpop.xlane.xlu0 %698
    %v700 = vsel %vm203, %v696, 0.0
    %701 = vadd.xlane.f32.xlu0 %v700
    %v702 = vpop.xlane.xlu0 %701
    %v703 = vrcp.pop %v699
    %v704 = vrcp.pop %v702
    %v705 = vmul.f32 %v694, %v703
    %v706 = vmul.f32 %v696, %v704
    %707 = vrot.lane.b32.xlu0 %v192, 56
    %v708 = vpop.permute.xlu0 %707
    %v711 = vsel %vm203, %v705, 0
    %713 = vmatprep.subr.mxu0 0.0
    %714 = vmatpush1.msra.mxu0 0.0
    %715 = vmatprep.subr.mxu0 0.0
    %716 = vmatpush1.msra.mxu0 0.0
    %717 = vmatprep.subr.mxu0 0.0
    %718 = vmatpush1.msra.mxu0 0.0
    %719 = vmatprep.subr.mxu0 0.0
    %720 = vmatpush1.msra.mxu0 0.0
    %721 = vmatprep.subr.mxu0 0.0
    %722 = vmatpush1.msra.mxu0 0.0
    %723 = vmatprep.subr.mxu0 0.0
    %724 = vmatpush1.msra.mxu0 0.0
    %725 = vmatprep.subr.mxu0 0.0
    %726 = vmatpush1.msra.mxu0 0.0
    %727 = vmatprep.subr.mxu0 0.0
    %728 = vmatpush1.msra.mxu0 0.0
    %729 = vmatprep.subr.mxu0 0.0
    %730 = vmatpush1.msra.mxu0 0.0
    %731 = vmatprep.subr.mxu0 0.0
    %732 = vmatpush1.msra.mxu0 0.0
    %733 = vmatprep.subr.mxu0 0.0
    %734 = vmatpush1.msra.mxu0 0.0
    %735 = vmatprep.subr.mxu0 0.0
    %736 = vmatpush1.msra.mxu0 0.0
    %737 = vmatprep.subr.mxu0 0.0
    %738 = vmatpush1.msra.mxu0 0.0
    %739 = vmatprep.subr.mxu0 0.0
    %740 = vmatpush1.msra.mxu0 0.0
    %741 = vmatprep.subr.mxu0 0.0
    %742 = vmatpush1.msra.mxu0 0.0
    %743 = vmatprep.subr.mxu0 0.0
    %744 = vmatpush1.msra.mxu0 %v708
    %745 = vmatprep.subr.mxu0 0.0
    %746 = vmatpush2.msra.mxu0 0.0
    %747 = vmatprep.subr.mxu0 0.0
    %748 = vmatpush2.msra.mxu0 0.0
    %749 = vmatprep.subr.mxu0 0.0
    %750 = vmatpush2.msra.mxu0 0.0
    %751 = vmatprep.subr.mxu0 0.0
    %752 = vmatpush2.msra.mxu0 0.0
    %753 = vmatprep.subr.mxu0 0.0
    %754 = vmatpush2.msra.mxu0 0.0
    %755 = vmatprep.subr.mxu0 0.0
    %756 = vmatpush2.msra.mxu0 0.0
    %757 = vmatprep.subr.mxu0 0.0
    %758 = vmatpush2.msra.mxu0 0.0
    %759 = vmatprep.subr.mxu0 0.0
    %760 = vmatpush2.msra.mxu0 0.0
    %761 = vmatprep.subr.mxu0 0.0
    %762 = vmatpush2.msra.mxu0 0.0
    %763 = vmatprep.subr.mxu0 0.0
    %764 = vmatpush2.msra.mxu0 0.0
    %765 = vmatprep.subr.mxu0 0.0
    %766 = vmatpush2.msra.mxu0 0.0
    %767 = vmatprep.subr.mxu0 0.0
    %768 = vmatpush2.msra.mxu0 0.0
    %769 = vmatprep.subr.mxu0 0.0
    %770 = vmatpush2.msra.mxu0 0.0
    %771 = vmatprep.subr.mxu0 0.0
    %772 = vmatpush2.msra.mxu0 0.0
    %773 = vmatprep.subr.mxu0 0.0
    %774 = vmatpush2.msra.mxu0 0.0
    %775 = vmatprep.subr.mxu0 0.0
    %776 = vmatpush2.msra.mxu0 0.0
    %777 = vmatprep.mubr.f32.mxu0 0.0
    %778 = vmatmul.mubr.f32.gmra.mxu0 %v711
    %v779 = vpop.f32.mrf.mxu0
    %v780 = vadd.f32 0.0, %v779
    %v781 = vpop.f32.mrf.mxu0
    %782 = vdwg.mxu0
    %783 = vrot.lane.b32.xlu0 %v197, 56
    %v784 = vpop.permute.xlu0 %783
    %v787 = vsel %vm203, %v706, 0
    %789 = vmatprep.subr.mxu0 0.0
    %790 = vmatpush1.msra.mxu0 0.0
    %791 = vmatprep.subr.mxu0 0.0
    %792 = vmatpush1.msra.mxu0 0.0
    %793 = vmatprep.subr.mxu0 0.0
    %794 = vmatpush1.msra.mxu0 0.0
    %795 = vmatprep.subr.mxu0 0.0
    %796 = vmatpush1.msra.mxu0 0.0
    %797 = vmatprep.subr.mxu0 0.0
    %798 = vmatpush1.msra.mxu0 0.0
    %799 = vmatprep.subr.mxu0 0.0
    %800 = vmatpush1.msra.mxu0 0.0
    %801 = vmatprep.subr.mxu0 0.0
    %802 = vmatpush1.msra.mxu0 0.0
    %803 = vmatprep.subr.mxu0 0.0
    %804 = vmatpush1.msra.mxu0 0.0
    %805 = vmatprep.subr.mxu0 0.0
    %806 = vmatpush1.msra.mxu0 0.0
    %807 = vmatprep.subr.mxu0 0.0
    %808 = vmatpush1.msra.mxu0 0.0
    %809 = vmatprep.subr.mxu0 0.0
    %810 = vmatpush1.msra.mxu0 0.0
    %811 = vmatprep.subr.mxu0 0.0
    %812 = vmatpush1.msra.mxu0 0.0
    %813 = vmatprep.subr.mxu0 0.0
    %814 = vmatpush1.msra.mxu0 0.0
    %815 = vmatprep.subr.mxu0 0.0
    %816 = vmatpush1.msra.mxu0 0.0
    %817 = vmatprep.subr.mxu0 0.0
    %818 = vmatpush1.msra.mxu0 0.0
    %819 = vmatprep.subr.mxu0 0.0
    %820 = vmatpush1.msra.mxu0 %v784
    %821 = vmatprep.subr.mxu0 0.0
    %822 = vmatpush2.msra.mxu0 0.0
    %823 = vmatprep.subr.mxu0 0.0
    %824 = vmatpush2.msra.mxu0 0.0
    %825 = vmatprep.subr.mxu0 0.0
    %826 = vmatpush2.msra.mxu0 0.0
    %827 = vmatprep.subr.mxu0 0.0
    %828 = vmatpush2.msra.mxu0 0.0
    %829 = vmatprep.subr.mxu0 0.0
    %830 = vmatpush2.msra.mxu0 0.0
    %831 = vmatprep.subr.mxu0 0.0
    %832 = vmatpush2.msra.mxu0 0.0
    %833 = vmatprep.subr.mxu0 0.0
    %834 = vmatpush2.msra.mxu0 0.0
    %835 = vmatprep.subr.mxu0 0.0
    %836 = vmatpush2.msra.mxu0 0.0
    %837 = vmatprep.subr.mxu0 0.0
    %838 = vmatpush2.msra.mxu0 0.0
    %839 = vmatprep.subr.mxu0 0.0
    %840 = vmatpush2.msra.mxu0 0.0
    %841 = vmatprep.subr.mxu0 0.0
    %842 = vmatpush2.msra.mxu0 0.0
    %843 = vmatprep.subr.mxu0 0.0
    %844 = vmatpush2.msra.mxu0 0.0
    %845 = vmatprep.subr.mxu0 0.0
    %846 = vmatpush2.msra.mxu0 0.0
    %847 = vmatprep.subr.mxu0 0.0
    %848 = vmatpush2.msra.mxu0 0.0
    %849 = vmatprep.subr.mxu0 0.0
    %850 = vmatpush2.msra.mxu0 0.0
    %851 = vmatprep.subr.mxu0 0.0
    %852 = vmatpush2.msra.mxu0 0.0
    %853 = vmatprep.mubr.f32.mxu0 0.0
    %854 = vmatmul.mubr.f32.gmra.mxu0 %v787
    %v855 = vpop.f32.mrf.mxu0
    %v856 = vadd.f32 0.0, %v855
    %v857 = vpop.f32.mrf.mxu0
    %858 = vdwg.mxu0
    %859 = vrot.lane.b32.xlu0 %v192, 112
    %v860 = vpop.permute.xlu0 %859
    %861 = vrot.lane.b32.xlu0 %v192, 80
    %v862 = vpop.permute.xlu0 %861
    %v863 = vsel %vm203, %v860, 0
    %v865 = vsel %vm203, %v862, 0
    %867 = vmatprep.subr.mxu0 0.0
    %868 = vmatpush1.xpose.msra.mxu0 0.0
    %869 = vmatprep.subr.mxu0 0.0
    %870 = vmatpush1.xpose.msra.mxu0 0.0
    %871 = vmatprep.subr.mxu0 0.0
    %872 = vmatpush1.xpose.msra.mxu0 0.0
    %873 = vmatprep.subr.mxu0 0.0
    %874 = vmatpush1.xpose.msra.mxu0 0.0
    %875 = vmatprep.subr.mxu0 0.0
    %876 = vmatpush1.xpose.msra.mxu0 0.0
    %877 = vmatprep.subr.mxu0 0.0
    %878 = vmatpush1.xpose.msra.mxu0 0.0
    %879 = vmatprep.subr.mxu0 0.0
    %880 = vmatpush1.xpose.msra.mxu0 0.0
    %881 = vmatprep.subr.mxu0 0.0
    %882 = vmatpush1.xpose.msra.mxu0 0.0
    %883 = vmatprep.subr.mxu0 0.0
    %884 = vmatpush1.xpose.msra.mxu0 0.0
    %885 = vmatprep.subr.mxu0 0.0
    %886 = vmatpush1.xpose.msra.mxu0 0.0
    %887 = vmatprep.subr.mxu0 0.0
    %888 = vmatpush1.xpose.msra.mxu0 0.0
    %889 = vmatprep.subr.mxu0 0.0
    %890 = vmatpush1.xpose.msra.mxu0 0.0
    %891 = vmatprep.subr.mxu0 0.0
    %892 = vmatpush1.xpose.msra.mxu0 0.0
    %893 = vmatprep.subr.mxu0 0.0
    %894 = vmatpush1.xpose.msra.mxu0 0.0
    %895 = vmatprep.subr.mxu0 0.0
    %896 = vmatpush1.xpose.msra.mxu0 0.0
    %897 = vmatprep.subr.mxu0 0.0
    %898 = vmatpush1.xpose.msra.mxu0 %v865
    %899 = vmatprep.subr.mxu0 0.0
    %900 = vmatpush2.xpose.msra.mxu0 0.0
    %901 = vmatprep.subr.mxu0 0.0
    %902 = vmatpush2.xpose.msra.mxu0 0.0
    %903 = vmatprep.subr.mxu0 0.0
    %904 = vmatpush2.xpose.msra.mxu0 0.0
    %905 = vmatprep.subr.mxu0 0.0
    %906 = vmatpush2.xpose.msra.mxu0 0.0
    %907 = vmatprep.subr.mxu0 0.0
    %908 = vmatpush2.xpose.msra.mxu0 0.0
    %909 = vmatprep.subr.mxu0 0.0
    %910 = vmatpush2.xpose.msra.mxu0 0.0
    %911 = vmatprep.subr.mxu0 0.0
    %912 = vmatpush2.xpose.msra.mxu0 0.0
    %913 = vmatprep.subr.mxu0 0.0
    %914 = vmatpush2.xpose.msra.mxu0 0.0
    %915 = vmatprep.subr.mxu0 0.0
    %916 = vmatpush2.xpose.msra.mxu0 0.0
    %917 = vmatprep.subr.mxu0 0.0
    %918 = vmatpush2.xpose.msra.mxu0 0.0
    %919 = vmatprep.subr.mxu0 0.0
    %920 = vmatpush2.xpose.msra.mxu0 0.0
    %921 = vmatprep.subr.mxu0 0.0
    %922 = vmatpush2.xpose.msra.mxu0 0.0
    %923 = vmatprep.subr.mxu0 0.0
    %924 = vmatpush2.xpose.msra.mxu0 0.0
    %925 = vmatprep.subr.mxu0 0.0
    %926 = vmatpush2.xpose.msra.mxu0 0.0
    %927 = vmatprep.subr.mxu0 0.0
    %928 = vmatpush2.xpose.msra.mxu0 0.0
    %929 = vmatprep.subr.mxu0 0.0
    %930 = vmatpush2.xpose.msra.mxu0 0.0
    %931 = vmatprep.mubr.f32.mxu0 0.0
    %932 = vmatmul.mubr.f32.gmra.mxu0 %v863
    %v933 = vpop.f32.mrf.mxu0
    %v934 = vadd.f32 0.0, %v933
    %v935 = vpop.f32.mrf.mxu0
    %936 = vdwg.mxu0
    %937 = vrot.lane.b32.xlu0 %v197, 112
    %v938 = vpop.permute.xlu0 %937
    %939 = vrot.lane.b32.xlu0 %v197, 80
    %v940 = vpop.permute.xlu0 %939
    %v941 = vsel %vm203, %v938, 0
    %v943 = vsel %vm203, %v940, 0
    %945 = vmatprep.subr.mxu0 0.0
    %946 = vmatpush1.xpose.msra.mxu0 0.0
    %947 = vmatprep.subr.mxu0 0.0
    %948 = vmatpush1.xpose.msra.mxu0 0.0
    %949 = vmatprep.subr.mxu0 0.0
    %950 = vmatpush1.xpose.msra.mxu0 0.0
    %951 = vmatprep.subr.mxu0 0.0
    %952 = vmatpush1.xpose.msra.mxu0 0.0
    %953 = vmatprep.subr.mxu0 0.0
    %954 = vmatpush1.xpose.msra.mxu0 0.0
    %955 = vmatprep.subr.mxu0 0.0
    %956 = vmatpush1.xpose.msra.mxu0 0.0
    %957 = vmatprep.subr.mxu0 0.0
    %958 = vmatpush1.xpose.msra.mxu0 0.0
    %959 = vmatprep.subr.mxu0 0.0
    %960 = vmatpush1.xpose.msra.mxu0 0.0
    %961 = vmatprep.subr.mxu0 0.0
    %962 = vmatpush1.xpose.msra.mxu0 0.0
    %963 = vmatprep.subr.mxu0 0.0
    %964 = vmatpush1.xpose.msra.mxu0 0.0
    %965 = vmatprep.subr.mxu0 0.0
    %966 = vmatpush1.xpose.msra.mxu0 0.0
    %967 = vmatprep.subr.mxu0 0.0
    %968 = vmatpush1.xpose.msra.mxu0 0.0
    %969 = vmatprep.subr.mxu0 0.0
    %970 = vmatpush1.xpose.msra.mxu0 0.0
    %971 = vmatprep.subr.mxu0 0.0
    %972 = vmatpush1.xpose.msra.mxu0 0.0
    %973 = vmatprep.subr.mxu0 0.0
    %974 = vmatpush1.xpose.msra.mxu0 0.0
    %975 = vmatprep.subr.mxu0 0.0
    %976 = vmatpush1.xpose.msra.mxu0 %v943
    %977 = vmatprep.subr.mxu0 0.0
    %978 = vmatpush2.xpose.msra.mxu0 0.0
    %979 = vmatprep.subr.mxu0 0.0
    %980 = vmatpush2.xpose.msra.mxu0 0.0
    %981 = vmatprep.subr.mxu0 0.0
    %982 = vmatpush2.xpose.msra.mxu0 0.0
    %983 = vmatprep.subr.mxu0 0.0
    %984 = vmatpush2.xpose.msra.mxu0 0.0
    %985 = vmatprep.subr.mxu0 0.0
    %986 = vmatpush2.xpose.msra.mxu0 0.0
    %987 = vmatprep.subr.mxu0 0.0
    %988 = vmatpush2.xpose.msra.mxu0 0.0
    %989 = vmatprep.subr.mxu0 0.0
    %990 = vmatpush2.xpose.msra.mxu0 0.0
    %991 = vmatprep.subr.mxu0 0.0
    %992 = vmatpush2.xpose.msra.mxu0 0.0
    %993 = vmatprep.subr.mxu0 0.0
    %994 = vmatpush2.xpose.msra.mxu0 0.0
    %995 = vmatprep.subr.mxu0 0.0
    %996 = vmatpush2.xpose.msra.mxu0 0.0
    %997 = vmatprep.subr.mxu0 0.0
    %998 = vmatpush2.xpose.msra.mxu0 0.0
    %999 = vmatprep.subr.mxu0 0.0
    %1000 = vmatpush2.xpose.msra.mxu0 0.0
    %1001 = vmatprep.subr.mxu0 0.0
    %1002 = vmatpush2.xpose.msra.mxu0 0.0
    %1003 = vmatprep.subr.mxu0 0.0
    %1004 = vmatpush2.xpose.msra.mxu0 0.0
    %1005 = vmatprep.subr.mxu0 0.0
    %1006 = vmatpush2.xpose.msra.mxu0 0.0
    %1007 = vmatprep.subr.mxu0 0.0
    %1008 = vmatpush2.xpose.msra.mxu0 0.0
    %1009 = vmatprep.mubr.f32.mxu0 0.0
    %1010 = vmatmul.mubr.f32.gmra.mxu0 %v941
    %v1011 = vpop.f32.mrf.mxu0
    %v1012 = vadd.f32 0.0, %v1011
    %v1013 = vpop.f32.mrf.mxu0
    %1014 = vdwg.mxu0
    %v1015 = vsel %vm203, %v934, -inf
    %1016 = vmax.xlane.f32.xlu0 %v1015
    %v1017 = vpop.xlane.xlu0 %1016
    %v1018 = vsel %vm203, %v1012, -inf
    %1019 = vmax.xlane.f32.xlu0 %v1018
    %v1020 = vpop.xlane.xlu0 %1019
    %v1021 = vsub.f32 %v934, %v1017
    %v1022 = vsub.f32 %v1012, %v1020
    %v1023 = vmul.f32 %v1021, 1.442695
    %v1024 = vpow.pop %v1023
    %v1025 = vmul.f32 %v1022, 1.442695
    %v1026 = vpow.pop %v1025
    %v1027 = vsel %vm203, %v1024, 0.0
    %1028 = vadd.xlane.f32.xlu0 %v1027
    %v1029 = vpop.xlane.xlu0 %1028
    %v1030 = vsel %vm203, %v1026, 0.0
    %1031 = vadd.xlane.f32.xlu0 %v1030
    %v1032 = vpop.xlane.xlu0 %1031
    %v1033 = vrcp.pop %v1029
    %v1034 = vrcp.pop %v1032
    %v1035 = vmul.f32 %v1024, %v1033
    %v1036 = vmul.f32 %v1026, %v1034
    %1037 = vrot.lane.b32.xlu0 %v192, 48
    %v1038 = vpop.permute.xlu0 %1037
    %v1041 = vsel %vm203, %v1035, 0
    %1043 = vmatprep.subr.mxu0 0.0
    %1044 = vmatpush1.msra.mxu0 0.0
    %1045 = vmatprep.subr.mxu0 0.0
    %1046 = vmatpush1.msra.mxu0 0.0
    %1047 = vmatprep.subr.mxu0 0.0
    %1048 = vmatpush1.msra.mxu0 0.0
    %1049 = vmatprep.subr.mxu0 0.0
    %1050 = vmatpush1.msra.mxu0 0.0
    %1051 = vmatprep.subr.mxu0 0.0
    %1052 = vmatpush1.msra.mxu0 0.0
    %1053 = vmatprep.subr.mxu0 0.0
    %1054 = vmatpush1.msra.mxu0 0.0
    %1055 = vmatprep.subr.mxu0 0.0
    %1056 = vmatpush1.msra.mxu0 0.0
    %1057 = vmatprep.subr.mxu0 0.0
    %1058 = vmatpush1.msra.mxu0 0.0
    %1059 = vmatprep.subr.mxu0 0.0
    %1060 = vmatpush1.msra.mxu0 0.0
    %1061 = vmatprep.subr.mxu0 0.0
    %1062 = vmatpush1.msra.mxu0 0.0
    %1063 = vmatprep.subr.mxu0 0.0
    %1064 = vmatpush1.msra.mxu0 0.0
    %1065 = vmatprep.subr.mxu0 0.0
    %1066 = vmatpush1.msra.mxu0 0.0
    %1067 = vmatprep.subr.mxu0 0.0
    %1068 = vmatpush1.msra.mxu0 0.0
    %1069 = vmatprep.subr.mxu0 0.0
    %1070 = vmatpush1.msra.mxu0 0.0
    %1071 = vmatprep.subr.mxu0 0.0
    %1072 = vmatpush1.msra.mxu0 0.0
    %1073 = vmatprep.subr.mxu0 0.0
    %1074 = vmatpush1.msra.mxu0 %v1038
    %1075 = vmatprep.subr.mxu0 0.0
    %1076 = vmatpush2.msra.mxu0 0.0
    %1077 = vmatprep.subr.mxu0 0.0
    %1078 = vmatpush2.msra.mxu0 0.0
    %1079 = vmatprep.subr.mxu0 0.0
    %1080 = vmatpush2.msra.mxu0 0.0
    %1081 = vmatprep.subr.mxu0 0.0
    %1082 = vmatpush2.msra.mxu0 0.0
    %1083 = vmatprep.subr.mxu0 0.0
    %1084 = vmatpush2.msra.mxu0 0.0
    %1085 = vmatprep.subr.mxu0 0.0
    %1086 = vmatpush2.msra.mxu0 0.0
    %1087 = vmatprep.subr.mxu0 0.0
    %1088 = vmatpush2.msra.mxu0 0.0
    %1089 = vmatprep.subr.mxu0 0.0
    %1090 = vmatpush2.msra.mxu0 0.0
    %1091 = vmatprep.subr.mxu0 0.0
    %1092 = vmatpush2.msra.mxu0 0.0
    %1093 = vmatprep.subr.mxu0 0.0
    %1094 = vmatpush2.msra.mxu0 0.0
    %1095 = vmatprep.subr.mxu0 0.0
    %1096 = vmatpush2.msra.mxu0 0.0
    %1097 = vmatprep.subr.mxu0 0.0
    %1098 = vmatpush2.msra.mxu0 0.0
    %1099 = vmatprep.subr.mxu0 0.0
    %1100 = vmatpush2.msra.mxu0 0.0
    %1101 = vmatprep.subr.mxu0 0.0
    %1102 = vmatpush2.msra.mxu0 0.0
    %1103 = vmatprep.subr.mxu0 0.0
    %1104 = vmatpush2.msra.mxu0 0.0
    %1105 = vmatprep.subr.mxu0 0.0
    %1106 = vmatpush2.msra.mxu0 0.0
    %1107 = vmatprep.mubr.f32.mxu0 0.0
    %1108 = vmatmul.mubr.f32.gmra.mxu0 %v1041
    %v1109 = vpop.f32.mrf.mxu0
    %v1110 = vadd.f32 0.0, %v1109
    %v1111 = vpop.f32.mrf.mxu0
    %1112 = vdwg.mxu0
    %1113 = vrot.lane.b32.xlu0 %v197, 48
    %v1114 = vpop.permute.xlu0 %1113
    %v1117 = vsel %vm203, %v1036, 0
    %1119 = vmatprep.subr.mxu0 0.0
    %1120 = vmatpush1.msra.mxu0 0.0
    %1121 = vmatprep.subr.mxu0 0.0
    %1122 = vmatpush1.msra.mxu0 0.0
    %1123 = vmatprep.subr.mxu0 0.0
    %1124 = vmatpush1.msra.mxu0 0.0
    %1125 = vmatprep.subr.mxu0 0.0
    %1126 = vmatpush1.msra.mxu0 0.0
    %1127 = vmatprep.subr.mxu0 0.0
    %1128 = vmatpush1.msra.mxu0 0.0
    %1129 = vmatprep.subr.mxu0 0.0
    %1130 = vmatpush1.msra.mxu0 0.0
    %1131 = vmatprep.subr.mxu0 0.0
    %1132 = vmatpush1.msra.mxu0 0.0
    %1133 = vmatprep.subr.mxu0 0.0
    %1134 = vmatpush1.msra.mxu0 0.0
    %1135 = vmatprep.subr.mxu0 0.0
    %1136 = vmatpush1.msra.mxu0 0.0
    %1137 = vmatprep.subr.mxu0 0.0
    %1138 = vmatpush1.msra.mxu0 0.0
    %1139 = vmatprep.subr.mxu0 0.0
    %1140 = vmatpush1.msra.mxu0 0.0
    %1141 = vmatprep.subr.mxu0 0.0
    %1142 = vmatpush1.msra.mxu0 0.0
    %1143 = vmatprep.subr.mxu0 0.0
    %1144 = vmatpush1.msra.mxu0 0.0
    %1145 = vmatprep.subr.mxu0 0.0
    %1146 = vmatpush1.msra.mxu0 0.0
    %1147 = vmatprep.subr.mxu0 0.0
    %1148 = vmatpush1.msra.mxu0 0.0
    %1149 = vmatprep.subr.mxu0 0.0
    %1150 = vmatpush1.msra.mxu0 %v1114
    %1151 = vmatprep.subr.mxu0 0.0
    %1152 = vmatpush2.msra.mxu0 0.0
    %1153 = vmatprep.subr.mxu0 0.0
    %1154 = vmatpush2.msra.mxu0 0.0
    %1155 = vmatprep.subr.mxu0 0.0
    %1156 = vmatpush2.msra.mxu0 0.0
    %1157 = vmatprep.subr.mxu0 0.0
    %1158 = vmatpush2.msra.mxu0 0.0
    %1159 = vmatprep.subr.mxu0 0.0
    %1160 = vmatpush2.msra.mxu0 0.0
    %1161 = vmatprep.subr.mxu0 0.0
    %1162 = vmatpush2.msra.mxu0 0.0
    %1163 = vmatprep.subr.mxu0 0.0
    %1164 = vmatpush2.msra.mxu0 0.0
    %1165 = vmatprep.subr.mxu0 0.0
    %1166 = vmatpush2.msra.mxu0 0.0
    %1167 = vmatprep.subr.mxu0 0.0
    %1168 = vmatpush2.msra.mxu0 0.0
    %1169 = vmatprep.subr.mxu0 0.0
    %1170 = vmatpush2.msra.mxu0 0.0
    %1171 = vmatprep.subr.mxu0 0.0
    %1172 = vmatpush2.msra.mxu0 0.0
    %1173 = vmatprep.subr.mxu0 0.0
    %1174 = vmatpush2.msra.mxu0 0.0
    %1175 = vmatprep.subr.mxu0 0.0
    %1176 = vmatpush2.msra.mxu0 0.0
    %1177 = vmatprep.subr.mxu0 0.0
    %1178 = vmatpush2.msra.mxu0 0.0
    %1179 = vmatprep.subr.mxu0 0.0
    %1180 = vmatpush2.msra.mxu0 0.0
    %1181 = vmatprep.subr.mxu0 0.0
    %1182 = vmatpush2.msra.mxu0 0.0
    %1183 = vmatprep.mubr.f32.mxu0 0.0
    %1184 = vmatmul.mubr.f32.gmra.mxu0 %v1117
    %v1185 = vpop.f32.mrf.mxu0
    %v1186 = vadd.f32 0.0, %v1185
    %v1187 = vpop.f32.mrf.mxu0
    %1188 = vdwg.mxu0
    %1189 = vrot.lane.b32.xlu0 %v192, 104
    %v1190 = vpop.permute.xlu0 %1189
    %1191 = vrot.lane.b32.xlu0 %v192, 72
    %v1192 = vpop.permute.xlu0 %1191
    %v1193 = vsel %vm203, %v1190, 0
    %v1195 = vsel %vm203, %v1192, 0
    %1197 = vmatprep.subr.mxu0 0.0
    %1198 = vmatpush1.xpose.msra.mxu0 0.0
    %1199 = vmatprep.subr.mxu0 0.0
    %1200 = vmatpush1.xpose.msra.mxu0 0.0
    %1201 = vmatprep.subr.mxu0 0.0
    %1202 = vmatpush1.xpose.msra.mxu0 0.0
    %1203 = vmatprep.subr.mxu0 0.0
    %1204 = vmatpush1.xpose.msra.mxu0 0.0
    %1205 = vmatprep.subr.mxu0 0.0
    %1206 = vmatpush1.xpose.msra.mxu0 0.0
    %1207 = vmatprep.subr.mxu0 0.0
    %1208 = vmatpush1.xpose.msra.mxu0 0.0
    %1209 = vmatprep.subr.mxu0 0.0
    %1210 = vmatpush1.xpose.msra.mxu0 0.0
    %1211 = vmatprep.subr.mxu0 0.0
    %1212 = vmatpush1.xpose.msra.mxu0 0.0
    %1213 = vmatprep.subr.mxu0 0.0
    %1214 = vmatpush1.xpose.msra.mxu0 0.0
    %1215 = vmatprep.subr.mxu0 0.0
    %1216 = vmatpush1.xpose.msra.mxu0 0.0
    %1217 = vmatprep.subr.mxu0 0.0
    %1218 = vmatpush1.xpose.msra.mxu0 0.0
    %1219 = vmatprep.subr.mxu0 0.0
    %1220 = vmatpush1.xpose.msra.mxu0 0.0
    %1221 = vmatprep.subr.mxu0 0.0
    %1222 = vmatpush1.xpose.msra.mxu0 0.0
    %1223 = vmatprep.subr.mxu0 0.0
    %1224 = vmatpush1.xpose.msra.mxu0 0.0
    %1225 = vmatprep.subr.mxu0 0.0
    %1226 = vmatpush1.xpose.msra.mxu0 0.0
    %1227 = vmatprep.subr.mxu0 0.0
    %1228 = vmatpush1.xpose.msra.mxu0 %v1195
    %1229 = vmatprep.subr.mxu0 0.0
    %1230 = vmatpush2.xpose.msra.mxu0 0.0
    %1231 = vmatprep.subr.mxu0 0.0
    %1232 = vmatpush2.xpose.msra.mxu0 0.0
    %1233 = vmatprep.subr.mxu0 0.0
    %1234 = vmatpush2.xpose.msra.mxu0 0.0
    %1235 = vmatprep.subr.mxu0 0.0
    %1236 = vmatpush2.xpose.msra.mxu0 0.0
    %1237 = vmatprep.subr.mxu0 0.0
    %1238 = vmatpush2.xpose.msra.mxu0 0.0
    %1239 = vmatprep.subr.mxu0 0.0
    %1240 = vmatpush2.xpose.msra.mxu0 0.0
    %1241 = vmatprep.subr.mxu0 0.0
    %1242 = vmatpush2.xpose.msra.mxu0 0.0
    %1243 = vmatprep.subr.mxu0 0.0
    %1244 = vmatpush2.xpose.msra.mxu0 0.0
    %1245 = vmatprep.subr.mxu0 0.0
    %1246 = vmatpush2.xpose.msra.mxu0 0.0
    %1247 = vmatprep.subr.mxu0 0.0
    %1248 = vmatpush2.xpose.msra.mxu0 0.0
    %1249 = vmatprep.subr.mxu0 0.0
    %1250 = vmatpush2.xpose.msra.mxu0 0.0
    %1251 = vmatprep.subr.mxu0 0.0
    %1252 = vmatpush2.xpose.msra.mxu0 0.0
    %1253 = vmatprep.subr.mxu0 0.0
    %1254 = vmatpush2.xpose.msra.mxu0 0.0
    %1255 = vmatprep.subr.mxu0 0.0
    %1256 = vmatpush2.xpose.msra.mxu0 0.0
    %1257 = vmatprep.subr.mxu0 0.0
    %1258 = vmatpush2.xpose.msra.mxu0 0.0
    %1259 = vmatprep.subr.mxu0 0.0
    %1260 = vmatpush2.xpose.msra.mxu0 0.0
    %1261 = vmatprep.mubr.f32.mxu0 0.0
    %1262 = vmatmul.mubr.f32.gmra.mxu0 %v1193
    %v1263 = vpop.f32.mrf.mxu0
    %v1264 = vadd.f32 0.0, %v1263
    %v1265 = vpop.f32.mrf.mxu0
    %1266 = vdwg.mxu0
    %1267 = vrot.lane.b32.xlu0 %v197, 104
    %v1268 = vpop.permute.xlu0 %1267
    %1269 = vrot.lane.b32.xlu0 %v197, 72
    %v1270 = vpop.permute.xlu0 %1269
    %v1271 = vsel %vm203, %v1268, 0
    %v1273 = vsel %vm203, %v1270, 0
    %1275 = vmatprep.subr.mxu0 0.0
    %1276 = vmatpush1.xpose.msra.mxu0 0.0
    %1277 = vmatprep.subr.mxu0 0.0
    %1278 = vmatpush1.xpose.msra.mxu0 0.0
    %1279 = vmatprep.subr.mxu0 0.0
    %1280 = vmatpush1.xpose.msra.mxu0 0.0
    %1281 = vmatprep.subr.mxu0 0.0
    %1282 = vmatpush1.xpose.msra.mxu0 0.0
    %1283 = vmatprep.subr.mxu0 0.0
    %1284 = vmatpush1.xpose.msra.mxu0 0.0
    %1285 = vmatprep.subr.mxu0 0.0
    %1286 = vmatpush1.xpose.msra.mxu0 0.0
    %1287 = vmatprep.subr.mxu0 0.0
    %1288 = vmatpush1.xpose.msra.mxu0 0.0
    %1289 = vmatprep.subr.mxu0 0.0
    %1290 = vmatpush1.xpose.msra.mxu0 0.0
    %1291 = vmatprep.subr.mxu0 0.0
    %1292 = vmatpush1.xpose.msra.mxu0 0.0
    %1293 = vmatprep.subr.mxu0 0.0
    %1294 = vmatpush1.xpose.msra.mxu0 0.0
    %1295 = vmatprep.subr.mxu0 0.0
    %1296 = vmatpush1.xpose.msra.mxu0 0.0
    %1297 = vmatprep.subr.mxu0 0.0
    %1298 = vmatpush1.xpose.msra.mxu0 0.0
    %1299 = vmatprep.subr.mxu0 0.0
    %1300 = vmatpush1.xpose.msra.mxu0 0.0
    %1301 = vmatprep.subr.mxu0 0.0
    %1302 = vmatpush1.xpose.msra.mxu0 0.0
    %1303 = vmatprep.subr.mxu0 0.0
    %1304 = vmatpush1.xpose.msra.mxu0 0.0
    %1305 = vmatprep.subr.mxu0 0.0
    %1306 = vmatpush1.xpose.msra.mxu0 %v1273
    %1307 = vmatprep.subr.mxu0 0.0
    %1308 = vmatpush2.xpose.msra.mxu0 0.0
    %1309 = vmatprep.subr.mxu0 0.0
    %1310 = vmatpush2.xpose.msra.mxu0 0.0
    %1311 = vmatprep.subr.mxu0 0.0
    %1312 = vmatpush2.xpose.msra.mxu0 0.0
    %1313 = vmatprep.subr.mxu0 0.0
    %1314 = vmatpush2.xpose.msra.mxu0 0.0
    %1315 = vmatprep.subr.mxu0 0.0
    %1316 = vmatpush2.xpose.msra.mxu0 0.0
    %1317 = vmatprep.subr.mxu0 0.0
    %1318 = vmatpush2.xpose.msra.mxu0 0.0
    %1319 = vmatprep.subr.mxu0 0.0
    %1320 = vmatpush2.xpose.msra.mxu0 0.0
    %1321 = vmatprep.subr.mxu0 0.0
    %1322 = vmatpush2.xpose.msra.mxu0 0.0
    %1323 = vmatprep.subr.mxu0 0.0
    %1324 = vmatpush2.xpose.msra.mxu0 0.0
    %1325 = vmatprep.subr.mxu0 0.0
    %1326 = vmatpush2.xpose.msra.mxu0 0.0
    %1327 = vmatprep.subr.mxu0 0.0
    %1328 = vmatpush2.xpose.msra.mxu0 0.0
    %1329 = vmatprep.subr.mxu0 0.0
    %1330 = vmatpush2.xpose.msra.mxu0 0.0
    %1331 = vmatprep.subr.mxu0 0.0
    %1332 = vmatpush2.xpose.msra.mxu0 0.0
    %1333 = vmatprep.subr.mxu0 0.0
    %1334 = vmatpush2.xpose.msra.mxu0 0.0
    %1335 = vmatprep.subr.mxu0 0.0
    %1336 = vmatpush2.xpose.msra.mxu0 0.0
    %1337 = vmatprep.subr.mxu0 0.0
    %1338 = vmatpush2.xpose.msra.mxu0 0.0
    %1339 = vmatprep.mubr.f32.mxu0 0.0
    %1340 = vmatmul.mubr.f32.gmra.mxu0 %v1271
    %v1341 = vpop.f32.mrf.mxu0
    %v1342 = vadd.f32 0.0, %v1341
    %v1343 = vpop.f32.mrf.mxu0
    %1344 = vdwg.mxu0
    %v1345 = vsel %vm203, %v1264, -inf
    %1346 = vmax.xlane.f32.xlu0 %v1345
    %v1347 = vpop.xlane.xlu0 %1346
    %v1348 = vsel %vm203, %v1342, -inf
    %1349 = vmax.xlane.f32.xlu0 %v1348
    %v1350 = vpop.xlane.xlu0 %1349
    %v1351 = vsub.f32 %v1264, %v1347
    %v1352 = vsub.f32 %v1342, %v1350
    %v1353 = vmul.f32 %v1351, 1.442695
    %v1354 = vpow.pop %v1353
    %v1355 = vmul.f32 %v1352, 1.442695
    %v1356 = vpow.pop %v1355
    %v1357 = vsel %vm203, %v1354, 0.0
    %1358 = vadd.xlane.f32.xlu0 %v1357
    %v1359 = vpop.xlane.xlu0 %1358
    %v1360 = vsel %vm203, %v1356, 0.0
    %1361 = vadd.xlane.f32.xlu0 %v1360
    %v1362 = vpop.xlane.xlu0 %1361
    %v1363 = vrcp.pop %v1359
    %v1364 = vrcp.pop %v1362
    %v1365 = vmul.f32 %v1354, %v1363
    %v1366 = vmul.f32 %v1356, %v1364
    %1367 = vrot.lane.b32.xlu0 %v192, 40
    %v1368 = vpop.permute.xlu0 %1367
    %v1371 = vsel %vm203, %v1365, 0
    %1373 = vmatprep.subr.mxu0 0.0
    %1374 = vmatpush1.msra.mxu0 0.0
    %1375 = vmatprep.subr.mxu0 0.0
    %1376 = vmatpush1.msra.mxu0 0.0
    %1377 = vmatprep.subr.mxu0 0.0
    %1378 = vmatpush1.msra.mxu0 0.0
    %1379 = vmatprep.subr.mxu0 0.0
    %1380 = vmatpush1.msra.mxu0 0.0
    %1381 = vmatprep.subr.mxu0 0.0
    %1382 = vmatpush1.msra.mxu0 0.0
    %1383 = vmatprep.subr.mxu0 0.0
    %1384 = vmatpush1.msra.mxu0 0.0
    %1385 = vmatprep.subr.mxu0 0.0
    %1386 = vmatpush1.msra.mxu0 0.0
    %1387 = vmatprep.subr.mxu0 0.0
    %1388 = vmatpush1.msra.mxu0 0.0
    %1389 = vmatprep.subr.mxu0 0.0
    %1390 = vmatpush1.msra.mxu0 0.0
    %1391 = vmatprep.subr.mxu0 0.0
    %1392 = vmatpush1.msra.mxu0 0.0
    %1393 = vmatprep.subr.mxu0 0.0
    %1394 = vmatpush1.msra.mxu0 0.0
    %1395 = vmatprep.subr.mxu0 0.0
    %1396 = vmatpush1.msra.mxu0 0.0
    %1397 = vmatprep.subr.mxu0 0.0
    %1398 = vmatpush1.msra.mxu0 0.0
    %1399 = vmatprep.subr.mxu0 0.0
    %1400 = vmatpush1.msra.mxu0 0.0
    %1401 = vmatprep.subr.mxu0 0.0
    %1402 = vmatpush1.msra.mxu0 0.0
    %1403 = vmatprep.subr.mxu0 0.0
    %1404 = vmatpush1.msra.mxu0 %v1368
    %1405 = vmatprep.subr.mxu0 0.0
    %1406 = vmatpush2.msra.mxu0 0.0
    %1407 = vmatprep.subr.mxu0 0.0
    %1408 = vmatpush2.msra.mxu0 0.0
    %1409 = vmatprep.subr.mxu0 0.0
    %1410 = vmatpush2.msra.mxu0 0.0
    %1411 = vmatprep.subr.mxu0 0.0
    %1412 = vmatpush2.msra.mxu0 0.0
    %1413 = vmatprep.subr.mxu0 0.0
    %1414 = vmatpush2.msra.mxu0 0.0
    %1415 = vmatprep.subr.mxu0 0.0
    %1416 = vmatpush2.msra.mxu0 0.0
    %1417 = vmatprep.subr.mxu0 0.0
    %1418 = vmatpush2.msra.mxu0 0.0
    %1419 = vmatprep.subr.mxu0 0.0
    %1420 = vmatpush2.msra.mxu0 0.0
    %1421 = vmatprep.subr.mxu0 0.0
    %1422 = vmatpush2.msra.mxu0 0.0
    %1423 = vmatprep.subr.mxu0 0.0
    %1424 = vmatpush2.msra.mxu0 0.0
    %1425 = vmatprep.subr.mxu0 0.0
    %1426 = vmatpush2.msra.mxu0 0.0
    %1427 = vmatprep.subr.mxu0 0.0
    %1428 = vmatpush2.msra.mxu0 0.0
    %1429 = vmatprep.subr.mxu0 0.0
    %1430 = vmatpush2.msra.mxu0 0.0
    %1431 = vmatprep.subr.mxu0 0.0
    %1432 = vmatpush2.msra.mxu0 0.0
    %1433 = vmatprep.subr.mxu0 0.0
    %1434 = vmatpush2.msra.mxu0 0.0
    %1435 = vmatprep.subr.mxu0 0.0
    %1436 = vmatpush2.msra.mxu0 0.0
    %1437 = vmatprep.mubr.f32.mxu0 0.0
    %1438 = vmatmul.mubr.f32.gmra.mxu0 %v1371
    %v1439 = vpop.f32.mrf.mxu0
    %v1440 = vadd.f32 0.0, %v1439
    %v1441 = vpop.f32.mrf.mxu0
    %1442 = vdwg.mxu0
    %1443 = vrot.lane.b32.xlu0 %v197, 40
    %v1444 = vpop.permute.xlu0 %1443
    %v1447 = vsel %vm203, %v1366, 0
    %1449 = vmatprep.subr.mxu0 0.0
    %1450 = vmatpush1.msra.mxu0 0.0
    %1451 = vmatprep.subr.mxu0 0.0
    %1452 = vmatpush1.msra.mxu0 0.0
    %1453 = vmatprep.subr.mxu0 0.0
    %1454 = vmatpush1.msra.mxu0 0.0
    %1455 = vmatprep.subr.mxu0 0.0
    %1456 = vmatpush1.msra.mxu0 0.0
    %1457 = vmatprep.subr.mxu0 0.0
    %1458 = vmatpush1.msra.mxu0 0.0
    %1459 = vmatprep.subr.mxu0 0.0
    %1460 = vmatpush1.msra.mxu0 0.0
    %1461 = vmatprep.subr.mxu0 0.0
    %1462 = vmatpush1.msra.mxu0 0.0
    %1463 = vmatprep.subr.mxu0 0.0
    %1464 = vmatpush1.msra.mxu0 0.0
    %1465 = vmatprep.subr.mxu0 0.0
    %1466 = vmatpush1.msra.mxu0 0.0
    %1467 = vmatprep.subr.mxu0 0.0
    %1468 = vmatpush1.msra.mxu0 0.0
    %1469 = vmatprep.subr.mxu0 0.0
    %1470 = vmatpush1.msra.mxu0 0.0
    %1471 = vmatprep.subr.mxu0 0.0
    %1472 = vmatpush1.msra.mxu0 0.0
    %1473 = vmatprep.subr.mxu0 0.0
    %1474 = vmatpush1.msra.mxu0 0.0
    %1475 = vmatprep.subr.mxu0 0.0
    %1476 = vmatpush1.msra.mxu0 0.0
    %1477 = vmatprep.subr.mxu0 0.0
    %1478 = vmatpush1.msra.mxu0 0.0
    %1479 = vmatprep.subr.mxu0 0.0
    %1480 = vmatpush1.msra.mxu0 %v1444
    %1481 = vmatprep.subr.mxu0 0.0
    %1482 = vmatpush2.msra.mxu0 0.0
    %1483 = vmatprep.subr.mxu0 0.0
    %1484 = vmatpush2.msra.mxu0 0.0
    %1485 = vmatprep.subr.mxu0 0.0
    %1486 = vmatpush2.msra.mxu0 0.0
    %1487 = vmatprep.subr.mxu0 0.0
    %1488 = vmatpush2.msra.mxu0 0.0
    %1489 = vmatprep.subr.mxu0 0.0
    %1490 = vmatpush2.msra.mxu0 0.0
    %1491 = vmatprep.subr.mxu0 0.0
    %1492 = vmatpush2.msra.mxu0 0.0
    %1493 = vmatprep.subr.mxu0 0.0
    %1494 = vmatpush2.msra.mxu0 0.0
    %1495 = vmatprep.subr.mxu0 0.0
    %1496 = vmatpush2.msra.mxu0 0.0
    %1497 = vmatprep.subr.mxu0 0.0
    %1498 = vmatpush2.msra.mxu0 0.0
    %1499 = vmatprep.subr.mxu0 0.0
    %1500 = vmatpush2.msra.mxu0 0.0
    %1501 = vmatprep.subr.mxu0 0.0
    %1502 = vmatpush2.msra.mxu0 0.0
    %1503 = vmatprep.subr.mxu0 0.0
    %1504 = vmatpush2.msra.mxu0 0.0
    %1505 = vmatprep.subr.mxu0 0.0
    %1506 = vmatpush2.msra.mxu0 0.0
    %1507 = vmatprep.subr.mxu0 0.0
    %1508 = vmatpush2.msra.mxu0 0.0
    %1509 = vmatprep.subr.mxu0 0.0
    %1510 = vmatpush2.msra.mxu0 0.0
    %1511 = vmatprep.subr.mxu0 0.0
    %1512 = vmatpush2.msra.mxu0 0.0
    %1513 = vmatprep.mubr.f32.mxu0 0.0
    %1514 = vmatmul.mubr.f32.gmra.mxu0 %v1447
    %v1515 = vpop.f32.mrf.mxu0
    %v1516 = vadd.f32 0.0, %v1515
    %v1517 = vpop.f32.mrf.mxu0
    %1518 = vdwg.mxu0
    %1521 = vrot.lane.b32.xlu0 %v780, 8
    %v1522 = vpop.permute.xlu0 %1521
    %1523 = vrot.lane.b32.xlu0 %v856, 8
    %v1524 = vpop.permute.xlu0 %1523
    %1529 = vrot.lane.b32.xlu0 %v1110, 16
    %v1530 = vpop.permute.xlu0 %1529
    %1531 = vrot.lane.b32.xlu0 %v1186, 16
    %v1532 = vpop.permute.xlu0 %1531
    %1537 = vrot.lane.b32.xlu0 %v1440, 24
    %v1538 = vpop.permute.xlu0 %1537
    %1539 = vrot.lane.b32.xlu0 %v1516, 24
    %v1540 = vpop.permute.xlu0 %1539
    %v1543 = vsel %vm203, %v450, %v1522
    %v1544 = vsel %vm203, %v526, %v1524
    %vm1545 = vcmask 130048
    %v1546 = vsel %vm1545, %v1543, %v1530
    %v1547 = vsel %vm1545, %v1544, %v1532
    %vm1548 = vcmask 195584
    %v1549 = vsel %vm1548, %v1546, %v1538
    %v1550 = vsel %vm1548, %v1547, %v1540
    %v1551 = vld [vmem:[%s3] sm:$0xff]
    %v1552 = vld [vmem:[%s3 + $0x8] sm:$0xff]
    %v1553 = vld [vmem:[%s3 + $0x10] sm:$0xff]
    %v1554 = vld [vmem:[%s3 + $0x18] sm:$0xff]
    %v1555 = vlaneseq
    %v1556 = vshrl.u32 %v1555, 7
    %v1557 = vsub.s32 1, %v1556
    %v1558 = vrot.slane %v108, %v1557
    %v1560 = vsel %vm118, %v1549, 0
    %v1563 = vsel %vm118, %v1550, 0
    %1565 = vmatprep.subr.mxu0 0.0
    %1566 = vmatpush1.msra.mxu0 0.0
    %1567 = vmatprep.subr.mxu0 0.0
    %1568 = vmatpush1.msra.mxu0 0.0
    %1569 = vmatprep.subr.mxu0 0.0
    %1570 = vmatpush1.msra.mxu0 0.0
    %1571 = vmatprep.subr.mxu0 0.0
    %1572 = vmatpush1.msra.mxu0 0.0
    %1573 = vmatprep.subr.mxu0 0.0
    %1574 = vmatpush1.msra.mxu0 0.0
    %1575 = vmatprep.subr.mxu0 0.0
    %1576 = vmatpush1.msra.mxu0 0.0
    %1577 = vmatprep.subr.mxu0 0.0
    %1578 = vmatpush1.msra.mxu0 0.0
    %1579 = vmatprep.subr.mxu0 0.0
    %1580 = vmatpush1.msra.mxu0 0.0
    %1581 = vmatprep.subr.mxu0 0.0
    %1582 = vmatpush1.msra.mxu0 0.0
    %1583 = vmatprep.subr.mxu0 0.0
    %1584 = vmatpush1.msra.mxu0 0.0
    %1585 = vmatprep.subr.mxu0 0.0
    %1586 = vmatpush1.msra.mxu0 0.0
    %1587 = vmatprep.subr.mxu0 0.0
    %1588 = vmatpush1.msra.mxu0 0.0
    %1589 = vmatprep.subr.mxu0 0.0
    %1590 = vmatpush1.msra.mxu0 %v1554
    %1591 = vmatprep.subr.mxu0 0.0
    %1592 = vmatpush1.msra.mxu0 %v1553
    %1593 = vmatprep.subr.mxu0 0.0
    %1594 = vmatpush1.msra.mxu0 %v1552
    %1595 = vmatprep.subr.mxu0 0.0
    %1596 = vmatpush1.msra.mxu0 %v1551
    %1597 = vmatprep.subr.mxu0 0.0
    %1598 = vmatpush2.msra.mxu0 0.0
    %1599 = vmatprep.subr.mxu0 0.0
    %1600 = vmatpush2.msra.mxu0 0.0
    %1601 = vmatprep.subr.mxu0 0.0
    %1602 = vmatpush2.msra.mxu0 0.0
    %1603 = vmatprep.subr.mxu0 0.0
    %1604 = vmatpush2.msra.mxu0 0.0
    %1605 = vmatprep.subr.mxu0 0.0
    %1606 = vmatpush2.msra.mxu0 0.0
    %1607 = vmatprep.subr.mxu0 0.0
    %1608 = vmatpush2.msra.mxu0 0.0
    %1609 = vmatprep.subr.mxu0 0.0
    %1610 = vmatpush2.msra.mxu0 0.0
    %1611 = vmatprep.subr.mxu0 0.0
    %1612 = vmatpush2.msra.mxu0 0.0
    %1613 = vmatprep.subr.mxu0 0.0
    %1614 = vmatpush2.msra.mxu0 0.0
    %1615 = vmatprep.subr.mxu0 0.0
    %1616 = vmatpush2.msra.mxu0 0.0
    %1617 = vmatprep.subr.mxu0 0.0
    %1618 = vmatpush2.msra.mxu0 0.0
    %1619 = vmatprep.subr.mxu0 0.0
    %1620 = vmatpush2.msra.mxu0 0.0
    %1621 = vmatprep.subr.mxu0 0.0
    %1622 = vmatpush2.msra.mxu0 0.0
    %1623 = vmatprep.subr.mxu0 0.0
    %1624 = vmatpush2.msra.mxu0 0.0
    %1625 = vmatprep.subr.mxu0 0.0
    %1626 = vmatpush2.msra.mxu0 0.0
    %1627 = vmatprep.subr.mxu0 0.0
    %1628 = vmatpush2.msra.mxu0 0.0
    %1629 = vmatprep.mubr.f32.mxu0 0.0
    %1630 = vmatmul.mubr.f32.gmra.mxu0 %v1560
    %v1631 = vpop.f32.mrf.mxu0
    %v1632 = vadd.f32 %v1558, %v1631
    %v1633 = vpop.f32.mrf.mxu0
    %1634 = vmatprep.mubr.f32.mxu0 0.0
    %1635 = vmatmul.mubr.f32.gmra.mxu0 %v1563
    %v1636 = vpop.f32.mrf.mxu0
    %v1637 = vadd.f32 %v1558, %v1636
    %v1638 = vpop.f32.mrf.mxu0
    %1639 = vdwg.mxu0
    %v1640 = vadd.f32 %v104, %v1632
    %v1641 = vadd.f32 %v105, %v1637
    %v1642 = vsel %vm118, %v1640, 0.0
    %1643 = vadd.xlane.f32.xlu0 %v1642
    %v1644 = vpop.xlane.xlu0 %1643
    %v1645 = vsel %vm118, %v1641, 0.0
    %1646 = vadd.xlane.f32.xlu0 %v1645
    %v1647 = vpop.xlane.xlu0 %1646
    %v1648 = vrcp.pop 32.0
    %v1649 = vmul.f32 %v1644, %v1648
    %v1650 = vmul.f32 %v1647, %v1648
    %v1651 = vsub.f32 %v1640, %v1649
    %v1652 = vsub.f32 %v1641, %v1650
    %v1653 = vmul.f32 %v1651, %v1651
    %v1654 = vmul.f32 %v1652, %v1652
    %v1655 = vsel %vm118, %v1653, 0.0
    %1656 = vadd.xlane.f32.xlu0 %v1655
    %v1657 = vpop.xlane.xlu0 %1656
    %v1658 = vsel %vm118, %v1654, 0.0
    %1659 = vadd.xlane.f32.xlu0 %v1658
    %v1660 = vpop.xlane.xlu0 %1659
    %v1661 = vmul.f32 %v1657, %v1648
    %v1662 = vmul.f32 %v1660, %v1648
    %v1663 = vadd.f32 %v1661, 1e-05
    %v1664 = vadd.f32 %v1662, 1e-05
    %v1665 = vrsqrt.pop %v1663
    %v1666 = vrsqrt.pop %v1664
    %v1667 = vmul.f32 %v1651, %v1665
    %v1668 = vmul.f32 %v1652, %v1666
    %v1669 = vlaneseq
    %v1670 = vshrl.u32 %v1669, 7
    %v1671 = vsub.s32 5, %v1670
    %v1672 = vrot.slane %v108, %v1671
    %v1673 = vmul.f32 %v1667, %v1672
    %v1674 = vmul.f32 %v1668, %v1672
    %v1675 = vlaneseq
    %v1676 = vshrl.u32 %v1675, 7
    %v1677 = vsub.s32 6, %v1676
    %v1678 = vrot.slane %v108, %v1677
    %v1679 = vadd.f32 %v1673, %v1678
    %v1680 = vadd.f32 %v1674, %v1678
    %v1681 = vld [vmem:[%s4] sm:$0xff]
    %v1682 = vld [vmem:[%s4 + $0x8] sm:$0xff]
    %v1683 = vld [vmem:[%s4 + $0x10] sm:$0xff]
    %v1684 = vld [vmem:[%s4 + $0x18] sm:$0xff]
    %v1685 = vlaneseq
    %v1686 = vshrl.u32 %v1685, 7
    %v1687 = vsub.s32 2, %v1686
    %v1688 = vrot.slane %v108, %v1687
    %v1690 = vsel %vm118, %v1679, 0
    %v1693 = vsel %vm118, %v1680, 0
    %1695 = vmatprep.subr.mxu0 0.0
    %1696 = vmatpush1.msra.mxu0 0.0
    %1697 = vmatprep.subr.mxu0 0.0
    %1698 = vmatpush1.msra.mxu0 0.0
    %1699 = vmatprep.subr.mxu0 0.0
    %1700 = vmatpush1.msra.mxu0 0.0
    %1701 = vmatprep.subr.mxu0 0.0
    %1702 = vmatpush1.msra.mxu0 0.0
    %1703 = vmatprep.subr.mxu0 0.0
    %1704 = vmatpush1.msra.mxu0 0.0
    %1705 = vmatprep.subr.mxu0 0.0
    %1706 = vmatpush1.msra.mxu0 0.0
    %1707 = vmatprep.subr.mxu0 0.0
    %1708 = vmatpush1.msra.mxu0 0.0
    %1709 = vmatprep.subr.mxu0 0.0
    %1710 = vmatpush1.msra.mxu0 0.0
    %1711 = vmatprep.subr.mxu0 0.0
    %1712 = vmatpush1.msra.mxu0 0.0
    %1713 = vmatprep.subr.mxu0 0.0
    %1714 = vmatpush1.msra.mxu0 0.0
    %1715 = vmatprep.subr.mxu0 0.0
    %1716 = vmatpush1.msra.mxu0 0.0
    %1717 = vmatprep.subr.mxu0 0.0
    %1718 = vmatpush1.msra.mxu0 0.0
    %1719 = vmatprep.subr.mxu0 0.0
    %1720 = vmatpush1.msra.mxu0 %v1684
    %1721 = vmatprep.subr.mxu0 0.0
    %1722 = vmatpush1.msra.mxu0 %v1683
    %1723 = vmatprep.subr.mxu0 0.0
    %1724 = vmatpush1.msra.mxu0 %v1682
    %1725 = vmatprep.subr.mxu0 0.0
    %1726 = vmatpush1.msra.mxu0 %v1681
    %1727 = vmatprep.subr.mxu0 0.0
    %1728 = vmatpush2.msra.mxu0 0.0
    %1729 = vmatprep.subr.mxu0 0.0
    %1730 = vmatpush2.msra.mxu0 0.0
    %1731 = vmatprep.subr.mxu0 0.0
    %1732 = vmatpush2.msra.mxu0 0.0
    %1733 = vmatprep.subr.mxu0 0.0
    %1734 = vmatpush2.msra.mxu0 0.0
    %1735 = vmatprep.subr.mxu0 0.0
    %1736 = vmatpush2.msra.mxu0 0.0
    %1737 = vmatprep.subr.mxu0 0.0
    %1738 = vmatpush2.msra.mxu0 0.0
    %1739 = vmatprep.subr.mxu0 0.0
    %1740 = vmatpush2.msra.mxu0 0.0
    %1741 = vmatprep.subr.mxu0 0.0
    %1742 = vmatpush2.msra.mxu0 0.0
    %1743 = vmatprep.subr.mxu0 0.0
    %1744 = vmatpush2.msra.mxu0 0.0
    %1745 = vmatprep.subr.mxu0 0.0
    %1746 = vmatpush2.msra.mxu0 0.0
    %1747 = vmatprep.subr.mxu0 0.0
    %1748 = vmatpush2.msra.mxu0 0.0
    %1749 = vmatprep.subr.mxu0 0.0
    %1750 = vmatpush2.msra.mxu0 0.0
    %1751 = vmatprep.subr.mxu0 0.0
    %1752 = vmatpush2.msra.mxu0 0.0
    %1753 = vmatprep.subr.mxu0 0.0
    %1754 = vmatpush2.msra.mxu0 0.0
    %1755 = vmatprep.subr.mxu0 0.0
    %1756 = vmatpush2.msra.mxu0 0.0
    %1757 = vmatprep.subr.mxu0 0.0
    %1758 = vmatpush2.msra.mxu0 0.0
    %1759 = vmatprep.mubr.f32.mxu0 0.0
    %1760 = vmatmul.mubr.f32.gmra.mxu0 %v1690
    %v1761 = vpop.f32.mrf.mxu0
    %v1762 = vadd.f32 %v1688, %v1761
    %v1763 = vpop.f32.mrf.mxu0
    %1764 = vmatprep.mubr.f32.mxu0 0.0
    %1765 = vmatmul.mubr.f32.gmra.mxu0 %v1693
    %v1766 = vpop.f32.mrf.mxu0
    %v1767 = vadd.f32 %v1688, %v1766
    %v1768 = vpop.f32.mrf.mxu0
    %1769 = vdwg.mxu0
    %v1770 = vld [vmem:[#allocation7] sm:$0xff]
    %v1771 = vld [vmem:[#allocation7 + $0x8] sm:$0xff]
    %v1772 = vld [vmem:[#allocation7 + $0x10] sm:$0xff]
    %v1773 = vld [vmem:[#allocation7 + $0x18] sm:$0xff]
    %v1774 = vlaneseq
    %v1775 = vshrl.u32 %v1774, 7
    %v1776 = vsub.s32 3, %v1775
    %v1777 = vrot.slane %v108, %v1776
    %v1779 = vsel %vm118, %v106, 0
    %v1782 = vsel %vm118, %v107, 0
    %1784 = vmatprep.subr.mxu0 0.0
    %1785 = vmatpush1.msra.mxu0 0.0
    %1786 = vmatprep.subr.mxu0 0.0
    %1787 = vmatpush1.msra.mxu0 0.0
    %1788 = vmatprep.subr.mxu0 0.0
    %1789 = vmatpush1.msra.mxu0 0.0
    %1790 = vmatprep.subr.mxu0 0.0
    %1791 = vmatpush1.msra.mxu0 0.0
    %1792 = vmatprep.subr.mxu0 0.0
    %1793 = vmatpush1.msra.mxu0 0.0
    %1794 = vmatprep.subr.mxu0 0.0
    %1795 = vmatpush1.msra.mxu0 0.0
    %1796 = vmatprep.subr.mxu0 0.0
    %1797 = vmatpush1.msra.mxu0 0.0
    %1798 = vmatprep.subr.mxu0 0.0
    %1799 = vmatpush1.msra.mxu0 0.0
    %1800 = vmatprep.subr.mxu0 0.0
    %1801 = vmatpush1.msra.mxu0 0.0
    %1802 = vmatprep.subr.mxu0 0.0
    %1803 = vmatpush1.msra.mxu0 0.0
    %1804 = vmatprep.subr.mxu0 0.0
    %1805 = vmatpush1.msra.mxu0 0.0
    %1806 = vmatprep.subr.mxu0 0.0
    %1807 = vmatpush1.msra.mxu0 0.0
    %1808 = vmatprep.subr.mxu0 0.0
    %1809 = vmatpush1.msra.mxu0 %v1773
    %1810 = vmatprep.subr.mxu0 0.0
    %1811 = vmatpush1.msra.mxu0 %v1772
    %1812 = vmatprep.subr.mxu0 0.0
    %1813 = vmatpush1.msra.mxu0 %v1771
    %1814 = vmatprep.subr.mxu0 0.0
    %1815 = vmatpush1.msra.mxu0 %v1770
    %1816 = vmatprep.subr.mxu0 0.0
    %1817 = vmatpush2.msra.mxu0 0.0
    %1818 = vmatprep.subr.mxu0 0.0
    %1819 = vmatpush2.msra.mxu0 0.0
    %1820 = vmatprep.subr.mxu0 0.0
    %1821 = vmatpush2.msra.mxu0 0.0
    %1822 = vmatprep.subr.mxu0 0.0
    %1823 = vmatpush2.msra.mxu0 0.0
    %1824 = vmatprep.subr.mxu0 0.0
    %1825 = vmatpush2.msra.mxu0 0.0
    %1826 = vmatprep.subr.mxu0 0.0
    %1827 = vmatpush2.msra.mxu0 0.0
    %1828 = vmatprep.subr.mxu0 0.0
    %1829 = vmatpush2.msra.mxu0 0.0
    %1830 = vmatprep.subr.mxu0 0.0
    %1831 = vmatpush2.msra.mxu0 0.0
    %1832 = vmatprep.subr.mxu0 0.0
    %1833 = vmatpush2.msra.mxu0 0.0
    %1834 = vmatprep.subr.mxu0 0.0
    %1835 = vmatpush2.msra.mxu0 0.0
    %1836 = vmatprep.subr.mxu0 0.0
    %1837 = vmatpush2.msra.mxu0 0.0
    %1838 = vmatprep.subr.mxu0 0.0
    %1839 = vmatpush2.msra.mxu0 0.0
    %1840 = vmatprep.subr.mxu0 0.0
    %1841 = vmatpush2.msra.mxu0 0.0
    %1842 = vmatprep.subr.mxu0 0.0
    %1843 = vmatpush2.msra.mxu0 0.0
    %1844 = vmatprep.subr.mxu0 0.0
    %1845 = vmatpush2.msra.mxu0 0.0
    %1846 = vmatprep.subr.mxu0 0.0
    %1847 = vmatpush2.msra.mxu0 0.0
    %1848 = vmatprep.mubr.f32.mxu0 0.0
    %1849 = vmatmul.mubr.f32.gmra.mxu0 %v1779
    %v1850 = vpop.f32.mrf.mxu0
    %v1851 = vadd.f32 %v1777, %v1850
    %v1852 = vpop.f32.mrf.mxu0
    %1853 = vmatprep.mubr.f32.mxu0 0.0
    %1854 = vmatmul.mubr.f32.gmra.mxu0 %v1782
    %v1855 = vpop.f32.mrf.mxu0
    %v1856 = vadd.f32 %v1777, %v1855
    %v1857 = vpop.f32.mrf.mxu0
    %1858 = vdwg.mxu0
    %v1860 = vsel %vm203, %v1762, 0
    %v1863 = vsel %vm203, %v1851, 0
    %1865 = vmatprep.subr.mxu0 0.0
    %1866 = vmatpush1.xpose.msra.mxu0 0.0
    %1867 = vmatprep.subr.mxu0 0.0
    %1868 = vmatpush1.xpose.msra.mxu0 0.0
    %1869 = vmatprep.subr.mxu0 0.0
    %1870 = vmatpush1.xpose.msra.mxu0 0.0
    %1871 = vmatprep.subr.mxu0 0.0
    %1872 = vmatpush1.xpose.msra.mxu0 0.0
    %1873 = vmatprep.subr.mxu0 0.0
    %1874 = vmatpush1.xpose.msra.mxu0 0.0
    %1875 = vmatprep.subr.mxu0 0.0
    %1876 = vmatpush1.xpose.msra.mxu0 0.0
    %1877 = vmatprep.subr.mxu0 0.0
    %1878 = vmatpush1.xpose.msra.mxu0 0.0
    %1879 = vmatprep.subr.mxu0 0.0
    %1880 = vmatpush1.xpose.msra.mxu0 0.0
    %1881 = vmatprep.subr.mxu0 0.0
    %1882 = vmatpush1.xpose.msra.mxu0 0.0
    %1883 = vmatprep.subr.mxu0 0.0
    %1884 = vmatpush1.xpose.msra.mxu0 0.0
    %1885 = vmatprep.subr.mxu0 0.0
    %1886 = vmatpush1.xpose.msra.mxu0 0.0
    %1887 = vmatprep.subr.mxu0 0.0
    %1888 = vmatpush1.xpose.msra.mxu0 0.0
    %1889 = vmatprep.subr.mxu0 0.0
    %1890 = vmatpush1.xpose.msra.mxu0 0.0
    %1891 = vmatprep.subr.mxu0 0.0
    %1892 = vmatpush1.xpose.msra.mxu0 0.0
    %1893 = vmatprep.subr.mxu0 0.0
    %1894 = vmatpush1.xpose.msra.mxu0 0.0
    %1895 = vmatprep.subr.mxu0 0.0
    %1896 = vmatpush1.xpose.msra.mxu0 %v1863
    %1897 = vmatprep.subr.mxu0 0.0
    %1898 = vmatpush2.xpose.msra.mxu0 0.0
    %1899 = vmatprep.subr.mxu0 0.0
    %1900 = vmatpush2.xpose.msra.mxu0 0.0
    %1901 = vmatprep.subr.mxu0 0.0
    %1902 = vmatpush2.xpose.msra.mxu0 0.0
    %1903 = vmatprep.subr.mxu0 0.0
    %1904 = vmatpush2.xpose.msra.mxu0 0.0
    %1905 = vmatprep.subr.mxu0 0.0
    %1906 = vmatpush2.xpose.msra.mxu0 0.0
    %1907 = vmatprep.subr.mxu0 0.0
    %1908 = vmatpush2.xpose.msra.mxu0 0.0
    %1909 = vmatprep.subr.mxu0 0.0
    %1910 = vmatpush2.xpose.msra.mxu0 0.0
    %1911 = vmatprep.subr.mxu0 0.0
    %1912 = vmatpush2.xpose.msra.mxu0 0.0
    %1913 = vmatprep.subr.mxu0 0.0
    %1914 = vmatpush2.xpose.msra.mxu0 0.0
    %1915 = vmatprep.subr.mxu0 0.0
    %1916 = vmatpush2.xpose.msra.mxu0 0.0
    %1917 = vmatprep.subr.mxu0 0.0
    %1918 = vmatpush2.xpose.msra.mxu0 0.0
    %1919 = vmatprep.subr.mxu0 0.0
    %1920 = vmatpush2.xpose.msra.mxu0 0.0
    %1921 = vmatprep.subr.mxu0 0.0
    %1922 = vmatpush2.xpose.msra.mxu0 0.0
    %1923 = vmatprep.subr.mxu0 0.0
    %1924 = vmatpush2.xpose.msra.mxu0 0.0
    %1925 = vmatprep.subr.mxu0 0.0
    %1926 = vmatpush2.xpose.msra.mxu0 0.0
    %1927 = vmatprep.subr.mxu0 0.0
    %1928 = vmatpush2.xpose.msra.mxu0 0.0
    %1929 = vmatprep.mubr.f32.mxu0 0.0
    %1930 = vmatmul.mubr.f32.gmra.mxu0 %v1860
    %v1931 = vpop.f32.mrf.mxu0
    %v1932 = vadd.f32 0.0, %v1931
    %v1933 = vpop.f32.mrf.mxu0
    %1934 = vdwg.mxu0
    %v1936 = vsel %vm203, %v1767, 0
    %v1939 = vsel %vm203, %v1856, 0
    %1941 = vmatprep.subr.mxu0 0.0
    %1942 = vmatpush1.xpose.msra.mxu0 0.0
    %1943 = vmatprep.subr.mxu0 0.0
    %1944 = vmatpush1.xpose.msra.mxu0 0.0
    %1945 = vmatprep.subr.mxu0 0.0
    %1946 = vmatpush1.xpose.msra.mxu0 0.0
    %1947 = vmatprep.subr.mxu0 0.0
    %1948 = vmatpush1.xpose.msra.mxu0 0.0
    %1949 = vmatprep.subr.mxu0 0.0
    %1950 = vmatpush1.xpose.msra.mxu0 0.0
    %1951 = vmatprep.subr.mxu0 0.0
    %1952 = vmatpush1.xpose.msra.mxu0 0.0
    %1953 = vmatprep.subr.mxu0 0.0
    %1954 = vmatpush1.xpose.msra.mxu0 0.0
    %1955 = vmatprep.subr.mxu0 0.0
    %1956 = vmatpush1.xpose.msra.mxu0 0.0
    %1957 = vmatprep.subr.mxu0 0.0
    %1958 = vmatpush1.xpose.msra.mxu0 0.0
    %1959 = vmatprep.subr.mxu0 0.0
    %1960 = vmatpush1.xpose.msra.mxu0 0.0
    %1961 = vmatprep.subr.mxu0 0.0
    %1962 = vmatpush1.xpose.msra.mxu0 0.0
    %1963 = vmatprep.subr.mxu0 0.0
    %1964 = vmatpush1.xpose.msra.mxu0 0.0
    %1965 = vmatprep.subr.mxu0 0.0
    %1966 = vmatpush1.xpose.msra.mxu0 0.0
    %1967 = vmatprep.subr.mxu0 0.0
    %1968 = vmatpush1.xpose.msra.mxu0 0.0
    %1969 = vmatprep.subr.mxu0 0.0
    %1970 = vmatpush1.xpose.msra.mxu0 0.0
    %1971 = vmatprep.subr.mxu0 0.0
    %1972 = vmatpush1.xpose.msra.mxu0 %v1939
    %1973 = vmatprep.subr.mxu0 0.0
    %1974 = vmatpush2.xpose.msra.mxu0 0.0
    %1975 = vmatprep.subr.mxu0 0.0
    %1976 = vmatpush2.xpose.msra.mxu0 0.0
    %1977 = vmatprep.subr.mxu0 0.0
    %1978 = vmatpush2.xpose.msra.mxu0 0.0
    %1979 = vmatprep.subr.mxu0 0.0
    %1980 = vmatpush2.xpose.msra.mxu0 0.0
    %1981 = vmatprep.subr.mxu0 0.0
    %1982 = vmatpush2.xpose.msra.mxu0 0.0
    %1983 = vmatprep.subr.mxu0 0.0
    %1984 = vmatpush2.xpose.msra.mxu0 0.0
    %1985 = vmatprep.subr.mxu0 0.0
    %1986 = vmatpush2.xpose.msra.mxu0 0.0
    %1987 = vmatprep.subr.mxu0 0.0
    %1988 = vmatpush2.xpose.msra.mxu0 0.0
    %1989 = vmatprep.subr.mxu0 0.0
    %1990 = vmatpush2.xpose.msra.mxu0 0.0
    %1991 = vmatprep.subr.mxu0 0.0
    %1992 = vmatpush2.xpose.msra.mxu0 0.0
    %1993 = vmatprep.subr.mxu0 0.0
    %1994 = vmatpush2.xpose.msra.mxu0 0.0
    %1995 = vmatprep.subr.mxu0 0.0
    %1996 = vmatpush2.xpose.msra.mxu0 0.0
    %1997 = vmatprep.subr.mxu0 0.0
    %1998 = vmatpush2.xpose.msra.mxu0 0.0
    %1999 = vmatprep.subr.mxu0 0.0
    %2000 = vmatpush2.xpose.msra.mxu0 0.0
    %2001 = vmatprep.subr.mxu0 0.0
    %2002 = vmatpush2.xpose.msra.mxu0 0.0
    %2003 = vmatprep.subr.mxu0 0.0
    %2004 = vmatpush2.xpose.msra.mxu0 0.0
    %2005 = vmatprep.mubr.f32.mxu0 0.0
    %2006 = vmatmul.mubr.f32.gmra.mxu0 %v1936
    %v2007 = vpop.f32.mrf.mxu0
    %v2008 = vadd.f32 0.0, %v2007
    %v2009 = vpop.f32.mrf.mxu0
    %2010 = vdwg.mxu0
    %v2011 = vsel %vm203, %v1932, -inf
    %2012 = vmax.xlane.f32.xlu0 %v2011
    %v2013 = vpop.xlane.xlu0 %2012
    %v2014 = vsel %vm203, %v2008, -inf
    %2015 = vmax.xlane.f32.xlu0 %v2014
    %v2016 = vpop.xlane.xlu0 %2015
    %v2017 = vsub.f32 %v1932, %v2013
    %v2018 = vsub.f32 %v2008, %v2016
    %v2019 = vmul.f32 %v2017, 1.442695
    %v2020 = vpow.pop %v2019
    %v2021 = vmul.f32 %v2018, 1.442695
    %v2022 = vpow.pop %v2021
    %v2023 = vsel %vm203, %v2020, 0.0
    %2024 = vadd.xlane.f32.xlu0 %v2023
    %v2025 = vpop.xlane.xlu0 %2024
    %v2026 = vsel %vm203, %v2022, 0.0
    %2027 = vadd.xlane.f32.xlu0 %v2026
    %v2028 = vpop.xlane.xlu0 %2027
    %v2029 = vrcp.pop %v2025
    %v2030 = vrcp.pop %v2028
    %v2031 = vmul.f32 %v2020, %v2029
    %v2032 = vmul.f32 %v2022, %v2030
    %2033 = vrot.lane.b32.xlu0 %v1851, 96
    %v2034 = vpop.permute.xlu0 %2033
    %v2037 = vsel %vm203, %v2031, 0
    %2039 = vmatprep.subr.mxu0 0.0
    %2040 = vmatpush1.msra.mxu0 0.0
    %2041 = vmatprep.subr.mxu0 0.0
    %2042 = vmatpush1.msra.mxu0 0.0
    %2043 = vmatprep.subr.mxu0 0.0
    %2044 = vmatpush1.msra.mxu0 0.0
    %2045 = vmatprep.subr.mxu0 0.0
    %2046 = vmatpush1.msra.mxu0 0.0
    %2047 = vmatprep.subr.mxu0 0.0
    %2048 = vmatpush1.msra.mxu0 0.0
    %2049 = vmatprep.subr.mxu0 0.0
    %2050 = vmatpush1.msra.mxu0 0.0
    %2051 = vmatprep.subr.mxu0 0.0
    %2052 = vmatpush1.msra.mxu0 0.0
    %2053 = vmatprep.subr.mxu0 0.0
    %2054 = vmatpush1.msra.mxu0 0.0
    %2055 = vmatprep.subr.mxu0 0.0
    %2056 = vmatpush1.msra.mxu0 0.0
    %2057 = vmatprep.subr.mxu0 0.0
    %2058 = vmatpush1.msra.mxu0 0.0
    %2059 = vmatprep.subr.mxu0 0.0
    %2060 = vmatpush1.msra.mxu0 0.0
    %2061 = vmatprep.subr.mxu0 0.0
    %2062 = vmatpush1.msra.mxu0 0.0
    %2063 = vmatprep.subr.mxu0 0.0
    %2064 = vmatpush1.msra.mxu0 0.0
    %2065 = vmatprep.subr.mxu0 0.0
    %2066 = vmatpush1.msra.mxu0 0.0
    %2067 = vmatprep.subr.mxu0 0.0
    %2068 = vmatpush1.msra.mxu0 0.0
    %2069 = vmatprep.subr.mxu0 0.0
    %2070 = vmatpush1.msra.mxu0 %v2034
    %2071 = vmatprep.subr.mxu0 0.0
    %2072 = vmatpush2.msra.mxu0 0.0
    %2073 = vmatprep.subr.mxu0 0.0
    %2074 = vmatpush2.msra.mxu0 0.0
    %2075 = vmatprep.subr.mxu0 0.0
    %2076 = vmatpush2.msra.mxu0 0.0
    %2077 = vmatprep.subr.mxu0 0.0
    %2078 = vmatpush2.msra.mxu0 0.0
    %2079 = vmatprep.subr.mxu0 0.0
    %2080 = vmatpush2.msra.mxu0 0.0
    %2081 = vmatprep.subr.mxu0 0.0
    %2082 = vmatpush2.msra.mxu0 0.0
    %2083 = vmatprep.subr.mxu0 0.0
    %2084 = vmatpush2.msra.mxu0 0.0
    %2085 = vmatprep.subr.mxu0 0.0
    %2086 = vmatpush2.msra.mxu0 0.0
    %2087 = vmatprep.subr.mxu0 0.0
    %2088 = vmatpush2.msra.mxu0 0.0
    %2089 = vmatprep.subr.mxu0 0.0
    %2090 = vmatpush2.msra.mxu0 0.0
    %2091 = vmatprep.subr.mxu0 0.0
    %2092 = vmatpush2.msra.mxu0 0.0
    %2093 = vmatprep.subr.mxu0 0.0
    %2094 = vmatpush2.msra.mxu0 0.0
    %2095 = vmatprep.subr.mxu0 0.0
    %2096 = vmatpush2.msra.mxu0 0.0
    %2097 = vmatprep.subr.mxu0 0.0
    %2098 = vmatpush2.msra.mxu0 0.0
    %2099 = vmatprep.subr.mxu0 0.0
    %2100 = vmatpush2.msra.mxu0 0.0
    %2101 = vmatprep.subr.mxu0 0.0
    %2102 = vmatpush2.msra.mxu0 0.0
    %2103 = vmatprep.mubr.f32.mxu0 0.0
    %2104 = vmatmul.mubr.f32.gmra.mxu0 %v2037
    %v2105 = vpop.f32.mrf.mxu0
    %v2106 = vadd.f32 0.0, %v2105
    %v2107 = vpop.f32.mrf.mxu0
    %2108 = vdwg.mxu0
    %2109 = vrot.lane.b32.xlu0 %v1856, 96
    %v2110 = vpop.permute.xlu0 %2109
    %v2113 = vsel %vm203, %v2032, 0
    %2115 = vmatprep.subr.mxu0 0.0
    %2116 = vmatpush1.msra.mxu0 0.0
    %2117 = vmatprep.subr.mxu0 0.0
    %2118 = vmatpush1.msra.mxu0 0.0
    %2119 = vmatprep.subr.mxu0 0.0
    %2120 = vmatpush1.msra.mxu0 0.0
    %2121 = vmatprep.subr.mxu0 0.0
    %2122 = vmatpush1.msra.mxu0 0.0
    %2123 = vmatprep.subr.mxu0 0.0
    %2124 = vmatpush1.msra.mxu0 0.0
    %2125 = vmatprep.subr.mxu0 0.0
    %2126 = vmatpush1.msra.mxu0 0.0
    %2127 = vmatprep.subr.mxu0 0.0
    %2128 = vmatpush1.msra.mxu0 0.0
    %2129 = vmatprep.subr.mxu0 0.0
    %2130 = vmatpush1.msra.mxu0 0.0
    %2131 = vmatprep.subr.mxu0 0.0
    %2132 = vmatpush1.msra.mxu0 0.0
    %2133 = vmatprep.subr.mxu0 0.0
    %2134 = vmatpush1.msra.mxu0 0.0
    %2135 = vmatprep.subr.mxu0 0.0
    %2136 = vmatpush1.msra.mxu0 0.0
    %2137 = vmatprep.subr.mxu0 0.0
    %2138 = vmatpush1.msra.mxu0 0.0
    %2139 = vmatprep.subr.mxu0 0.0
    %2140 = vmatpush1.msra.mxu0 0.0
    %2141 = vmatprep.subr.mxu0 0.0
    %2142 = vmatpush1.msra.mxu0 0.0
    %2143 = vmatprep.subr.mxu0 0.0
    %2144 = vmatpush1.msra.mxu0 0.0
    %2145 = vmatprep.subr.mxu0 0.0
    %2146 = vmatpush1.msra.mxu0 %v2110
    %2147 = vmatprep.subr.mxu0 0.0
    %2148 = vmatpush2.msra.mxu0 0.0
    %2149 = vmatprep.subr.mxu0 0.0
    %2150 = vmatpush2.msra.mxu0 0.0
    %2151 = vmatprep.subr.mxu0 0.0
    %2152 = vmatpush2.msra.mxu0 0.0
    %2153 = vmatprep.subr.mxu0 0.0
    %2154 = vmatpush2.msra.mxu0 0.0
    %2155 = vmatprep.subr.mxu0 0.0
    %2156 = vmatpush2.msra.mxu0 0.0
    %2157 = vmatprep.subr.mxu0 0.0
    %2158 = vmatpush2.msra.mxu0 0.0
    %2159 = vmatprep.subr.mxu0 0.0
    %2160 = vmatpush2.msra.mxu0 0.0
    %2161 = vmatprep.subr.mxu0 0.0
    %2162 = vmatpush2.msra.mxu0 0.0
    %2163 = vmatprep.subr.mxu0 0.0
    %2164 = vmatpush2.msra.mxu0 0.0
    %2165 = vmatprep.subr.mxu0 0.0
    %2166 = vmatpush2.msra.mxu0 0.0
    %2167 = vmatprep.subr.mxu0 0.0
    %2168 = vmatpush2.msra.mxu0 0.0
    %2169 = vmatprep.subr.mxu0 0.0
    %2170 = vmatpush2.msra.mxu0 0.0
    %2171 = vmatprep.subr.mxu0 0.0
    %2172 = vmatpush2.msra.mxu0 0.0
    %2173 = vmatprep.subr.mxu0 0.0
    %2174 = vmatpush2.msra.mxu0 0.0
    %2175 = vmatprep.subr.mxu0 0.0
    %2176 = vmatpush2.msra.mxu0 0.0
    %2177 = vmatprep.subr.mxu0 0.0
    %2178 = vmatpush2.msra.mxu0 0.0
    %2179 = vmatprep.mubr.f32.mxu0 0.0
    %2180 = vmatmul.mubr.f32.gmra.mxu0 %v2113
    %v2181 = vpop.f32.mrf.mxu0
    %v2182 = vadd.f32 0.0, %v2181
    %v2183 = vpop.f32.mrf.mxu0
    %2184 = vdwg.mxu0
    %2185 = vrot.lane.b32.xlu0 %v1762, 120
    %v2186 = vpop.permute.xlu0 %2185
    %2187 = vrot.lane.b32.xlu0 %v1851, 120
    %v2188 = vpop.permute.xlu0 %2187
    %v2189 = vsel %vm203, %v2186, 0
    %v2191 = vsel %vm203, %v2188, 0
    %2193 = vmatprep.subr.mxu0 0.0
    %2194 = vmatpush1.xpose.msra.mxu0 0.0
    %2195 = vmatprep.subr.mxu0 0.0
    %2196 = vmatpush1.xpose.msra.mxu0 0.0
    %2197 = vmatprep.subr.mxu0 0.0
    %2198 = vmatpush1.xpose.msra.mxu0 0.0
    %2199 = vmatprep.subr.mxu0 0.0
    %2200 = vmatpush1.xpose.msra.mxu0 0.0
    %2201 = vmatprep.subr.mxu0 0.0
    %2202 = vmatpush1.xpose.msra.mxu0 0.0
    %2203 = vmatprep.subr.mxu0 0.0
    %2204 = vmatpush1.xpose.msra.mxu0 0.0
    %2205 = vmatprep.subr.mxu0 0.0
    %2206 = vmatpush1.xpose.msra.mxu0 0.0
    %2207 = vmatprep.subr.mxu0 0.0
    %2208 = vmatpush1.xpose.msra.mxu0 0.0
    %2209 = vmatprep.subr.mxu0 0.0
    %2210 = vmatpush1.xpose.msra.mxu0 0.0
    %2211 = vmatprep.subr.mxu0 0.0
    %2212 = vmatpush1.xpose.msra.mxu0 0.0
    %2213 = vmatprep.subr.mxu0 0.0
    %2214 = vmatpush1.xpose.msra.mxu0 0.0
    %2215 = vmatprep.subr.mxu0 0.0
    %2216 = vmatpush1.xpose.msra.mxu0 0.0
    %2217 = vmatprep.subr.mxu0 0.0
    %2218 = vmatpush1.xpose.msra.mxu0 0.0
    %2219 = vmatprep.subr.mxu0 0.0
    %2220 = vmatpush1.xpose.msra.mxu0 0.0
    %2221 = vmatprep.subr.mxu0 0.0
    %2222 = vmatpush1.xpose.msra.mxu0 0.0
    %2223 = vmatprep.subr.mxu0 0.0
    %2224 = vmatpush1.xpose.msra.mxu0 %v2191
    %2225 = vmatprep.subr.mxu0 0.0
    %2226 = vmatpush2.xpose.msra.mxu0 0.0
    %2227 = vmatprep.subr.mxu0 0.0
    %2228 = vmatpush2.xpose.msra.mxu0 0.0
    %2229 = vmatprep.subr.mxu0 0.0
    %2230 = vmatpush2.xpose.msra.mxu0 0.0
    %2231 = vmatprep.subr.mxu0 0.0
    %2232 = vmatpush2.xpose.msra.mxu0 0.0
    %2233 = vmatprep.subr.mxu0 0.0
    %2234 = vmatpush2.xpose.msra.mxu0 0.0
    %2235 = vmatprep.subr.mxu0 0.0
    %2236 = vmatpush2.xpose.msra.mxu0 0.0
    %2237 = vmatprep.subr.mxu0 0.0
    %2238 = vmatpush2.xpose.msra.mxu0 0.0
    %2239 = vmatprep.subr.mxu0 0.0
    %2240 = vmatpush2.xpose.msra.mxu0 0.0
    %2241 = vmatprep.subr.mxu0 0.0
    %2242 = vmatpush2.xpose.msra.mxu0 0.0
    %2243 = vmatprep.subr.mxu0 0.0
    %2244 = vmatpush2.xpose.msra.mxu0 0.0
    %2245 = vmatprep.subr.mxu0 0.0
    %2246 = vmatpush2.xpose.msra.mxu0 0.0
    %2247 = vmatprep.subr.mxu0 0.0
    %2248 = vmatpush2.xpose.msra.mxu0 0.0
    %2249 = vmatprep.subr.mxu0 0.0
    %2250 = vmatpush2.xpose.msra.mxu0 0.0
    %2251 = vmatprep.subr.mxu0 0.0
    %2252 = vmatpush2.xpose.msra.mxu0 0.0
    %2253 = vmatprep.subr.mxu0 0.0
    %2254 = vmatpush2.xpose.msra.mxu0 0.0
    %2255 = vmatprep.subr.mxu0 0.0
    %2256 = vmatpush2.xpose.msra.mxu0 0.0
    %2257 = vmatprep.mubr.f32.mxu0 0.0
    %2258 = vmatmul.mubr.f32.gmra.mxu0 %v2189
    %v2259 = vpop.f32.mrf.mxu0
    %v2260 = vadd.f32 0.0, %v2259
    %v2261 = vpop.f32.mrf.mxu0
    %2262 = vdwg.mxu0
    %2263 = vrot.lane.b32.xlu0 %v1767, 120
    %v2264 = vpop.permute.xlu0 %2263
    %2265 = vrot.lane.b32.xlu0 %v1856, 120
    %v2266 = vpop.permute.xlu0 %2265
    %v2267 = vsel %vm203, %v2264, 0
    %v2269 = vsel %vm203, %v2266, 0
    %2271 = vmatprep.subr.mxu0 0.0
    %2272 = vmatpush1.xpose.msra.mxu0 0.0
    %2273 = vmatprep.subr.mxu0 0.0
    %2274 = vmatpush1.xpose.msra.mxu0 0.0
    %2275 = vmatprep.subr.mxu0 0.0
    %2276 = vmatpush1.xpose.msra.mxu0 0.0
    %2277 = vmatprep.subr.mxu0 0.0
    %2278 = vmatpush1.xpose.msra.mxu0 0.0
    %2279 = vmatprep.subr.mxu0 0.0
    %2280 = vmatpush1.xpose.msra.mxu0 0.0
    %2281 = vmatprep.subr.mxu0 0.0
    %2282 = vmatpush1.xpose.msra.mxu0 0.0
    %2283 = vmatprep.subr.mxu0 0.0
    %2284 = vmatpush1.xpose.msra.mxu0 0.0
    %2285 = vmatprep.subr.mxu0 0.0
    %2286 = vmatpush1.xpose.msra.mxu0 0.0
    %2287 = vmatprep.subr.mxu0 0.0
    %2288 = vmatpush1.xpose.msra.mxu0 0.0
    %2289 = vmatprep.subr.mxu0 0.0
    %2290 = vmatpush1.xpose.msra.mxu0 0.0
    %2291 = vmatprep.subr.mxu0 0.0
    %2292 = vmatpush1.xpose.msra.mxu0 0.0
    %2293 = vmatprep.subr.mxu0 0.0
    %2294 = vmatpush1.xpose.msra.mxu0 0.0
    %2295 = vmatprep.subr.mxu0 0.0
    %2296 = vmatpush1.xpose.msra.mxu0 0.0
    %2297 = vmatprep.subr.mxu0 0.0
    %2298 = vmatpush1.xpose.msra.mxu0 0.0
    %2299 = vmatprep.subr.mxu0 0.0
    %2300 = vmatpush1.xpose.msra.mxu0 0.0
    %2301 = vmatprep.subr.mxu0 0.0
    %2302 = vmatpush1.xpose.msra.mxu0 %v2269
    %2303 = vmatprep.subr.mxu0 0.0
    %2304 = vmatpush2.xpose.msra.mxu0 0.0
    %2305 = vmatprep.subr.mxu0 0.0
    %2306 = vmatpush2.xpose.msra.mxu0 0.0
    %2307 = vmatprep.subr.mxu0 0.0
    %2308 = vmatpush2.xpose.msra.mxu0 0.0
    %2309 = vmatprep.subr.mxu0 0.0
    %2310 = vmatpush2.xpose.msra.mxu0 0.0
    %2311 = vmatprep.subr.mxu0 0.0
    %2312 = vmatpush2.xpose.msra.mxu0 0.0
    %2313 = vmatprep.subr.mxu0 0.0
    %2314 = vmatpush2.xpose.msra.mxu0 0.0
    %2315 = vmatprep.subr.mxu0 0.0
    %2316 = vmatpush2.xpose.msra.mxu0 0.0
    %2317 = vmatprep.subr.mxu0 0.0
    %2318 = vmatpush2.xpose.msra.mxu0 0.0
    %2319 = vmatprep.subr.mxu0 0.0
    %2320 = vmatpush2.xpose.msra.mxu0 0.0
    %2321 = vmatprep.subr.mxu0 0.0
    %2322 = vmatpush2.xpose.msra.mxu0 0.0
    %2323 = vmatprep.subr.mxu0 0.0
    %2324 = vmatpush2.xpose.msra.mxu0 0.0
    %2325 = vmatprep.subr.mxu0 0.0
    %2326 = vmatpush2.xpose.msra.mxu0 0.0
    %2327 = vmatprep.subr.mxu0 0.0
    %2328 = vmatpush2.xpose.msra.mxu0 0.0
    %2329 = vmatprep.subr.mxu0 0.0
    %2330 = vmatpush2.xpose.msra.mxu0 0.0
    %2331 = vmatprep.subr.mxu0 0.0
    %2332 = vmatpush2.xpose.msra.mxu0 0.0
    %2333 = vmatprep.subr.mxu0 0.0
    %2334 = vmatpush2.xpose.msra.mxu0 0.0
    %2335 = vmatprep.mubr.f32.mxu0 0.0
    %2336 = vmatmul.mubr.f32.gmra.mxu0 %v2267
    %v2337 = vpop.f32.mrf.mxu0
    %v2338 = vadd.f32 0.0, %v2337
    %v2339 = vpop.f32.mrf.mxu0
    %2340 = vdwg.mxu0
    %v2341 = vsel %vm203, %v2260, -inf
    %2342 = vmax.xlane.f32.xlu0 %v2341
    %v2343 = vpop.xlane.xlu0 %2342
    %v2344 = vsel %vm203, %v2338, -inf
    %2345 = vmax.xlane.f32.xlu0 %v2344
    %v2346 = vpop.xlane.xlu0 %2345
    %v2347 = vsub.f32 %v2260, %v2343
    %v2348 = vsub.f32 %v2338, %v2346
    %v2349 = vmul.f32 %v2347, 1.442695
    %v2350 = vpow.pop %v2349
    %v2351 = vmul.f32 %v2348, 1.442695
    %v2352 = vpow.pop %v2351
    %v2353 = vsel %vm203, %v2350, 0.0
    %2354 = vadd.xlane.f32.xlu0 %v2353
    %v2355 = vpop.xlane.xlu0 %2354
    %v2356 = vsel %vm203, %v2352, 0.0
    %2357 = vadd.xlane.f32.xlu0 %v2356
    %v2358 = vpop.xlane.xlu0 %2357
    %v2359 = vrcp.pop %v2355
    %v2360 = vrcp.pop %v2358
    %v2361 = vmul.f32 %v2350, %v2359
    %v2362 = vmul.f32 %v2352, %v2360
    %2363 = vrot.lane.b32.xlu0 %v1851, 88
    %v2364 = vpop.permute.xlu0 %2363
    %v2367 = vsel %vm203, %v2361, 0
    %2369 = vmatprep.subr.mxu0 0.0
    %2370 = vmatpush1.msra.mxu0 0.0
    %2371 = vmatprep.subr.mxu0 0.0
    %2372 = vmatpush1.msra.mxu0 0.0
    %2373 = vmatprep.subr.mxu0 0.0
    %2374 = vmatpush1.msra.mxu0 0.0
    %2375 = vmatprep.subr.mxu0 0.0
    %2376 = vmatpush1.msra.mxu0 0.0
    %2377 = vmatprep.subr.mxu0 0.0
    %2378 = vmatpush1.msra.mxu0 0.0
    %2379 = vmatprep.subr.mxu0 0.0
    %2380 = vmatpush1.msra.mxu0 0.0
    %2381 = vmatprep.subr.mxu0 0.0
    %2382 = vmatpush1.msra.mxu0 0.0
    %2383 = vmatprep.subr.mxu0 0.0
    %2384 = vmatpush1.msra.mxu0 0.0
    %2385 = vmatprep.subr.mxu0 0.0
    %2386 = vmatpush1.msra.mxu0 0.0
    %2387 = vmatprep.subr.mxu0 0.0
    %2388 = vmatpush1.msra.mxu0 0.0
    %2389 = vmatprep.subr.mxu0 0.0
    %2390 = vmatpush1.msra.mxu0 0.0
    %2391 = vmatprep.subr.mxu0 0.0
    %2392 = vmatpush1.msra.mxu0 0.0
    %2393 = vmatprep.subr.mxu0 0.0
    %2394 = vmatpush1.msra.mxu0 0.0
    %2395 = vmatprep.subr.mxu0 0.0
    %2396 = vmatpush1.msra.mxu0 0.0
    %2397 = vmatprep.subr.mxu0 0.0
    %2398 = vmatpush1.msra.mxu0 0.0
    %2399 = vmatprep.subr.mxu0 0.0
    %2400 = vmatpush1.msra.mxu0 %v2364
    %2401 = vmatprep.subr.mxu0 0.0
    %2402 = vmatpush2.msra.mxu0 0.0
    %2403 = vmatprep.subr.mxu0 0.0
    %2404 = vmatpush2.msra.mxu0 0.0
    %2405 = vmatprep.subr.mxu0 0.0
    %2406 = vmatpush2.msra.mxu0 0.0
    %2407 = vmatprep.subr.mxu0 0.0
    %2408 = vmatpush2.msra.mxu0 0.0
    %2409 = vmatprep.subr.mxu0 0.0
    %2410 = vmatpush2.msra.mxu0 0.0
    %2411 = vmatprep.subr.mxu0 0.0
    %2412 = vmatpush2.msra.mxu0 0.0
    %2413 = vmatprep.subr.mxu0 0.0
    %2414 = vmatpush2.msra.mxu0 0.0
    %2415 = vmatprep.subr.mxu0 0.0
    %2416 = vmatpush2.msra.mxu0 0.0
    %2417 = vmatprep.subr.mxu0 0.0
    %2418 = vmatpush2.msra.mxu0 0.0
    %2419 = vmatprep.subr.mxu0 0.0
    %2420 = vmatpush2.msra.mxu0 0.0
    %2421 = vmatprep.subr.mxu0 0.0
    %2422 = vmatpush2.msra.mxu0 0.0
    %2423 = vmatprep.subr.mxu0 0.0
    %2424 = vmatpush2.msra.mxu0 0.0
    %2425 = vmatprep.subr.mxu0 0.0
    %2426 = vmatpush2.msra.mxu0 0.0
    %2427 = vmatprep.subr.mxu0 0.0
    %2428 = vmatpush2.msra.mxu0 0.0
    %2429 = vmatprep.subr.mxu0 0.0
    %2430 = vmatpush2.msra.mxu0 0.0
    %2431 = vmatprep.subr.mxu0 0.0
    %2432 = vmatpush2.msra.mxu0 0.0
    %2433 = vmatprep.mubr.f32.mxu0 0.0
    %2434 = vmatmul.mubr.f32.gmra.mxu0 %v2367
    %v2435 = vpop.f32.mrf.mxu0
    %v2436 = vadd.f32 0.0, %v2435
    %v2437 = vpop.f32.mrf.mxu0
    %2438 = vdwg.mxu0
    %2439 = vrot.lane.b32.xlu0 %v1856, 88
    %v2440 = vpop.permute.xlu0 %2439
    %v2443 = vsel %vm203, %v2362, 0
    %2445 = vmatprep.subr.mxu0 0.0
    %2446 = vmatpush1.msra.mxu0 0.0
    %2447 = vmatprep.subr.mxu0 0.0
    %2448 = vmatpush1.msra.mxu0 0.0
    %2449 = vmatprep.subr.mxu0 0.0
    %2450 = vmatpush1.msra.mxu0 0.0
    %2451 = vmatprep.subr.mxu0 0.0
    %2452 = vmatpush1.msra.mxu0 0.0
    %2453 = vmatprep.subr.mxu0 0.0
    %2454 = vmatpush1.msra.mxu0 0.0
    %2455 = vmatprep.subr.mxu0 0.0
    %2456 = vmatpush1.msra.mxu0 0.0
    %2457 = vmatprep.subr.mxu0 0.0
    %2458 = vmatpush1.msra.mxu0 0.0
    %2459 = vmatprep.subr.mxu0 0.0
    %2460 = vmatpush1.msra.mxu0 0.0
    %2461 = vmatprep.subr.mxu0 0.0
    %2462 = vmatpush1.msra.mxu0 0.0
    %2463 = vmatprep.subr.mxu0 0.0
    %2464 = vmatpush1.msra.mxu0 0.0
    %2465 = vmatprep.subr.mxu0 0.0
    %2466 = vmatpush1.msra.mxu0 0.0
    %2467 = vmatprep.subr.mxu0 0.0
    %2468 = vmatpush1.msra.mxu0 0.0
    %2469 = vmatprep.subr.mxu0 0.0
    %2470 = vmatpush1.msra.mxu0 0.0
    %2471 = vmatprep.subr.mxu0 0.0
    %2472 = vmatpush1.msra.mxu0 0.0
    %2473 = vmatprep.subr.mxu0 0.0
    %2474 = vmatpush1.msra.mxu0 0.0
    %2475 = vmatprep.subr.mxu0 0.0
    %2476 = vmatpush1.msra.mxu0 %v2440
    %2477 = vmatprep.subr.mxu0 0.0
    %2478 = vmatpush2.msra.mxu0 0.0
    %2479 = vmatprep.subr.mxu0 0.0
    %2480 = vmatpush2.msra.mxu0 0.0
    %2481 = vmatprep.subr.mxu0 0.0
    %2482 = vmatpush2.msra.mxu0 0.0
    %2483 = vmatprep.subr.mxu0 0.0
    %2484 = vmatpush2.msra.mxu0 0.0
    %2485 = vmatprep.subr.mxu0 0.0
    %2486 = vmatpush2.msra.mxu0 0.0
    %2487 = vmatprep.subr.mxu0 0.0
    %2488 = vmatpush2.msra.mxu0 0.0
    %2489 = vmatprep.subr.mxu0 0.0
    %2490 = vmatpush2.msra.mxu0 0.0
    %2491 = vmatprep.subr.mxu0 0.0
    %2492 = vmatpush2.msra.mxu0 0.0
    %2493 = vmatprep.subr.mxu0 0.0
    %2494 = vmatpush2.msra.mxu0 0.0
    %2495 = vmatprep.subr.mxu0 0.0
    %2496 = vmatpush2.msra.mxu0 0.0
    %2497 = vmatprep.subr.mxu0 0.0
    %2498 = vmatpush2.msra.mxu0 0.0
    %2499 = vmatprep.subr.mxu0 0.0
    %2500 = vmatpush2.msra.mxu0 0.0
    %2501 = vmatprep.subr.mxu0 0.0
    %2502 = vmatpush2.msra.mxu0 0.0
    %2503 = vmatprep.subr.mxu0 0.0
    %2504 = vmatpush2.msra.mxu0 0.0
    %2505 = vmatprep.subr.mxu0 0.0
    %2506 = vmatpush2.msra.mxu0 0.0
    %2507 = vmatprep.subr.mxu0 0.0
    %2508 = vmatpush2.msra.mxu0 0.0
    %2509 = vmatprep.mubr.f32.mxu0 0.0
    %2510 = vmatmul.mubr.f32.gmra.mxu0 %v2443
    %v2511 = vpop.f32.mrf.mxu0
    %v2512 = vadd.f32 0.0, %v2511
    %v2513 = vpop.f32.mrf.mxu0
    %2514 = vdwg.mxu0
    %2515 = vrot.lane.b32.xlu0 %v1762, 112
    %v2516 = vpop.permute.xlu0 %2515
    %2517 = vrot.lane.b32.xlu0 %v1851, 112
    %v2518 = vpop.permute.xlu0 %2517
    %v2519 = vsel %vm203, %v2516, 0
    %v2521 = vsel %vm203, %v2518, 0
    %2523 = vmatprep.subr.mxu0 0.0
    %2524 = vmatpush1.xpose.msra.mxu0 0.0
    %2525 = vmatprep.subr.mxu0 0.0
    %2526 = vmatpush1.xpose.msra.mxu0 0.0
    %2527 = vmatprep.subr.mxu0 0.0
    %2528 = vmatpush1.xpose.msra.mxu0 0.0
    %2529 = vmatprep.subr.mxu0 0.0
    %2530 = vmatpush1.xpose.msra.mxu0 0.0
    %2531 = vmatprep.subr.mxu0 0.0
    %2532 = vmatpush1.xpose.msra.mxu0 0.0
    %2533 = vmatprep.subr.mxu0 0.0
    %2534 = vmatpush1.xpose.msra.mxu0 0.0
    %2535 = vmatprep.subr.mxu0 0.0
    %2536 = vmatpush1.xpose.msra.mxu0 0.0
    %2537 = vmatprep.subr.mxu0 0.0
    %2538 = vmatpush1.xpose.msra.mxu0 0.0
    %2539 = vmatprep.subr.mxu0 0.0
    %2540 = vmatpush1.xpose.msra.mxu0 0.0
    %2541 = vmatprep.subr.mxu0 0.0
    %2542 = vmatpush1.xpose.msra.mxu0 0.0
    %2543 = vmatprep.subr.mxu0 0.0
    %2544 = vmatpush1.xpose.msra.mxu0 0.0
    %2545 = vmatprep.subr.mxu0 0.0
    %2546 = vmatpush1.xpose.msra.mxu0 0.0
    %2547 = vmatprep.subr.mxu0 0.0
    %2548 = vmatpush1.xpose.msra.mxu0 0.0
    %2549 = vmatprep.subr.mxu0 0.0
    %2550 = vmatpush1.xpose.msra.mxu0 0.0
    %2551 = vmatprep.subr.mxu0 0.0
    %2552 = vmatpush1.xpose.msra.mxu0 0.0
    %2553 = vmatprep.subr.mxu0 0.0
    %2554 = vmatpush1.xpose.msra.mxu0 %v2521
    %2555 = vmatprep.subr.mxu0 0.0
    %2556 = vmatpush2.xpose.msra.mxu0 0.0
    %2557 = vmatprep.subr.mxu0 0.0
    %2558 = vmatpush2.xpose.msra.mxu0 0.0
    %2559 = vmatprep.subr.mxu0 0.0
    %2560 = vmatpush2.xpose.msra.mxu0 0.0
    %2561 = vmatprep.subr.mxu0 0.0
    %2562 = vmatpush2.xpose.msra.mxu0 0.0
    %2563 = vmatprep.subr.mxu0 0.0
    %2564 = vmatpush2.xpose.msra.mxu0 0.0
    %2565 = vmatprep.subr.mxu0 0.0
    %2566 = vmatpush2.xpose.msra.mxu0 0.0
    %2567 = vmatprep.subr.mxu0 0.0
    %2568 = vmatpush2.xpose.msra.mxu0 0.0
    %2569 = vmatprep.subr.mxu0 0.0
    %2570 = vmatpush2.xpose.msra.mxu0 0.0
    %2571 = vmatprep.subr.mxu0 0.0
    %2572 = vmatpush2.xpose.msra.mxu0 0.0
    %2573 = vmatprep.subr.mxu0 0.0
    %2574 = vmatpush2.xpose.msra.mxu0 0.0
    %2575 = vmatprep.subr.mxu0 0.0
    %2576 = vmatpush2.xpose.msra.mxu0 0.0
    %2577 = vmatprep.subr.mxu0 0.0
    %2578 = vmatpush2.xpose.msra.mxu0 0.0
    %2579 = vmatprep.subr.mxu0 0.0
    %2580 = vmatpush2.xpose.msra.mxu0 0.0
    %2581 = vmatprep.subr.mxu0 0.0
    %2582 = vmatpush2.xpose.msra.mxu0 0.0
    %2583 = vmatprep.subr.mxu0 0.0
    %2584 = vmatpush2.xpose.msra.mxu0 0.0
    %2585 = vmatprep.subr.mxu0 0.0
    %2586 = vmatpush2.xpose.msra.mxu0 0.0
    %2587 = vmatprep.mubr.f32.mxu0 0.0
    %2588 = vmatmul.mubr.f32.gmra.mxu0 %v2519
    %v2589 = vpop.f32.mrf.mxu0
    %v2590 = vadd.f32 0.0, %v2589
    %v2591 = vpop.f32.mrf.mxu0
    %2592 = vdwg.mxu0
    %2593 = vrot.lane.b32.xlu0 %v1767, 112
    %v2594 = vpop.permute.xlu0 %2593
    %2595 = vrot.lane.b32.xlu0 %v1856, 112
    %v2596 = vpop.permute.xlu0 %2595
    %v2597 = vsel %vm203, %v2594, 0
    %v2599 = vsel %vm203, %v2596, 0
    %2601 = vmatprep.subr.mxu0 0.0
    %2602 = vmatpush1.xpose.msra.mxu0 0.0
    %2603 = vmatprep.subr.mxu0 0.0
    %2604 = vmatpush1.xpose.msra.mxu0 0.0
    %2605 = vmatprep.subr.mxu0 0.0
    %2606 = vmatpush1.xpose.msra.mxu0 0.0
    %2607 = vmatprep.subr.mxu0 0.0
    %2608 = vmatpush1.xpose.msra.mxu0 0.0
    %2609 = vmatprep.subr.mxu0 0.0
    %2610 = vmatpush1.xpose.msra.mxu0 0.0
    %2611 = vmatprep.subr.mxu0 0.0
    %2612 = vmatpush1.xpose.msra.mxu0 0.0
    %2613 = vmatprep.subr.mxu0 0.0
    %2614 = vmatpush1.xpose.msra.mxu0 0.0
    %2615 = vmatprep.subr.mxu0 0.0
    %2616 = vmatpush1.xpose.msra.mxu0 0.0
    %2617 = vmatprep.subr.mxu0 0.0
    %2618 = vmatpush1.xpose.msra.mxu0 0.0
    %2619 = vmatprep.subr.mxu0 0.0
    %2620 = vmatpush1.xpose.msra.mxu0 0.0
    %2621 = vmatprep.subr.mxu0 0.0
    %2622 = vmatpush1.xpose.msra.mxu0 0.0
    %2623 = vmatprep.subr.mxu0 0.0
    %2624 = vmatpush1.xpose.msra.mxu0 0.0
    %2625 = vmatprep.subr.mxu0 0.0
    %2626 = vmatpush1.xpose.msra.mxu0 0.0
    %2627 = vmatprep.subr.mxu0 0.0
    %2628 = vmatpush1.xpose.msra.mxu0 0.0
    %2629 = vmatprep.subr.mxu0 0.0
    %2630 = vmatpush1.xpose.msra.mxu0 0.0
    %2631 = vmatprep.subr.mxu0 0.0
    %2632 = vmatpush1.xpose.msra.mxu0 %v2599
    %2633 = vmatprep.subr.mxu0 0.0
    %2634 = vmatpush2.xpose.msra.mxu0 0.0
    %2635 = vmatprep.subr.mxu0 0.0
    %2636 = vmatpush2.xpose.msra.mxu0 0.0
    %2637 = vmatprep.subr.mxu0 0.0
    %2638 = vmatpush2.xpose.msra.mxu0 0.0
    %2639 = vmatprep.subr.mxu0 0.0
    %2640 = vmatpush2.xpose.msra.mxu0 0.0
    %2641 = vmatprep.subr.mxu0 0.0
    %2642 = vmatpush2.xpose.msra.mxu0 0.0
    %2643 = vmatprep.subr.mxu0 0.0
    %2644 = vmatpush2.xpose.msra.mxu0 0.0
    %2645 = vmatprep.subr.mxu0 0.0
    %2646 = vmatpush2.xpose.msra.mxu0 0.0
    %2647 = vmatprep.subr.mxu0 0.0
    %2648 = vmatpush2.xpose.msra.mxu0 0.0
    %2649 = vmatprep.subr.mxu0 0.0
    %2650 = vmatpush2.xpose.msra.mxu0 0.0
    %2651 = vmatprep.subr.mxu0 0.0
    %2652 = vmatpush2.xpose.msra.mxu0 0.0
    %2653 = vmatprep.subr.mxu0 0.0
    %2654 = vmatpush2.xpose.msra.mxu0 0.0
    %2655 = vmatprep.subr.mxu0 0.0
    %2656 = vmatpush2.xpose.msra.mxu0 0.0
    %2657 = vmatprep.subr.mxu0 0.0
    %2658 = vmatpush2.xpose.msra.mxu0 0.0
    %2659 = vmatprep.subr.mxu0 0.0
    %2660 = vmatpush2.xpose.msra.mxu0 0.0
    %2661 = vmatprep.subr.mxu0 0.0
    %2662 = vmatpush2.xpose.msra.mxu0 0.0
    %2663 = vmatprep.subr.mxu0 0.0
    %2664 = vmatpush2.xpose.msra.mxu0 0.0
    %2665 = vmatprep.mubr.f32.mxu0 0.0
    %2666 = vmatmul.mubr.f32.gmra.mxu0 %v2597
    %v2667 = vpop.f32.mrf.mxu0
    %v2668 = vadd.f32 0.0, %v2667
    %v2669 = vpop.f32.mrf.mxu0
    %2670 = vdwg.mxu0
    %v2671 = vsel %vm203, %v2590, -inf
    %2672 = vmax.xlane.f32.xlu0 %v2671
    %v2673 = vpop.xlane.xlu0 %2672
    %v2674 = vsel %vm203, %v2668, -inf
    %2675 = vmax.xlane.f32.xlu0 %v2674
    %v2676 = vpop.xlane.xlu0 %2675
    %v2677 = vsub.f32 %v2590, %v2673
    %v2678 = vsub.f32 %v2668, %v2676
    %v2679 = vmul.f32 %v2677, 1.442695
    %v2680 = vpow.pop %v2679
    %v2681 = vmul.f32 %v2678, 1.442695
    %v2682 = vpow.pop %v2681
    %v2683 = vsel %vm203, %v2680, 0.0
    %2684 = vadd.xlane.f32.xlu0 %v2683
    %v2685 = vpop.xlane.xlu0 %2684
    %v2686 = vsel %vm203, %v2682, 0.0
    %2687 = vadd.xlane.f32.xlu0 %v2686
    %v2688 = vpop.xlane.xlu0 %2687
    %v2689 = vrcp.pop %v2685
    %v2690 = vrcp.pop %v2688
    %v2691 = vmul.f32 %v2680, %v2689
    %v2692 = vmul.f32 %v2682, %v2690
    %2693 = vrot.lane.b32.xlu0 %v1851, 80
    %v2694 = vpop.permute.xlu0 %2693
    %v2697 = vsel %vm203, %v2691, 0
    %2699 = vmatprep.subr.mxu0 0.0
    %2700 = vmatpush1.msra.mxu0 0.0
    %2701 = vmatprep.subr.mxu0 0.0
    %2702 = vmatpush1.msra.mxu0 0.0
    %2703 = vmatprep.subr.mxu0 0.0
    %2704 = vmatpush1.msra.mxu0 0.0
    %2705 = vmatprep.subr.mxu0 0.0
    %2706 = vmatpush1.msra.mxu0 0.0
    %2707 = vmatprep.subr.mxu0 0.0
    %2708 = vmatpush1.msra.mxu0 0.0
    %2709 = vmatprep.subr.mxu0 0.0
    %2710 = vmatpush1.msra.mxu0 0.0
    %2711 = vmatprep.subr.mxu0 0.0
    %2712 = vmatpush1.msra.mxu0 0.0
    %2713 = vmatprep.subr.mxu0 0.0
    %2714 = vmatpush1.msra.mxu0 0.0
    %2715 = vmatprep.subr.mxu0 0.0
    %2716 = vmatpush1.msra.mxu0 0.0
    %2717 = vmatprep.subr.mxu0 0.0
    %2718 = vmatpush1.msra.mxu0 0.0
    %2719 = vmatprep.subr.mxu0 0.0
    %2720 = vmatpush1.msra.mxu0 0.0
    %2721 = vmatprep.subr.mxu0 0.0
    %2722 = vmatpush1.msra.mxu0 0.0
    %2723 = vmatprep.subr.mxu0 0.0
    %2724 = vmatpush1.msra.mxu0 0.0
    %2725 = vmatprep.subr.mxu0 0.0
    %2726 = vmatpush1.msra.mxu0 0.0
    %2727 = vmatprep.subr.mxu0 0.0
    %2728 = vmatpush1.msra.mxu0 0.0
    %2729 = vmatprep.subr.mxu0 0.0
    %2730 = vmatpush1.msra.mxu0 %v2694
    %2731 = vmatprep.subr.mxu0 0.0
    %2732 = vmatpush2.msra.mxu0 0.0
    %2733 = vmatprep.subr.mxu0 0.0
    %2734 = vmatpush2.msra.mxu0 0.0
    %2735 = vmatprep.subr.mxu0 0.0
    %2736 = vmatpush2.msra.mxu0 0.0
    %2737 = vmatprep.subr.mxu0 0.0
    %2738 = vmatpush2.msra.mxu0 0.0
    %2739 = vmatprep.subr.mxu0 0.0
    %2740 = vmatpush2.msra.mxu0 0.0
    %2741 = vmatprep.subr.mxu0 0.0
    %2742 = vmatpush2.msra.mxu0 0.0
    %2743 = vmatprep.subr.mxu0 0.0
    %2744 = vmatpush2.msra.mxu0 0.0
    %2745 = vmatprep.subr.mxu0 0.0
    %2746 = vmatpush2.msra.mxu0 0.0
    %2747 = vmatprep.subr.mxu0 0.0
    %2748 = vmatpush2.msra.mxu0 0.0
    %2749 = vmatprep.subr.mxu0 0.0
    %2750 = vmatpush2.msra.mxu0 0.0
    %2751 = vmatprep.subr.mxu0 0.0
    %2752 = vmatpush2.msra.mxu0 0.0
    %2753 = vmatprep.subr.mxu0 0.0
    %2754 = vmatpush2.msra.mxu0 0.0
    %2755 = vmatprep.subr.mxu0 0.0
    %2756 = vmatpush2.msra.mxu0 0.0
    %2757 = vmatprep.subr.mxu0 0.0
    %2758 = vmatpush2.msra.mxu0 0.0
    %2759 = vmatprep.subr.mxu0 0.0
    %2760 = vmatpush2.msra.mxu0 0.0
    %2761 = vmatprep.subr.mxu0 0.0
    %2762 = vmatpush2.msra.mxu0 0.0
    %2763 = vmatprep.mubr.f32.mxu0 0.0
    %2764 = vmatmul.mubr.f32.gmra.mxu0 %v2697
    %v2765 = vpop.f32.mrf.mxu0
    %v2766 = vadd.f32 0.0, %v2765
    %v2767 = vpop.f32.mrf.mxu0
    %2768 = vdwg.mxu0
    %2769 = vrot.lane.b32.xlu0 %v1856, 80
    %v2770 = vpop.permute.xlu0 %2769
    %v2773 = vsel %vm203, %v2692, 0
    %2775 = vmatprep.subr.mxu0 0.0
    %2776 = vmatpush1.msra.mxu0 0.0
    %2777 = vmatprep.subr.mxu0 0.0
    %2778 = vmatpush1.msra.mxu0 0.0
    %2779 = vmatprep.subr.mxu0 0.0
    %2780 = vmatpush1.msra.mxu0 0.0
    %2781 = vmatprep.subr.mxu0 0.0
    %2782 = vmatpush1.msra.mxu0 0.0
    %2783 = vmatprep.subr.mxu0 0.0
    %2784 = vmatpush1.msra.mxu0 0.0
    %2785 = vmatprep.subr.mxu0 0.0
    %2786 = vmatpush1.msra.mxu0 0.0
    %2787 = vmatprep.subr.mxu0 0.0
    %2788 = vmatpush1.msra.mxu0 0.0
    %2789 = vmatprep.subr.mxu0 0.0
    %2790 = vmatpush1.msra.mxu0 0.0
    %2791 = vmatprep.subr.mxu0 0.0
    %2792 = vmatpush1.msra.mxu0 0.0
    %2793 = vmatprep.subr.mxu0 0.0
    %2794 = vmatpush1.msra.mxu0 0.0
    %2795 = vmatprep.subr.mxu0 0.0
    %2796 = vmatpush1.msra.mxu0 0.0
    %2797 = vmatprep.subr.mxu0 0.0
    %2798 = vmatpush1.msra.mxu0 0.0
    %2799 = vmatprep.subr.mxu0 0.0
    %2800 = vmatpush1.msra.mxu0 0.0
    %2801 = vmatprep.subr.mxu0 0.0
    %2802 = vmatpush1.msra.mxu0 0.0
    %2803 = vmatprep.subr.mxu0 0.0
    %2804 = vmatpush1.msra.mxu0 0.0
    %2805 = vmatprep.subr.mxu0 0.0
    %2806 = vmatpush1.msra.mxu0 %v2770
    %2807 = vmatprep.subr.mxu0 0.0
    %2808 = vmatpush2.msra.mxu0 0.0
    %2809 = vmatprep.subr.mxu0 0.0
    %2810 = vmatpush2.msra.mxu0 0.0
    %2811 = vmatprep.subr.mxu0 0.0
    %2812 = vmatpush2.msra.mxu0 0.0
    %2813 = vmatprep.subr.mxu0 0.0
    %2814 = vmatpush2.msra.mxu0 0.0
    %2815 = vmatprep.subr.mxu0 0.0
    %2816 = vmatpush2.msra.mxu0 0.0
    %2817 = vmatprep.subr.mxu0 0.0
    %2818 = vmatpush2.msra.mxu0 0.0
    %2819 = vmatprep.subr.mxu0 0.0
    %2820 = vmatpush2.msra.mxu0 0.0
    %2821 = vmatprep.subr.mxu0 0.0
    %2822 = vmatpush2.msra.mxu0 0.0
    %2823 = vmatprep.subr.mxu0 0.0
    %2824 = vmatpush2.msra.mxu0 0.0
    %2825 = vmatprep.subr.mxu0 0.0
    %2826 = vmatpush2.msra.mxu0 0.0
    %2827 = vmatprep.subr.mxu0 0.0
    %2828 = vmatpush2.msra.mxu0 0.0
    %2829 = vmatprep.subr.mxu0 0.0
    %2830 = vmatpush2.msra.mxu0 0.0
    %2831 = vmatprep.subr.mxu0 0.0
    %2832 = vmatpush2.msra.mxu0 0.0
    %2833 = vmatprep.subr.mxu0 0.0
    %2834 = vmatpush2.msra.mxu0 0.0
    %2835 = vmatprep.subr.mxu0 0.0
    %2836 = vmatpush2.msra.mxu0 0.0
    %2837 = vmatprep.subr.mxu0 0.0
    %2838 = vmatpush2.msra.mxu0 0.0
    %2839 = vmatprep.mubr.f32.mxu0 0.0
    %2840 = vmatmul.mubr.f32.gmra.mxu0 %v2773
    %v2841 = vpop.f32.mrf.mxu0
    %v2842 = vadd.f32 0.0, %v2841
    %v2843 = vpop.f32.mrf.mxu0
    %2844 = vdwg.mxu0
    %2845 = vrot.lane.b32.xlu0 %v1762, 104
    %v2846 = vpop.permute.xlu0 %2845
    %2847 = vrot.lane.b32.xlu0 %v1851, 104
    %v2848 = vpop.permute.xlu0 %2847
    %v2849 = vsel %vm203, %v2846, 0
    %v2851 = vsel %vm203, %v2848, 0
    %2853 = vmatprep.subr.mxu0 0.0
    %2854 = vmatpush1.xpose.msra.mxu0 0.0
    %2855 = vmatprep.subr.mxu0 0.0
    %2856 = vmatpush1.xpose.msra.mxu0 0.0
    %2857 = vmatprep.subr.mxu0 0.0
    %2858 = vmatpush1.xpose.msra.mxu0 0.0
    %2859 = vmatprep.subr.mxu0 0.0
    %2860 = vmatpush1.xpose.msra.mxu0 0.0
    %2861 = vmatprep.subr.mxu0 0.0
    %2862 = vmatpush1.xpose.msra.mxu0 0.0
    %2863 = vmatprep.subr.mxu0 0.0
    %2864 = vmatpush1.xpose.msra.mxu0 0.0
    %2865 = vmatprep.subr.mxu0 0.0
    %2866 = vmatpush1.xpose.msra.mxu0 0.0
    %2867 = vmatprep.subr.mxu0 0.0
    %2868 = vmatpush1.xpose.msra.mxu0 0.0
    %2869 = vmatprep.subr.mxu0 0.0
    %2870 = vmatpush1.xpose.msra.mxu0 0.0
    %2871 = vmatprep.subr.mxu0 0.0
    %2872 = vmatpush1.xpose.msra.mxu0 0.0
    %2873 = vmatprep.subr.mxu0 0.0
    %2874 = vmatpush1.xpose.msra.mxu0 0.0
    %2875 = vmatprep.subr.mxu0 0.0
    %2876 = vmatpush1.xpose.msra.mxu0 0.0
    %2877 = vmatprep.subr.mxu0 0.0
    %2878 = vmatpush1.xpose.msra.mxu0 0.0
    %2879 = vmatprep.subr.mxu0 0.0
    %2880 = vmatpush1.xpose.msra.mxu0 0.0
    %2881 = vmatprep.subr.mxu0 0.0
    %2882 = vmatpush1.xpose.msra.mxu0 0.0
    %2883 = vmatprep.subr.mxu0 0.0
    %2884 = vmatpush1.xpose.msra.mxu0 %v2851
    %2885 = vmatprep.subr.mxu0 0.0
    %2886 = vmatpush2.xpose.msra.mxu0 0.0
    %2887 = vmatprep.subr.mxu0 0.0
    %2888 = vmatpush2.xpose.msra.mxu0 0.0
    %2889 = vmatprep.subr.mxu0 0.0
    %2890 = vmatpush2.xpose.msra.mxu0 0.0
    %2891 = vmatprep.subr.mxu0 0.0
    %2892 = vmatpush2.xpose.msra.mxu0 0.0
    %2893 = vmatprep.subr.mxu0 0.0
    %2894 = vmatpush2.xpose.msra.mxu0 0.0
    %2895 = vmatprep.subr.mxu0 0.0
    %2896 = vmatpush2.xpose.msra.mxu0 0.0
    %2897 = vmatprep.subr.mxu0 0.0
    %2898 = vmatpush2.xpose.msra.mxu0 0.0
    %2899 = vmatprep.subr.mxu0 0.0
    %2900 = vmatpush2.xpose.msra.mxu0 0.0
    %2901 = vmatprep.subr.mxu0 0.0
    %2902 = vmatpush2.xpose.msra.mxu0 0.0
    %2903 = vmatprep.subr.mxu0 0.0
    %2904 = vmatpush2.xpose.msra.mxu0 0.0
    %2905 = vmatprep.subr.mxu0 0.0
    %2906 = vmatpush2.xpose.msra.mxu0 0.0
    %2907 = vmatprep.subr.mxu0 0.0
    %2908 = vmatpush2.xpose.msra.mxu0 0.0
    %2909 = vmatprep.subr.mxu0 0.0
    %2910 = vmatpush2.xpose.msra.mxu0 0.0
    %2911 = vmatprep.subr.mxu0 0.0
    %2912 = vmatpush2.xpose.msra.mxu0 0.0
    %2913 = vmatprep.subr.mxu0 0.0
    %2914 = vmatpush2.xpose.msra.mxu0 0.0
    %2915 = vmatprep.subr.mxu0 0.0
    %2916 = vmatpush2.xpose.msra.mxu0 0.0
    %2917 = vmatprep.mubr.f32.mxu0 0.0
    %2918 = vmatmul.mubr.f32.gmra.mxu0 %v2849
    %v2919 = vpop.f32.mrf.mxu0
    %v2920 = vadd.f32 0.0, %v2919
    %v2921 = vpop.f32.mrf.mxu0
    %2922 = vdwg.mxu0
    %2923 = vrot.lane.b32.xlu0 %v1767, 104
    %v2924 = vpop.permute.xlu0 %2923
    %2925 = vrot.lane.b32.xlu0 %v1856, 104
    %v2926 = vpop.permute.xlu0 %2925
    %v2927 = vsel %vm203, %v2924, 0
    %v2929 = vsel %vm203, %v2926, 0
    %2931 = vmatprep.subr.mxu0 0.0
    %2932 = vmatpush1.xpose.msra.mxu0 0.0
    %2933 = vmatprep.subr.mxu0 0.0
    %2934 = vmatpush1.xpose.msra.mxu0 0.0
    %2935 = vmatprep.subr.mxu0 0.0
    %2936 = vmatpush1.xpose.msra.mxu0 0.0
    %2937 = vmatprep.subr.mxu0 0.0
    %2938 = vmatpush1.xpose.msra.mxu0 0.0
    %2939 = vmatprep.subr.mxu0 0.0
    %2940 = vmatpush1.xpose.msra.mxu0 0.0
    %2941 = vmatprep.subr.mxu0 0.0
    %2942 = vmatpush1.xpose.msra.mxu0 0.0
    %2943 = vmatprep.subr.mxu0 0.0
    %2944 = vmatpush1.xpose.msra.mxu0 0.0
    %2945 = vmatprep.subr.mxu0 0.0
    %2946 = vmatpush1.xpose.msra.mxu0 0.0
    %2947 = vmatprep.subr.mxu0 0.0
    %2948 = vmatpush1.xpose.msra.mxu0 0.0
    %2949 = vmatprep.subr.mxu0 0.0
    %2950 = vmatpush1.xpose.msra.mxu0 0.0
    %2951 = vmatprep.subr.mxu0 0.0
    %2952 = vmatpush1.xpose.msra.mxu0 0.0
    %2953 = vmatprep.subr.mxu0 0.0
    %2954 = vmatpush1.xpose.msra.mxu0 0.0
    %2955 = vmatprep.subr.mxu0 0.0
    %2956 = vmatpush1.xpose.msra.mxu0 0.0
    %2957 = vmatprep.subr.mxu0 0.0
    %2958 = vmatpush1.xpose.msra.mxu0 0.0
    %2959 = vmatprep.subr.mxu0 0.0
    %2960 = vmatpush1.xpose.msra.mxu0 0.0
    %2961 = vmatprep.subr.mxu0 0.0
    %2962 = vmatpush1.xpose.msra.mxu0 %v2929
    %2963 = vmatprep.subr.mxu0 0.0
    %2964 = vmatpush2.xpose.msra.mxu0 0.0
    %2965 = vmatprep.subr.mxu0 0.0
    %2966 = vmatpush2.xpose.msra.mxu0 0.0
    %2967 = vmatprep.subr.mxu0 0.0
    %2968 = vmatpush2.xpose.msra.mxu0 0.0
    %2969 = vmatprep.subr.mxu0 0.0
    %2970 = vmatpush2.xpose.msra.mxu0 0.0
    %2971 = vmatprep.subr.mxu0 0.0
    %2972 = vmatpush2.xpose.msra.mxu0 0.0
    %2973 = vmatprep.subr.mxu0 0.0
    %2974 = vmatpush2.xpose.msra.mxu0 0.0
    %2975 = vmatprep.subr.mxu0 0.0
    %2976 = vmatpush2.xpose.msra.mxu0 0.0
    %2977 = vmatprep.subr.mxu0 0.0
    %2978 = vmatpush2.xpose.msra.mxu0 0.0
    %2979 = vmatprep.subr.mxu0 0.0
    %2980 = vmatpush2.xpose.msra.mxu0 0.0
    %2981 = vmatprep.subr.mxu0 0.0
    %2982 = vmatpush2.xpose.msra.mxu0 0.0
    %2983 = vmatprep.subr.mxu0 0.0
    %2984 = vmatpush2.xpose.msra.mxu0 0.0
    %2985 = vmatprep.subr.mxu0 0.0
    %2986 = vmatpush2.xpose.msra.mxu0 0.0
    %2987 = vmatprep.subr.mxu0 0.0
    %2988 = vmatpush2.xpose.msra.mxu0 0.0
    %2989 = vmatprep.subr.mxu0 0.0
    %2990 = vmatpush2.xpose.msra.mxu0 0.0
    %2991 = vmatprep.subr.mxu0 0.0
    %2992 = vmatpush2.xpose.msra.mxu0 0.0
    %2993 = vmatprep.subr.mxu0 0.0
    %2994 = vmatpush2.xpose.msra.mxu0 0.0
    %2995 = vmatprep.mubr.f32.mxu0 0.0
    %2996 = vmatmul.mubr.f32.gmra.mxu0 %v2927
    %v2997 = vpop.f32.mrf.mxu0
    %v2998 = vadd.f32 0.0, %v2997
    %v2999 = vpop.f32.mrf.mxu0
    %3000 = vdwg.mxu0
    %v3001 = vsel %vm203, %v2920, -inf
    %3002 = vmax.xlane.f32.xlu0 %v3001
    %v3003 = vpop.xlane.xlu0 %3002
    %v3004 = vsel %vm203, %v2998, -inf
    %3005 = vmax.xlane.f32.xlu0 %v3004
    %v3006 = vpop.xlane.xlu0 %3005
    %v3007 = vsub.f32 %v2920, %v3003
    %v3008 = vsub.f32 %v2998, %v3006
    %v3009 = vmul.f32 %v3007, 1.442695
    %v3010 = vpow.pop %v3009
    %v3011 = vmul.f32 %v3008, 1.442695
    %v3012 = vpow.pop %v3011
    %v3013 = vsel %vm203, %v3010, 0.0
    %3014 = vadd.xlane.f32.xlu0 %v3013
    %v3015 = vpop.xlane.xlu0 %3014
    %v3016 = vsel %vm203, %v3012, 0.0
    %3017 = vadd.xlane.f32.xlu0 %v3016
    %v3018 = vpop.xlane.xlu0 %3017
    %v3019 = vrcp.pop %v3015
    %v3020 = vrcp.pop %v3018
    %v3021 = vmul.f32 %v3010, %v3019
    %v3022 = vmul.f32 %v3012, %v3020
    %3023 = vrot.lane.b32.xlu0 %v1851, 72
    %v3024 = vpop.permute.xlu0 %3023
    %v3027 = vsel %vm203, %v3021, 0
    %3029 = vmatprep.subr.mxu0 0.0
    %3030 = vmatpush1.msra.mxu0 0.0
    %3031 = vmatprep.subr.mxu0 0.0
    %3032 = vmatpush1.msra.mxu0 0.0
    %3033 = vmatprep.subr.mxu0 0.0
    %3034 = vmatpush1.msra.mxu0 0.0
    %3035 = vmatprep.subr.mxu0 0.0
    %3036 = vmatpush1.msra.mxu0 0.0
    %3037 = vmatprep.subr.mxu0 0.0
    %3038 = vmatpush1.msra.mxu0 0.0
    %3039 = vmatprep.subr.mxu0 0.0
    %3040 = vmatpush1.msra.mxu0 0.0
    %3041 = vmatprep.subr.mxu0 0.0
    %3042 = vmatpush1.msra.mxu0 0.0
    %3043 = vmatprep.subr.mxu0 0.0
    %3044 = vmatpush1.msra.mxu0 0.0
    %3045 = vmatprep.subr.mxu0 0.0
    %3046 = vmatpush1.msra.mxu0 0.0
    %3047 = vmatprep.subr.mxu0 0.0
    %3048 = vmatpush1.msra.mxu0 0.0
    %3049 = vmatprep.subr.mxu0 0.0
    %3050 = vmatpush1.msra.mxu0 0.0
    %3051 = vmatprep.subr.mxu0 0.0
    %3052 = vmatpush1.msra.mxu0 0.0
    %3053 = vmatprep.subr.mxu0 0.0
    %3054 = vmatpush1.msra.mxu0 0.0
    %3055 = vmatprep.subr.mxu0 0.0
    %3056 = vmatpush1.msra.mxu0 0.0
    %3057 = vmatprep.subr.mxu0 0.0
    %3058 = vmatpush1.msra.mxu0 0.0
    %3059 = vmatprep.subr.mxu0 0.0
    %3060 = vmatpush1.msra.mxu0 %v3024
    %3061 = vmatprep.subr.mxu0 0.0
    %3062 = vmatpush2.msra.mxu0 0.0
    %3063 = vmatprep.subr.mxu0 0.0
    %3064 = vmatpush2.msra.mxu0 0.0
    %3065 = vmatprep.subr.mxu0 0.0
    %3066 = vmatpush2.msra.mxu0 0.0
    %3067 = vmatprep.subr.mxu0 0.0
    %3068 = vmatpush2.msra.mxu0 0.0
    %3069 = vmatprep.subr.mxu0 0.0
    %3070 = vmatpush2.msra.mxu0 0.0
    %3071 = vmatprep.subr.mxu0 0.0
    %3072 = vmatpush2.msra.mxu0 0.0
    %3073 = vmatprep.subr.mxu0 0.0
    %3074 = vmatpush2.msra.mxu0 0.0
    %3075 = vmatprep.subr.mxu0 0.0
    %3076 = vmatpush2.msra.mxu0 0.0
    %3077 = vmatprep.subr.mxu0 0.0
    %3078 = vmatpush2.msra.mxu0 0.0
    %3079 = vmatprep.subr.mxu0 0.0
    %3080 = vmatpush2.msra.mxu0 0.0
    %3081 = vmatprep.subr.mxu0 0.0
    %3082 = vmatpush2.msra.mxu0 0.0
    %3083 = vmatprep.subr.mxu0 0.0
    %3084 = vmatpush2.msra.mxu0 0.0
    %3085 = vmatprep.subr.mxu0 0.0
    %3086 = vmatpush2.msra.mxu0 0.0
    %3087 = vmatprep.subr.mxu0 0.0
    %3088 = vmatpush2.msra.mxu0 0.0
    %3089 = vmatprep.subr.mxu0 0.0
    %3090 = vmatpush2.msra.mxu0 0.0
    %3091 = vmatprep.subr.mxu0 0.0
    %3092 = vmatpush2.msra.mxu0 0.0
    %3093 = vmatprep.mubr.f32.mxu0 0.0
    %3094 = vmatmul.mubr.f32.gmra.mxu0 %v3027
    %v3095 = vpop.f32.mrf.mxu0
    %v3096 = vadd.f32 0.0, %v3095
    %v3097 = vpop.f32.mrf.mxu0
    %3098 = vdwg.mxu0
    %3099 = vrot.lane.b32.xlu0 %v1856, 72
    %v3100 = vpop.permute.xlu0 %3099
    %v3103 = vsel %vm203, %v3022, 0
    %3105 = vmatprep.subr.mxu0 0.0
    %3106 = vmatpush1.msra.mxu0 0.0
    %3107 = vmatprep.subr.mxu0 0.0
    %3108 = vmatpush1.msra.mxu0 0.0
    %3109 = vmatprep.subr.mxu0 0.0
    %3110 = vmatpush1.msra.mxu0 0.0
    %3111 = vmatprep.subr.mxu0 0.0
    %3112 = vmatpush1.msra.mxu0 0.0
    %3113 = vmatprep.subr.mxu0 0.0
    %3114 = vmatpush1.msra.mxu0 0.0
    %3115 = vmatprep.subr.mxu0 0.0
    %3116 = vmatpush1.msra.mxu0 0.0
    %3117 = vmatprep.subr.mxu0 0.0
    %3118 = vmatpush1.msra.mxu0 0.0
    %3119 = vmatprep.subr.mxu0 0.0
    %3120 = vmatpush1.msra.mxu0 0.0
    %3121 = vmatprep.subr.mxu0 0.0
    %3122 = vmatpush1.msra.mxu0 0.0
    %3123 = vmatprep.subr.mxu0 0.0
    %3124 = vmatpush1.msra.mxu0 0.0
    %3125 = vmatprep.subr.mxu0 0.0
    %3126 = vmatpush1.msra.mxu0 0.0
    %3127 = vmatprep.subr.mxu0 0.0
    %3128 = vmatpush1.msra.mxu0 0.0
    %3129 = vmatprep.subr.mxu0 0.0
    %3130 = vmatpush1.msra.mxu0 0.0
    %3131 = vmatprep.subr.mxu0 0.0
    %3132 = vmatpush1.msra.mxu0 0.0
    %3133 = vmatprep.subr.mxu0 0.0
    %3134 = vmatpush1.msra.mxu0 0.0
    %3135 = vmatprep.subr.mxu0 0.0
    %3136 = vmatpush1.msra.mxu0 %v3100
    %3137 = vmatprep.subr.mxu0 0.0
    %3138 = vmatpush2.msra.mxu0 0.0
    %3139 = vmatprep.subr.mxu0 0.0
    %3140 = vmatpush2.msra.mxu0 0.0
    %3141 = vmatprep.subr.mxu0 0.0
    %3142 = vmatpush2.msra.mxu0 0.0
    %3143 = vmatprep.subr.mxu0 0.0
    %3144 = vmatpush2.msra.mxu0 0.0
    %3145 = vmatprep.subr.mxu0 0.0
    %3146 = vmatpush2.msra.mxu0 0.0
    %3147 = vmatprep.subr.mxu0 0.0
    %3148 = vmatpush2.msra.mxu0 0.0
    %3149 = vmatprep.subr.mxu0 0.0
    %3150 = vmatpush2.msra.mxu0 0.0
    %3151 = vmatprep.subr.mxu0 0.0
    %3152 = vmatpush2.msra.mxu0 0.0
    %3153 = vmatprep.subr.mxu0 0.0
    %3154 = vmatpush2.msra.mxu0 0.0
    %3155 = vmatprep.subr.mxu0 0.0
    %3156 = vmatpush2.msra.mxu0 0.0
    %3157 = vmatprep.subr.mxu0 0.0
    %3158 = vmatpush2.msra.mxu0 0.0
    %3159 = vmatprep.subr.mxu0 0.0
    %3160 = vmatpush2.msra.mxu0 0.0
    %3161 = vmatprep.subr.mxu0 0.0
    %3162 = vmatpush2.msra.mxu0 0.0
    %3163 = vmatprep.subr.mxu0 0.0
    %3164 = vmatpush2.msra.mxu0 0.0
    %3165 = vmatprep.subr.mxu0 0.0
    %3166 = vmatpush2.msra.mxu0 0.0
    %3167 = vmatprep.subr.mxu0 0.0
    %3168 = vmatpush2.msra.mxu0 0.0
    %3169 = vmatprep.mubr.f32.mxu0 0.0
    %3170 = vmatmul.mubr.f32.gmra.mxu0 %v3103
    %v3171 = vpop.f32.mrf.mxu0
    %v3172 = vadd.f32 0.0, %v3171
    %v3173 = vpop.f32.mrf.mxu0
    %3174 = vdwg.mxu0
    %3177 = vrot.lane.b32.xlu0 %v2436, 8
    %v3178 = vpop.permute.xlu0 %3177
    %3179 = vrot.lane.b32.xlu0 %v2512, 8
    %v3180 = vpop.permute.xlu0 %3179
    %3185 = vrot.lane.b32.xlu0 %v2766, 16
    %v3186 = vpop.permute.xlu0 %3185
    %3187 = vrot.lane.b32.xlu0 %v2842, 16
    %v3188 = vpop.permute.xlu0 %3187
    %3193 = vrot.lane.b32.xlu0 %v3096, 24
    %v3194 = vpop.permute.xlu0 %3193
    %3195 = vrot.lane.b32.xlu0 %v3172, 24
    %v3196 = vpop.permute.xlu0 %3195
    %v3199 = vsel %vm203, %v2106, %v3178
    %v3200 = vsel %vm203, %v2182, %v3180
    %v3201 = vsel %vm1545, %v3199, %v3186
    %v3202 = vsel %vm1545, %v3200, %v3188
    %v3203 = vsel %vm1548, %v3201, %v3194
    %v3204 = vsel %vm1548, %v3202, %v3196
    %v3205 = vld [vmem:[#allocation8] sm:$0xff]
    %v3206 = vld [vmem:[#allocation8 + $0x8] sm:$0xff]
    %v3207 = vld [vmem:[#allocation8 + $0x10] sm:$0xff]
    %v3208 = vld [vmem:[#allocation8 + $0x18] sm:$0xff]
    %v3209 = vlaneseq
    %v3210 = vshrl.u32 %v3209, 7
    %v3211 = vsub.s32 4, %v3210
    %v3212 = vrot.slane %v108, %v3211
    %v3214 = vsel %vm118, %v3203, 0
    %v3217 = vsel %vm118, %v3204, 0
    %3219 = vmatprep.subr.mxu0 0.0
    %3220 = vmatpush1.msra.mxu0 0.0
    %3221 = vmatprep.subr.mxu0 0.0
    %3222 = vmatpush1.msra.mxu0 0.0
    %3223 = vmatprep.subr.mxu0 0.0
    %3224 = vmatpush1.msra.mxu0 0.0
    %3225 = vmatprep.subr.mxu0 0.0
    %3226 = vmatpush1.msra.mxu0 0.0
    %3227 = vmatprep.subr.mxu0 0.0
    %3228 = vmatpush1.msra.mxu0 0.0
    %3229 = vmatprep.subr.mxu0 0.0
    %3230 = vmatpush1.msra.mxu0 0.0
    %3231 = vmatprep.subr.mxu0 0.0
    %3232 = vmatpush1.msra.mxu0 0.0
    %3233 = vmatprep.subr.mxu0 0.0
    %3234 = vmatpush1.msra.mxu0 0.0
    %3235 = vmatprep.subr.mxu0 0.0
    %3236 = vmatpush1.msra.mxu0 0.0
    %3237 = vmatprep.subr.mxu0 0.0
    %3238 = vmatpush1.msra.mxu0 0.0
    %3239 = vmatprep.subr.mxu0 0.0
    %3240 = vmatpush1.msra.mxu0 0.0
    %3241 = vmatprep.subr.mxu0 0.0
    %3242 = vmatpush1.msra.mxu0 0.0
    %3243 = vmatprep.subr.mxu0 0.0
    %3244 = vmatpush1.msra.mxu0 %v3208
    %3245 = vmatprep.subr.mxu0 0.0
    %3246 = vmatpush1.msra.mxu0 %v3207
    %3247 = vmatprep.subr.mxu0 0.0
    %3248 = vmatpush1.msra.mxu0 %v3206
    %3249 = vmatprep.subr.mxu0 0.0
    %3250 = vmatpush1.msra.mxu0 %v3205
    %3251 = vmatprep.subr.mxu0 0.0
    %3252 = vmatpush2.msra.mxu0 0.0
    %3253 = vmatprep.subr.mxu0 0.0
    %3254 = vmatpush2.msra.mxu0 0.0
    %3255 = vmatprep.subr.mxu0 0.0
    %3256 = vmatpush2.msra.mxu0 0.0
    %3257 = vmatprep.subr.mxu0 0.0
    %3258 = vmatpush2.msra.mxu0 0.0
    %3259 = vmatprep.subr.mxu0 0.0
    %3260 = vmatpush2.msra.mxu0 0.0
    %3261 = vmatprep.subr.mxu0 0.0
    %3262 = vmatpush2.msra.mxu0 0.0
    %3263 = vmatprep.subr.mxu0 0.0
    %3264 = vmatpush2.msra.mxu0 0.0
    %3265 = vmatprep.subr.mxu0 0.0
    %3266 = vmatpush2.msra.mxu0 0.0
    %3267 = vmatprep.subr.mxu0 0.0
    %3268 = vmatpush2.msra.mxu0 0.0
    %3269 = vmatprep.subr.mxu0 0.0
    %3270 = vmatpush2.msra.mxu0 0.0
    %3271 = vmatprep.subr.mxu0 0.0
    %3272 = vmatpush2.msra.mxu0 0.0
    %3273 = vmatprep.subr.mxu0 0.0
    %3274 = vmatpush2.msra.mxu0 0.0
    %3275 = vmatprep.subr.mxu0 0.0
    %3276 = vmatpush2.msra.mxu0 0.0
    %3277 = vmatprep.subr.mxu0 0.0
    %3278 = vmatpush2.msra.mxu0 0.0
    %3279 = vmatprep.subr.mxu0 0.0
    %3280 = vmatpush2.msra.mxu0 0.0
    %3281 = vmatprep.subr.mxu0 0.0
    %3282 = vmatpush2.msra.mxu0 0.0
    %3283 = vmatprep.mubr.f32.mxu0 0.0
    %3284 = vmatmul.mubr.f32.gmra.mxu0 %v3214
    %v3285 = vpop.f32.mrf.mxu0
    %v3286 = vadd.f32 %v3212, %v3285
    %v3287 = vpop.f32.mrf.mxu0
    %3288 = vmatprep.mubr.f32.mxu0 0.0
    %3289 = vmatmul.mubr.f32.gmra.mxu0 %v3217
    %v3290 = vpop.f32.mrf.mxu0
    %v3291 = vadd.f32 %v3212, %v3290
    %v3292 = vpop.f32.mrf.mxu0
    %3293 = vdwg.mxu0
    %v3294 = vadd.f32 %v1679, %v3286
    %v3295 = vadd.f32 %v1680, %v3291
    %v3296 = vsel %vm118, %v3294, 0.0
    %3297 = vadd.xlane.f32.xlu0 %v3296
    %v3298 = vpop.xlane.xlu0 %3297
    %v3299 = vsel %vm118, %v3295, 0.0
    %3300 = vadd.xlane.f32.xlu0 %v3299
    %v3301 = vpop.xlane.xlu0 %3300
    %v3302 = vmul.f32 %v3298, %v1648
    %v3303 = vmul.f32 %v3301, %v1648
    %v3304 = vsub.f32 %v3294, %v3302
    %v3305 = vsub.f32 %v3295, %v3303
    %v3306 = vmul.f32 %v3304, %v3304
    %v3307 = vmul.f32 %v3305, %v3305
    %v3308 = vsel %vm118, %v3306, 0.0
    %3309 = vadd.xlane.f32.xlu0 %v3308
    %v3310 = vpop.xlane.xlu0 %3309
    %v3311 = vsel %vm118, %v3307, 0.0
    %3312 = vadd.xlane.f32.xlu0 %v3311
    %v3313 = vpop.xlane.xlu0 %3312
    %v3314 = vmul.f32 %v3310, %v1648
    %v3315 = vmul.f32 %v3313, %v1648
    %v3316 = vadd.f32 %v3314, 1e-05
    %v3317 = vadd.f32 %v3315, 1e-05
    %v3318 = vrsqrt.pop %v3316
    %v3319 = vrsqrt.pop %v3317
    %v3320 = vmul.f32 %v3304, %v3318
    %v3321 = vmul.f32 %v3305, %v3319
    %v3322 = vlaneseq
    %v3323 = vshrl.u32 %v3322, 7
    %v3324 = vsub.s32 7, %v3323
    %v3325 = vrot.slane %v108, %v3324
    %v3326 = vmul.f32 %v3320, %v3325
    %v3327 = vmul.f32 %v3321, %v3325
    %v3328 = vlaneseq
    %v3329 = vshrl.u32 %v3328, 7
    %v3330 = vsub.s32 0, %v3329
    %v3331 = vrot.slane %v109, %v3330
    %v3332 = vadd.f32 %v3326, %v3331
    %v3333 = vadd.f32 %v3327, %v3331
    %v3334 = vld [vmem:[#allocation10] sm:$0xff]
    %v3335 = vld [vmem:[#allocation10 + $0x8] sm:$0xff]
    %v3336 = vld [vmem:[#allocation10 + $0x10] sm:$0xff]
    %v3337 = vld [vmem:[#allocation10 + $0x18] sm:$0xff]
    %v3338 = vlaneseq
    %v3339 = vshrl.u32 %v3338, 7
    %v3340 = vsub.s32 3, %v3339
    %v3341 = vrot.slane %v109, %v3340
    %v3343 = vsel %vm118, %v3332, 0
    %v3346 = vsel %vm118, %v3333, 0
    %3348 = vmatprep.subr.mxu0 0.0
    %3349 = vmatpush1.msra.mxu0 0.0
    %3350 = vmatprep.subr.mxu0 0.0
    %3351 = vmatpush1.msra.mxu0 0.0
    %3352 = vmatprep.subr.mxu0 0.0
    %3353 = vmatpush1.msra.mxu0 0.0
    %3354 = vmatprep.subr.mxu0 0.0
    %3355 = vmatpush1.msra.mxu0 0.0
    %3356 = vmatprep.subr.mxu0 0.0
    %3357 = vmatpush1.msra.mxu0 0.0
    %3358 = vmatprep.subr.mxu0 0.0
    %3359 = vmatpush1.msra.mxu0 0.0
    %3360 = vmatprep.subr.mxu0 0.0
    %3361 = vmatpush1.msra.mxu0 0.0
    %3362 = vmatprep.subr.mxu0 0.0
    %3363 = vmatpush1.msra.mxu0 0.0
    %3364 = vmatprep.subr.mxu0 0.0
    %3365 = vmatpush1.msra.mxu0 0.0
    %3366 = vmatprep.subr.mxu0 0.0
    %3367 = vmatpush1.msra.mxu0 0.0
    %3368 = vmatprep.subr.mxu0 0.0
    %3369 = vmatpush1.msra.mxu0 0.0
    %3370 = vmatprep.subr.mxu0 0.0
    %3371 = vmatpush1.msra.mxu0 0.0
    %3372 = vmatprep.subr.mxu0 0.0
    %3373 = vmatpush1.msra.mxu0 %v3337
    %3374 = vmatprep.subr.mxu0 0.0
    %3375 = vmatpush1.msra.mxu0 %v3336
    %3376 = vmatprep.subr.mxu0 0.0
    %3377 = vmatpush1.msra.mxu0 %v3335
    %3378 = vmatprep.subr.mxu0 0.0
    %3379 = vmatpush1.msra.mxu0 %v3334
    %3380 = vmatprep.subr.mxu0 0.0
    %3381 = vmatpush2.msra.mxu0 0.0
    %3382 = vmatprep.subr.mxu0 0.0
    %3383 = vmatpush2.msra.mxu0 0.0
    %3384 = vmatprep.subr.mxu0 0.0
    %3385 = vmatpush2.msra.mxu0 0.0
    %3386 = vmatprep.subr.mxu0 0.0
    %3387 = vmatpush2.msra.mxu0 0.0
    %3388 = vmatprep.subr.mxu0 0.0
    %3389 = vmatpush2.msra.mxu0 0.0
    %3390 = vmatprep.subr.mxu0 0.0
    %3391 = vmatpush2.msra.mxu0 0.0
    %3392 = vmatprep.subr.mxu0 0.0
    %3393 = vmatpush2.msra.mxu0 0.0
    %3394 = vmatprep.subr.mxu0 0.0
    %3395 = vmatpush2.msra.mxu0 0.0
    %3396 = vmatprep.subr.mxu0 0.0
    %3397 = vmatpush2.msra.mxu0 0.0
    %3398 = vmatprep.subr.mxu0 0.0
    %3399 = vmatpush2.msra.mxu0 0.0
    %3400 = vmatprep.subr.mxu0 0.0
    %3401 = vmatpush2.msra.mxu0 0.0
    %3402 = vmatprep.subr.mxu0 0.0
    %3403 = vmatpush2.msra.mxu0 0.0
    %3404 = vmatprep.subr.mxu0 0.0
    %3405 = vmatpush2.msra.mxu0 0.0
    %3406 = vmatprep.subr.mxu0 0.0
    %3407 = vmatpush2.msra.mxu0 0.0
    %3408 = vmatprep.subr.mxu0 0.0
    %3409 = vmatpush2.msra.mxu0 0.0
    %3410 = vmatprep.subr.mxu0 0.0
    %3411 = vmatpush2.msra.mxu0 0.0
    %3412 = vmatprep.mubr.f32.mxu0 0.0
    %3413 = vmatmul.mubr.f32.gmra.mxu0 %v3343
    %v3414 = vpop.f32.mrf.mxu0
    %v3415 = vadd.f32 %v3341, %v3414
    %v3416 = vpop.f32.mrf.mxu0
    %3417 = vmatprep.mubr.f32.mxu0 0.0
    %3418 = vmatmul.mubr.f32.gmra.mxu0 %v3346
    %v3419 = vpop.f32.mrf.mxu0
    %v3420 = vadd.f32 %v3341, %v3419
    %v3421 = vpop.f32.mrf.mxu0
    %3422 = vdwg.mxu0
    %v3423 = vmax.f32 %v3415, 0.0
    %v3424 = vmax.f32 %v3420, 0.0
    %v3425 = vld [vmem:[%s8] sm:$0xff]
    %v3426 = vld [vmem:[%s8 + $0x8] sm:$0xff]
    %v3427 = vld [vmem:[%s8 + $0x10] sm:$0xff]
    %v3428 = vld [vmem:[%s8 + $0x18] sm:$0xff]
    %v3429 = vld [vmem:[%s8 + $0x20] sm:$0xff]
    %v3430 = vld [vmem:[%s8 + $0x28] sm:$0xff]
    %v3431 = vld [vmem:[%s8 + $0x30] sm:$0xff]
    %v3432 = vld [vmem:[%s8 + $0x38] sm:$0xff]
    %v3433 = vlaneseq
    %v3434 = vshrl.u32 %v3433, 7
    %v3435 = vsub.s32 4, %v3434
    %v3436 = vrot.slane %v109, %v3435
    %vm3437 = vcmask 523264
    %v3439 = vsel %vm3437, %v3423, 0
    %v3442 = vsel %vm3437, %v3424, 0
    %3444 = vmatprep.subr.mxu0 0.0
    %3445 = vmatpush1.msra.mxu0 0.0
    %3446 = vmatprep.subr.mxu0 0.0
    %3447 = vmatpush1.msra.mxu0 0.0
    %3448 = vmatprep.subr.mxu0 0.0
    %3449 = vmatpush1.msra.mxu0 0.0
    %3450 = vmatprep.subr.mxu0 0.0
    %3451 = vmatpush1.msra.mxu0 0.0
    %3452 = vmatprep.subr.mxu0 0.0
    %3453 = vmatpush1.msra.mxu0 0.0
    %3454 = vmatprep.subr.mxu0 0.0
    %3455 = vmatpush1.msra.mxu0 0.0
    %3456 = vmatprep.subr.mxu0 0.0
    %3457 = vmatpush1.msra.mxu0 0.0
    %3458 = vmatprep.subr.mxu0 0.0
    %3459 = vmatpush1.msra.mxu0 0.0
    %3460 = vmatprep.subr.mxu0 0.0
    %3461 = vmatpush1.msra.mxu0 %v3432
    %3462 = vmatprep.subr.mxu0 0.0
    %3463 = vmatpush1.msra.mxu0 %v3431
    %3464 = vmatprep.subr.mxu0 0.0
    %3465 = vmatpush1.msra.mxu0 %v3430
    %3466 = vmatprep.subr.mxu0 0.0
    %3467 = vmatpush1.msra.mxu0 %v3429
    %3468 = vmatprep.subr.mxu0 0.0
    %3469 = vmatpush1.msra.mxu0 %v3428
    %3470 = vmatprep.subr.mxu0 0.0
    %3471 = vmatpush1.msra.mxu0 %v3427
    %3472 = vmatprep.subr.mxu0 0.0
    %3473 = vmatpush1.msra.mxu0 %v3426
    %3474 = vmatprep.subr.mxu0 0.0
    %3475 = vmatpush1.msra.mxu0 %v3425
    %3476 = vmatprep.subr.mxu0 0.0
    %3477 = vmatpush2.msra.mxu0 0.0
    %3478 = vmatprep.subr.mxu0 0.0
    %3479 = vmatpush2.msra.mxu0 0.0
    %3480 = vmatprep.subr.mxu0 0.0
    %3481 = vmatpush2.msra.mxu0 0.0
    %3482 = vmatprep.subr.mxu0 0.0
    %3483 = vmatpush2.msra.mxu0 0.0
    %3484 = vmatprep.subr.mxu0 0.0
    %3485 = vmatpush2.msra.mxu0 0.0
    %3486 = vmatprep.subr.mxu0 0.0
    %3487 = vmatpush2.msra.mxu0 0.0
    %3488 = vmatprep.subr.mxu0 0.0
    %3489 = vmatpush2.msra.mxu0 0.0
    %3490 = vmatprep.subr.mxu0 0.0
    %3491 = vmatpush2.msra.mxu0 0.0
    %3492 = vmatprep.subr.mxu0 0.0
    %3493 = vmatpush2.msra.mxu0 0.0
    %3494 = vmatprep.subr.mxu0 0.0
    %3495 = vmatpush2.msra.mxu0 0.0
    %3496 = vmatprep.subr.mxu0 0.0
    %3497 = vmatpush2.msra.mxu0 0.0
    %3498 = vmatprep.subr.mxu0 0.0
    %3499 = vmatpush2.msra.mxu0 0.0
    %3500 = vmatprep.subr.mxu0 0.0
    %3501 = vmatpush2.msra.mxu0 0.0
    %3502 = vmatprep.subr.mxu0 0.0
    %3503 = vmatpush2.msra.mxu0 0.0
    %3504 = vmatprep.subr.mxu0 0.0
    %3505 = vmatpush2.msra.mxu0 0.0
    %3506 = vmatprep.subr.mxu0 0.0
    %3507 = vmatpush2.msra.mxu0 0.0
    %3508 = vmatprep.mubr.f32.mxu0 0.0
    %3509 = vmatmul.mubr.f32.gmra.mxu0 %v3439
    %v3510 = vpop.f32.mrf.mxu0
    %v3511 = vadd.f32 %v3436, %v3510
    %v3512 = vpop.f32.mrf.mxu0
    %3513 = vmatprep.mubr.f32.mxu0 0.0
    %3514 = vmatmul.mubr.f32.gmra.mxu0 %v3442
    %v3515 = vpop.f32.mrf.mxu0
    %v3516 = vadd.f32 %v3436, %v3515
    %v3517 = vpop.f32.mrf.mxu0
    %3518 = vdwg.mxu0
    %v3519 = vadd.f32 %v3332, %v3511
    %v3520 = vadd.f32 %v3333, %v3516
    %v3521 = vsel %vm118, %v3519, 0.0
    %3522 = vadd.xlane.f32.xlu0 %v3521
    %v3523 = vpop.xlane.xlu0 %3522
    %v3524 = vsel %vm118, %v3520, 0.0
    %3525 = vadd.xlane.f32.xlu0 %v3524
    %v3526 = vpop.xlane.xlu0 %3525
    %v3527 = vmul.f32 %v3523, %v1648
    %v3528 = vmul.f32 %v3526, %v1648
    %v3529 = vsub.f32 %v3519, %v3527
    %v3530 = vsub.f32 %v3520, %v3528
    %v3531 = vmul.f32 %v3529, %v3529
    %v3532 = vmul.f32 %v3530, %v3530
    %v3533 = vsel %vm118, %v3531, 0.0
    %3534 = vadd.xlane.f32.xlu0 %v3533
    %v3535 = vpop.xlane.xlu0 %3534
    %v3536 = vsel %vm118, %v3532, 0.0
    %3537 = vadd.xlane.f32.xlu0 %v3536
    %v3538 = vpop.xlane.xlu0 %3537
    %v3539 = vmul.f32 %v3535, %v1648
    %v3540 = vmul.f32 %v3538, %v1648
    %v3541 = vadd.f32 %v3539, 1e-05
    %v3542 = vadd.f32 %v3540, 1e-05
    %v3543 = vrsqrt.pop %v3541
    %v3544 = vrsqrt.pop %v3542
    %v3545 = vmul.f32 %v3529, %v3543
    %v3546 = vmul.f32 %v3530, %v3544
    %v3547 = vlaneseq
    %v3548 = vshrl.u32 %v3547, 7
    %v3549 = vsub.s32 1, %v3548
    %v3550 = vrot.slane %v109, %v3549
    %v3551 = vmul.f32 %v3545, %v3550
    %v3552 = vmul.f32 %v3546, %v3550
    %v3553 = vlaneseq
    %v3554 = vshrl.u32 %v3553, 7
    %v3555 = vsub.s32 2, %v3554
    %v3556 = vrot.slane %v109, %v3555
    %v3557 = vadd.f32 %v3551, %v3556
    %v3558 = vadd.f32 %v3552, %v3556
    %3559 = vst.msk [vmem:[#allocation11] sm:$0xff] %vm118, %v3557
    %3560 = vst.msk [vmem:[#allocation11 + $0x8] sm:$0xff] %vm118, %v3558
    // Predicated region
    $region62: #{tpu_custom_call.1} parent=1 // pred_check
      _
    $region63: #{tpu_custom_call.1} parent=1 // pred_check_branch
      %3562 = sbr.rel (0) target = $region65
    $region64: #{tpu_custom_call.1} parent=1 // pred_region
      %s3564 = ssub.s32 256, 256
      %3565 = vsyncadd [#allocation4], %s3564
      %s3566 = sshll.u32 [#allocation11], 4
      %s3567 = int_to_ptr.vmem [resolvable:$true] %s3566
      %3572 = dma.vmem_to_hbm [thread:$0]  %s3567, 256, %s10, [#allocation4], 128, 128, 8
    $region65: #{tpu_custom_call.1} parent=1 // pred_fallthru
      _
    // Predicated region
    $region66: #{tpu_custom_call.1} parent=1 // pred_check
      _
    $region67: #{tpu_custom_call.1} parent=1 // pred_check_branch
      %3574 = sbr.rel (0) target = $region69
    $region68: #{tpu_custom_call.1} parent=1 // pred_region
      %3575 = dma.done [#allocation4], 256
    $region69: #{tpu_custom_call.1} parent=1 // pred_fallthru
      _
    %3576 = vsyncpa [#allocation3], 1
    %3577 = vsyncpa [#allocation6], 1
    %3578 = vsyncpa [#allocation9], 1
    %3579 = vsyncpa [#allocation4], 1

</llo_original>
